<compile_context>
chip_gen: v7x
topology: tpu7x:2x2x1
jax: 0.10.0
libtpu: 0.0.40
codegen_flags: <defaults>
</compile_context>

<pallas_src>
import jax
import jax.numpy as jnp
from jax.experimental import pallas as pl
from jax.experimental.pallas import tpu as pltpu
import numpy as np


def _round_up(x, m):
    return ((x + m - 1) // m) * m


def gru_chunk_kernel(x_ref, h0_ref, gbase_ref, wie_ref, whf_ref, bhn_ref,
                     hs_ref, h_sc):
    """Runs TC GRU steps per grid iteration (time axis is sequential).

    x_ref     : (TC, Bp, Ep)   embedded inputs for this chunk of time steps
    h0_ref    : (Bp, Hp)       initial hidden state
    gbase_ref : (Bp, 3*Hp)     context @ Wi_ctx + fused biases (time-invariant)
    wie_ref   : (Ep, 3*Hp)     fused input->gates weights (embedding rows)
    whf_ref   : (Hp, 3*Hp)     fused hidden->gates weights
    bhn_ref   : (1, Hp)        b_hn (kept separate: scaled by r in the cell)
    hs_ref    : (TC, Bp, Hp)   per-step hidden states (output)
    h_sc      : VMEM (Bp, Hp)  recurrent carry across chunks
    """
    c = pl.program_id(0)

    @pl.when(c == 0)
    def _():
        h_sc[...] = h0_ref[...]

    tc = hs_ref.shape[0]
    hp = h_sc.shape[-1]
    f32 = jnp.float32

    wie = wie_ref[...]
    whf = whf_ref[...]
    gbase = gbase_ref[...]
    bhn = bhn_ref[...]

    def step(t, h):
        # PyTorch GRU cell (gates packed [r | z | n] at Hp-lane strides):
        #   r = sigmoid(x Wir + b_ir + h Whr + b_hr)
        #   z = sigmoid(x Wiz + b_iz + h Whz + b_hz)
        #   n = tanh  (x Win + b_in + r * (h Whn + b_hn))
        #   h' = (1 - z) * n + z * h
        gx = jnp.dot(x_ref[t], wie, preferred_element_type=f32) + gbase
        gh = jnp.dot(h, whf, preferred_element_type=f32)
        r = jax.nn.sigmoid(gx[:, :hp] + gh[:, :hp])
        z = jax.nn.sigmoid(gx[:, hp:2 * hp] + gh[:, hp:2 * hp])
        n = jnp.tanh(gx[:, 2 * hp:] + r * (gh[:, 2 * hp:] + bhn))
        h_new = (1.0 - z) * n + z * h
        hs_ref[t] = h_new
        return h_new

    h_sc[...] = jax.lax.fori_loop(0, tc, step, h_sc[...], unroll=True)


def vocab_proj_kernel(hs_ref, wo_ref, bo_ref, y_ref):
    """(TM, Hp) @ (Hp, TV) + bias -> (TM, TV) logits tile."""
    y_ref[...] = (jnp.dot(hs_ref[...], wo_ref[...],
                          preferred_element_type=jnp.float32) + bo_ref[...])


def decoder_forward(X_tokens, state, params, *, time_chunk=8):
    """Forward pass of the decoder.

    X_tokens : (B, T) int32 token ids
    state    : (B, H) float32 decoder hidden state (from init_state)
    returns  : (output (B, T, V), new_state (B, H))
    """
    emb = params["embedding"]                 # (vocab, E)
    B, T = X_tokens.shape
    H = state.shape[-1]
    V, E = emb.shape
    f32 = jnp.float32

    # Padded, lane/sublane-dense layout.
    Bp = _round_up(B, 8)
    Hp = _round_up(H, 128)
    Vp = _round_up(V, 128)
    Ep = _round_up(E, 128)
    TC = max(1, min(time_chunk, T))
    Tp = _round_up(T, TC)

    wi, wh, bi, bh = params["wi"], params["wh"], params["bi"], params["bh"]

    # Fused, per-gate zero-padded weights; gates laid out at Hp strides so the
    # kernel slices on 128-lane boundaries.  Input weights split into the
    # embedding rows (streamed per step) and the context rows (hoisted).
    wi_e = jnp.zeros((Ep, 3 * Hp), f32)       # embedding -> gates
    wi_c = jnp.zeros((H, 3 * Hp), f32)        # context   -> gates (hoisted)
    wh_f = jnp.zeros((Hp, 3 * Hp), f32)       # hidden    -> gates
    gbias = jnp.zeros((1, 3 * Hp), f32)
    for g in range(3):
        wi_e = wi_e.at[:E, g * Hp:g * Hp + H].set(wi[g, :E, :])
        wi_c = wi_c.at[:, g * Hp:g * Hp + H].set(wi[g, E:, :])
        wh_f = wh_f.at[:H, g * Hp:g * Hp + H].set(wh[g])
    # r/z biases fully fused (b_i + b_h); n keeps b_hn separate (scaled by r).
    gbias = gbias.at[0, 0 * Hp:0 * Hp + H].set(bi[0, 0] + bh[0, 0])
    gbias = gbias.at[0, 1 * Hp:1 * Hp + H].set(bi[1, 0] + bh[1, 0])
    gbias = gbias.at[0, 2 * Hp:2 * Hp + H].set(bi[2, 0])
    bh_n = jnp.zeros((1, Hp), f32).at[0, :H].set(bh[2, 0])

    # Time-invariant context contribution to the gate pre-activations,
    # computed exactly once (context == initial decoder state here).
    gates_base = jnp.zeros((Bp, 3 * Hp), f32)
    gates_base = gates_base.at[:B].set(state @ wi_c + gbias)

    h0_p = jnp.zeros((Bp, Hp), f32).at[:B, :H].set(state)
    wo_p = jnp.zeros((Hp, Vp), f32).at[:H, :V].set(params["wo"])
    bo_p = jnp.zeros((1, Vp), f32).at[:, :V].set(params["bo"])

    # Time-major embedded inputs only (no T-broadcast context stored in HBM).
    x_emb = jnp.take(emb, X_tokens, axis=0)                       # (B, T, E)
    x_tm = jnp.zeros((Tp, Bp, Ep), f32)
    x_tm = x_tm.at[:T, :B, :E].set(jnp.transpose(x_emb, (1, 0, 2)))

    # ---- stage 1: sequential GRU recurrence, TC time steps per grid step ----
    hs_tm = pl.pallas_call(
        gru_chunk_kernel,
        out_shape=jax.ShapeDtypeStruct((Tp, Bp, Hp), f32),
        grid_spec=pltpu.PrefetchScalarGridSpec(
            num_scalar_prefetch=0,
            grid=(Tp // TC,),
            in_specs=[
                pl.BlockSpec((TC, Bp, Ep), lambda c: (c, 0, 0)),   # x_emb
                pl.BlockSpec((Bp, Hp), lambda c: (0, 0)),          # h0
                pl.BlockSpec((Bp, 3 * Hp), lambda c: (0, 0)),      # gates_base
                pl.BlockSpec((Ep, 3 * Hp), lambda c: (0, 0)),      # wi_e
                pl.BlockSpec((Hp, 3 * Hp), lambda c: (0, 0)),      # wh_f
                pl.BlockSpec((1, Hp), lambda c: (0, 0)),           # bh_n
            ],
            out_specs=pl.BlockSpec((TC, Bp, Hp), lambda c: (c, 0, 0)),
            scratch_shapes=[pltpu.VMEM((Bp, Hp), f32)],
        ),
        compiler_params=pltpu.CompilerParams(
            dimension_semantics=("arbitrary",)),   # recurrence over time
    )(x_tm, h0_p, gates_base, wi_e, wh_f, bh_n)

    # ---- stage 2: vocab projection hoisted out of the loop (parallel) ----
    M = Tp * Bp
    hs_flat = hs_tm.reshape(M, Hp)
    TM = M if M <= 512 else Bp * TC           # always divides M
    TV = 512 if (Vp % 512 == 0) else 128      # lane-dense V tiles

    logits_flat = pl.pallas_call(
        vocab_proj_kernel,
        out_shape=jax.ShapeDtypeStruct((M, Vp), f32),
        grid_spec=pltpu.PrefetchScalarGridSpec(
            num_scalar_prefetch=0,
            grid=(M // TM, Vp // TV),
            in_specs=[
                pl.BlockSpec((TM, Hp), lambda i, j: (i, 0)),   # hidden states
                pl.BlockSpec((Hp, TV), lambda i, j: (0, j)),   # wo tile over V
                pl.BlockSpec((1, TV), lambda i, j: (0, j)),    # bo tile over V
            ],
            out_specs=pl.BlockSpec((TM, TV), lambda i, j: (i, j)),
        ),
        compiler_params=pltpu.CompilerParams(
            dimension_semantics=("parallel", "parallel")),
    )(hs_flat, wo_p, bo_p)

    logits = logits_flat.reshape(Tp, Bp, Vp)[:T, :B, :V]   # strip padding
    output = jnp.transpose(logits, (1, 0, 2))              # (B, T, V)
    new_state = hs_tm[T - 1, :B, :H]                       # (B, H)
    return output, new_state


def init_state(encoder_final_hidden):
    """init_state: take the encoder's final hidden state as decoder state."""
    return encoder_final_hidden


def decoder_forward_ref(X_tokens, state, params):
    """Pure-JAX reference (lax.scan GRU) for correctness checking."""
    emb = params["embedding"]
    B, T = X_tokens.shape
    H = state.shape[-1]
    x_emb = jnp.transpose(jnp.take(emb, X_tokens, axis=0), (1, 0, 2))
    context = jnp.broadcast_to(state[None, :, :], (T, B, H))
    x_cat = jnp.concatenate([x_emb, context], axis=-1)

    wi, wh, bi, bh = params["wi"], params["wh"], params["bi"], params["bh"]

    def step(h, x):
        r = jax.nn.sigmoid(x @ wi[0] + bi[0] + h @ wh[0] + bh[0])
        z = jax.nn.sigmoid(x @ wi[1] + bi[1] + h @ wh[1] + bh[1])
        n = jnp.tanh(x @ wi[2] + bi[2] + r * (h @ wh[2] + bh[2]))
        h_new = (1.0 - z) * n + z * h
        y = h_new @ params["wo"] + params["bo"]
        return h_new, y

    h_T, y_tm = jax.lax.scan(step, state, x_cat)
    return jnp.transpose(y_tm, (1, 0, 2)), h_T


if __name__ == "__main__":
    # Small, module-consistent shapes.
    B, T = 2, 8           # batch, target sequence length
    V, E, H = 24, 16, 32  # vocab_size, embed_size, num_hiddens

    key = jax.random.PRNGKey(0)
    ks = jax.random.split(key, 10)
    scale = 0.1
    params = {
        "embedding": scale * jax.random.normal(ks[0], (V, E), jnp.float32),
        "wi": scale * jax.random.normal(ks[1], (3, E + H, H), jnp.float32),
        "wh": scale * jax.random.normal(ks[2], (3, H, H), jnp.float32),
        "bi": scale * jax.random.normal(ks[3], (3, 1, H), jnp.float32),
        "bh": scale * jax.random.normal(ks[4], (3, 1, H), jnp.float32),
        "wo": scale * jax.random.normal(ks[5], (H, V), jnp.float32),
        "bo": scale * jax.random.normal(ks[6], (1, V), jnp.float32),
    }

    X_tokens = jax.random.randint(ks[7], (B, T), 0, V, dtype=jnp.int32)
    enc_final_hidden = scale * jax.random.normal(ks[8], (B, H), jnp.float32)

    state = init_state(enc_final_hidden)
    out, new_state = decoder_forward(X_tokens, state, params)
    out = jax.block_until_ready(out)
    new_state = jax.block_until_ready(new_state)

    # Correctness check against pure-JAX reference.
    out_ref, state_ref = decoder_forward_ref(X_tokens, state, params)
    np.testing.assert_allclose(np.asarray(out), np.asarray(out_ref),
                               rtol=1e-5, atol=1e-5)
    np.testing.assert_allclose(np.asarray(new_state), np.asarray(state_ref),
                               rtol=1e-5, atol=1e-5)

    assert out.shape == (B, T, V) and new_state.shape == (B, H)
    print("KERNEL_OK")
</pallas_src>

<mosaic_0001>
module attributes {stable_mosaic.version = 11 : i64} {
  func.func @gru_chunk_kernel(%arg0: i32, %arg1: memref<8x8x128xf32, #tpu.memory_space<vmem>>, %arg2: memref<8x128xf32, #tpu.memory_space<vmem>>, %arg3: memref<8x384xf32, #tpu.memory_space<vmem>>, %arg4: memref<128x384xf32, #tpu.memory_space<vmem>>, %arg5: memref<128x384xf32, #tpu.memory_space<vmem>>, %arg6: memref<1x128xf32, #tpu.memory_space<vmem>>, %arg7: memref<8x8x128xf32, #tpu.memory_space<vmem>>, %arg8: memref<8x128xf32, #tpu.memory_space<vmem>>) attributes {dimension_semantics = [#tpu.dimension_semantics<arbitrary>], iteration_bounds = array<i64: 1>, scalar_prefetch = 0 : i64, scratch_operands = 1 : i64, tpu.core_type = #tpu.core_type<tc>, window_params = [{transform_indices = @transform_0, window_bounds = array<i64: 8, 8, 128>}, {pipeline_mode = #tpu.pipeline_mode<synchronous>, transform_indices = @transform_1, window_bounds = array<i64: 8, 128>}, {pipeline_mode = #tpu.pipeline_mode<synchronous>, transform_indices = @transform_2, window_bounds = array<i64: 8, 384>}, {pipeline_mode = #tpu.pipeline_mode<synchronous>, transform_indices = @transform_3, window_bounds = array<i64: 128, 384>}, {pipeline_mode = #tpu.pipeline_mode<synchronous>, transform_indices = @transform_4, window_bounds = array<i64: 128, 384>}, {pipeline_mode = #tpu.pipeline_mode<synchronous>, transform_indices = @transform_5, window_bounds = array<i64: 1, 128>}, {transform_indices = @transform_6, window_bounds = array<i64: 8, 8, 128>}]} {
    %c0_i32 = arith.constant 0 : i32
    %0 = arith.cmpi eq, %arg0, %c0_i32 : i32
    %1 = arith.extui %0 : i1 to i32
    %c0_i32_0 = arith.constant 0 : i32
    %2 = arith.cmpi ne, %1, %c0_i32_0 : i32
    scf.if %2 {
      %c0_84 = arith.constant 0 : index
      %c0_85 = arith.constant 0 : index
      %313 = vector.load %arg2[%c0_84, %c0_85] : memref<8x128xf32, #tpu.memory_space<vmem>>, vector<8x128xf32>
      %c0_86 = arith.constant 0 : index
      %c0_87 = arith.constant 0 : index
      %314 = vector.load %arg8[%c0_86, %c0_87] : memref<8x128xf32, #tpu.memory_space<vmem>>, vector<8x128xf32>
      tpu.vector_store %arg8[%c0_86, %c0_87], %313 {strides = array<i32>} : memref<8x128xf32, #tpu.memory_space<vmem>>, vector<8x128xf32>,
    } else {
    }
    %c0 = arith.constant 0 : index
    %c0_1 = arith.constant 0 : index
    %3 = vector.load %arg4[%c0, %c0_1] : memref<128x384xf32, #tpu.memory_space<vmem>>, vector<128x384xf32>
    %c0_2 = arith.constant 0 : index
    %c0_3 = arith.constant 0 : index
    %4 = vector.load %arg5[%c0_2, %c0_3] : memref<128x384xf32, #tpu.memory_space<vmem>>, vector<128x384xf32>
    %c0_4 = arith.constant 0 : index
    %c0_5 = arith.constant 0 : index
    %5 = vector.load %arg3[%c0_4, %c0_5] : memref<8x384xf32, #tpu.memory_space<vmem>>, vector<8x384xf32>
    %c0_6 = arith.constant 0 : index
    %c0_7 = arith.constant 0 : index
    %6 = vector.load %arg6[%c0_6, %c0_7] : memref<1x128xf32, #tpu.memory_space<vmem>>, vector<1x128xf32>
    %c0_8 = arith.constant 0 : index
    %c0_9 = arith.constant 0 : index
    %7 = vector.load %arg8[%c0_8, %c0_9] : memref<8x128xf32, #tpu.memory_space<vmem>>, vector<8x128xf32>
    %c0_i32_10 = arith.constant 0 : i32
    %8 = arith.index_cast %c0_i32_10 : i32 to index
    %c0_11 = arith.constant 0 : index
    %c0_12 = arith.constant 0 : index
    %9 = vector.load %arg1[%8, %c0_11, %c0_12] : memref<8x8x128xf32, #tpu.memory_space<vmem>>, vector<1x8x128xf32>
    %10 = vector.shape_cast %9 : vector<1x8x128xf32> to vector<8x128xf32>
    %cst = arith.constant dense<0.000000e+00> : vector<8x384xf32>
    %11 = tpu.matmul %10, %3, %cst {dimension_numbers = #tpu.dot_dimension_numbers<[1], [0], [0], [1], [0, 0, 1, 1], [], []>} : vector<8x128xf32>, vector<128x384xf32>, vector<8x384xf32> -> vector<8x384xf32>
    %12 = arith.addf %11, %5 : vector<8x384xf32>
    %cst_13 = arith.constant dense<0.000000e+00> : vector<8x384xf32>
    %13 = tpu.matmul %7, %4, %cst_13 {dimension_numbers = #tpu.dot_dimension_numbers<[1], [0], [0], [1], [0, 0, 1, 1], [], []>} : vector<8x128xf32>, vector<128x384xf32>, vector<8x384xf32> -> vector<8x384xf32>
    %14 = vector.extract_strided_slice %12 {offsets = [0, 0], sizes = [8, 128], strides = [1, 1]} : vector<8x384xf32> to vector<8x128xf32>
    %15 = vector.extract_strided_slice %13 {offsets = [0, 0], sizes = [8, 128], strides = [1, 1]} : vector<8x384xf32> to vector<8x128xf32>
    %16 = arith.addf %14, %15 : vector<8x128xf32>
    %17 = arith.negf %16 : vector<8x128xf32>
    %18 = math.exp %17 : vector<8x128xf32>
    %cst_14 = arith.constant 1.000000e+00 : f32
    %19 = vector.broadcast %cst_14 : f32 to vector<8x128xf32>
    %20 = arith.addf %19, %18 : vector<8x128xf32>
    %21 = arith.divf %19, %20 : vector<8x128xf32>
    %22 = vector.extract_strided_slice %12 {offsets = [0, 128], sizes = [8, 128], strides = [1, 1]} : vector<8x384xf32> to vector<8x128xf32>
    %23 = vector.extract_strided_slice %13 {offsets = [0, 128], sizes = [8, 128], strides = [1, 1]} : vector<8x384xf32> to vector<8x128xf32>
    %24 = arith.addf %22, %23 : vector<8x128xf32>
    %25 = arith.negf %24 : vector<8x128xf32>
    %26 = math.exp %25 : vector<8x128xf32>
    %cst_15 = arith.constant 1.000000e+00 : f32
    %27 = vector.broadcast %cst_15 : f32 to vector<8x128xf32>
    %28 = arith.addf %27, %26 : vector<8x128xf32>
    %29 = arith.divf %27, %28 : vector<8x128xf32>
    %30 = vector.extract_strided_slice %12 {offsets = [0, 256], sizes = [8, 128], strides = [1, 1]} : vector<8x384xf32> to vector<8x128xf32>
    %31 = vector.extract_strided_slice %13 {offsets = [0, 256], sizes = [8, 128], strides = [1, 1]} : vector<8x384xf32> to vector<8x128xf32>
    %32 = vector.broadcast %6 : vector<1x128xf32> to vector<8x128xf32>
    %33 = arith.addf %31, %32 : vector<8x128xf32>
    %34 = arith.mulf %21, %33 : vector<8x128xf32>
    %35 = arith.addf %30, %34 : vector<8x128xf32>
    %36 = math.tanh %35 : vector<8x128xf32>
    %cst_16 = arith.constant 1.000000e+00 : f32
    %37 = vector.broadcast %cst_16 : f32 to vector<8x128xf32>
    %38 = arith.subf %37, %29 : vector<8x128xf32>
    %39 = arith.mulf %38, %36 : vector<8x128xf32>
    %40 = arith.mulf %29, %7 : vector<8x128xf32>
    %41 = arith.addf %39, %40 : vector<8x128xf32>
    %42 = arith.index_cast %c0_i32_10 : i32 to index
    %c0_17 = arith.constant 0 : index
    %c0_18 = arith.constant 0 : index
    %43 = vector.load %arg7[%42, %c0_17, %c0_18] : memref<8x8x128xf32, #tpu.memory_space<vmem>>, vector<1x8x128xf32>
    %44 = vector.shape_cast %43 : vector<1x8x128xf32> to vector<8x128xf32>
    %45 = vector.shape_cast %41 : vector<8x128xf32> to vector<1x8x128xf32>
    tpu.vector_store %arg7[%42, %c0_17, %c0_18], %45 {strides = array<i32>} : memref<8x8x128xf32, #tpu.memory_space<vmem>>, vector<1x8x128xf32>,
    %c1_i32 = arith.constant 1 : i32
    %46 = arith.index_cast %c1_i32 : i32 to index
    %c0_19 = arith.constant 0 : index
    %c0_20 = arith.constant 0 : index
    %47 = vector.load %arg1[%46, %c0_19, %c0_20] : memref<8x8x128xf32, #tpu.memory_space<vmem>>, vector<1x8x128xf32>
    %48 = vector.shape_cast %47 : vector<1x8x128xf32> to vector<8x128xf32>
    %cst_21 = arith.constant dense<0.000000e+00> : vector<8x384xf32>
    %49 = tpu.matmul %48, %3, %cst_21 {dimension_numbers = #tpu.dot_dimension_numbers<[1], [0], [0], [1], [0, 0, 1, 1], [], []>} : vector<8x128xf32>, vector<128x384xf32>, vector<8x384xf32> -> vector<8x384xf32>
    %50 = arith.addf %49, %5 : vector<8x384xf32>
    %cst_22 = arith.constant dense<0.000000e+00> : vector<8x384xf32>
    %51 = tpu.matmul %41, %4, %cst_22 {dimension_numbers = #tpu.dot_dimension_numbers<[1], [0], [0], [1], [0, 0, 1, 1], [], []>} : vector<8x128xf32>, vector<128x384xf32>, vector<8x384xf32> -> vector<8x384xf32>
    %52 = vector.extract_strided_slice %50 {offsets = [0, 0], sizes = [8, 128], strides = [1, 1]} : vector<8x384xf32> to vector<8x128xf32>
    %53 = vector.extract_strided_slice %51 {offsets = [0, 0], sizes = [8, 128], strides = [1, 1]} : vector<8x384xf32> to vector<8x128xf32>
    %54 = arith.addf %52, %53 : vector<8x128xf32>
    %55 = arith.negf %54 : vector<8x128xf32>
    %56 = math.exp %55 : vector<8x128xf32>
    %cst_23 = arith.constant 1.000000e+00 : f32
    %57 = vector.broadcast %cst_23 : f32 to vector<8x128xf32>
    %58 = arith.addf %57, %56 : vector<8x128xf32>
    %59 = arith.divf %57, %58 : vector<8x128xf32>
    %60 = vector.extract_strided_slice %50 {offsets = [0, 128], sizes = [8, 128], strides = [1, 1]} : vector<8x384xf32> to vector<8x128xf32>
    %61 = vector.extract_strided_slice %51 {offsets = [0, 128], sizes = [8, 128], strides = [1, 1]} : vector<8x384xf32> to vector<8x128xf32>
    %62 = arith.addf %60, %61 : vector<8x128xf32>
    %63 = arith.negf %62 : vector<8x128xf32>
    %64 = math.exp %63 : vector<8x128xf32>
    %cst_24 = arith.constant 1.000000e+00 : f32
    %65 = vector.broadcast %cst_24 : f32 to vector<8x128xf32>
    %66 = arith.addf %65, %64 : vector<8x128xf32>
    %67 = arith.divf %65, %66 : vector<8x128xf32>
    %68 = vector.extract_strided_slice %50 {offsets = [0, 256], sizes = [8, 128], strides = [1, 1]} : vector<8x384xf32> to vector<8x128xf32>
    %69 = vector.extract_strided_slice %51 {offsets = [0, 256], sizes = [8, 128], strides = [1, 1]} : vector<8x384xf32> to vector<8x128xf32>
    %70 = vector.broadcast %6 : vector<1x128xf32> to vector<8x128xf32>
    %71 = arith.addf %69, %70 : vector<8x128xf32>
    %72 = arith.mulf %59, %71 : vector<8x128xf32>
    %73 = arith.addf %68, %72 : vector<8x128xf32>
    %74 = math.tanh %73 : vector<8x128xf32>
    %cst_25 = arith.constant 1.000000e+00 : f32
    %75 = vector.broadcast %cst_25 : f32 to vector<8x128xf32>
    %76 = arith.subf %75, %67 : vector<8x128xf32>
    %77 = arith.mulf %76, %74 : vector<8x128xf32>
    %78 = arith.mulf %67, %41 : vector<8x128xf32>
    %79 = arith.addf %77, %78 : vector<8x128xf32>
    %80 = arith.index_cast %c1_i32 : i32 to index
    %c0_26 = arith.constant 0 : index
    %c0_27 = arith.constant 0 : index
    %81 = vector.load %arg7[%80, %c0_26, %c0_27] : memref<8x8x128xf32, #tpu.memory_space<vmem>>, vector<1x8x128xf32>
    %82 = vector.shape_cast %81 : vector<1x8x128xf32> to vector<8x128xf32>
    %83 = vector.shape_cast %79 : vector<8x128xf32> to vector<1x8x128xf32>
    tpu.vector_store %arg7[%80, %c0_26, %c0_27], %83 {strides = array<i32>} : memref<8x8x128xf32, #tpu.memory_space<vmem>>, vector<1x8x128xf32>,
    %c2_i32 = arith.constant 2 : i32
    %84 = arith.index_cast %c2_i32 : i32 to index
    %c0_28 = arith.constant 0 : index
    %c0_29 = arith.constant 0 : index
    %85 = vector.load %arg1[%84, %c0_28, %c0_29] : memref<8x8x128xf32, #tpu.memory_space<vmem>>, vector<1x8x128xf32>
    %86 = vector.shape_cast %85 : vector<1x8x128xf32> to vector<8x128xf32>
    %cst_30 = arith.constant dense<0.000000e+00> : vector<8x384xf32>
    %87 = tpu.matmul %86, %3, %cst_30 {dimension_numbers = #tpu.dot_dimension_numbers<[1], [0], [0], [1], [0, 0, 1, 1], [], []>} : vector<8x128xf32>, vector<128x384xf32>, vector<8x384xf32> -> vector<8x384xf32>
    %88 = arith.addf %87, %5 : vector<8x384xf32>
    %cst_31 = arith.constant dense<0.000000e+00> : vector<8x384xf32>
    %89 = tpu.matmul %79, %4, %cst_31 {dimension_numbers = #tpu.dot_dimension_numbers<[1], [0], [0], [1], [0, 0, 1, 1], [], []>} : vector<8x128xf32>, vector<128x384xf32>, vector<8x384xf32> -> vector<8x384xf32>
    %90 = vector.extract_strided_slice %88 {offsets = [0, 0], sizes = [8, 128], strides = [1, 1]} : vector<8x384xf32> to vector<8x128xf32>
    %91 = vector.extract_strided_slice %89 {offsets = [0, 0], sizes = [8, 128], strides = [1, 1]} : vector<8x384xf32> to vector<8x128xf32>
    %92 = arith.addf %90, %91 : vector<8x128xf32>
    %93 = arith.negf %92 : vector<8x128xf32>
    %94 = math.exp %93 : vector<8x128xf32>
    %cst_32 = arith.constant 1.000000e+00 : f32
    %95 = vector.broadcast %cst_32 : f32 to vector<8x128xf32>
    %96 = arith.addf %95, %94 : vector<8x128xf32>
    %97 = arith.divf %95, %96 : vector<8x128xf32>
    %98 = vector.extract_strided_slice %88 {offsets = [0, 128], sizes = [8, 128], strides = [1, 1]} : vector<8x384xf32> to vector<8x128xf32>
    %99 = vector.extract_strided_slice %89 {offsets = [0, 128], sizes = [8, 128], strides = [1, 1]} : vector<8x384xf32> to vector<8x128xf32>
    %100 = arith.addf %98, %99 : vector<8x128xf32>
    %101 = arith.negf %100 : vector<8x128xf32>
    %102 = math.exp %101 : vector<8x128xf32>
    %cst_33 = arith.constant 1.000000e+00 : f32
    %103 = vector.broadcast %cst_33 : f32 to vector<8x128xf32>
    %104 = arith.addf %103, %102 : vector<8x128xf32>
    %105 = arith.divf %103, %104 : vector<8x128xf32>
    %106 = vector.extract_strided_slice %88 {offsets = [0, 256], sizes = [8, 128], strides = [1, 1]} : vector<8x384xf32> to vector<8x128xf32>
    %107 = vector.extract_strided_slice %89 {offsets = [0, 256], sizes = [8, 128], strides = [1, 1]} : vector<8x384xf32> to vector<8x128xf32>
    %108 = vector.broadcast %6 : vector<1x128xf32> to vector<8x128xf32>
    %109 = arith.addf %107, %108 : vector<8x128xf32>
    %110 = arith.mulf %97, %109 : vector<8x128xf32>
    %111 = arith.addf %106, %110 : vector<8x128xf32>
    %112 = math.tanh %111 : vector<8x128xf32>
    %cst_34 = arith.constant 1.000000e+00 : f32
    %113 = vector.broadcast %cst_34 : f32 to vector<8x128xf32>
    %114 = arith.subf %113, %105 : vector<8x128xf32>
    %115 = arith.mulf %114, %112 : vector<8x128xf32>
    %116 = arith.mulf %105, %79 : vector<8x128xf32>
    %117 = arith.addf %115, %116 : vector<8x128xf32>
    %118 = arith.index_cast %c2_i32 : i32 to index
    %c0_35 = arith.constant 0 : index
    %c0_36 = arith.constant 0 : index
    %119 = vector.load %arg7[%118, %c0_35, %c0_36] : memref<8x8x128xf32, #tpu.memory_space<vmem>>, vector<1x8x128xf32>
    %120 = vector.shape_cast %119 : vector<1x8x128xf32> to vector<8x128xf32>
    %121 = vector.shape_cast %117 : vector<8x128xf32> to vector<1x8x128xf32>
    tpu.vector_store %arg7[%118, %c0_35, %c0_36], %121 {strides = array<i32>} : memref<8x8x128xf32, #tpu.memory_space<vmem>>, vector<1x8x128xf32>,
    %c3_i32 = arith.constant 3 : i32
    %122 = arith.index_cast %c3_i32 : i32 to index
    %c0_37 = arith.constant 0 : index
    %c0_38 = arith.constant 0 : index
    %123 = vector.load %arg1[%122, %c0_37, %c0_38] : memref<8x8x128xf32, #tpu.memory_space<vmem>>, vector<1x8x128xf32>
    %124 = vector.shape_cast %123 : vector<1x8x128xf32> to vector<8x128xf32>
    %cst_39 = arith.constant dense<0.000000e+00> : vector<8x384xf32>
    %125 = tpu.matmul %124, %3, %cst_39 {dimension_numbers = #tpu.dot_dimension_numbers<[1], [0], [0], [1], [0, 0, 1, 1], [], []>} : vector<8x128xf32>, vector<128x384xf32>, vector<8x384xf32> -> vector<8x384xf32>
    %126 = arith.addf %125, %5 : vector<8x384xf32>
    %cst_40 = arith.constant dense<0.000000e+00> : vector<8x384xf32>
    %127 = tpu.matmul %117, %4, %cst_40 {dimension_numbers = #tpu.dot_dimension_numbers<[1], [0], [0], [1], [0, 0, 1, 1], [], []>} : vector<8x128xf32>, vector<128x384xf32>, vector<8x384xf32> -> vector<8x384xf32>
    %128 = vector.extract_strided_slice %126 {offsets = [0, 0], sizes = [8, 128], strides = [1, 1]} : vector<8x384xf32> to vector<8x128xf32>
    %129 = vector.extract_strided_slice %127 {offsets = [0, 0], sizes = [8, 128], strides = [1, 1]} : vector<8x384xf32> to vector<8x128xf32>
    %130 = arith.addf %128, %129 : vector<8x128xf32>
    %131 = arith.negf %130 : vector<8x128xf32>
    %132 = math.exp %131 : vector<8x128xf32>
    %cst_41 = arith.constant 1.000000e+00 : f32
    %133 = vector.broadcast %cst_41 : f32 to vector<8x128xf32>
    %134 = arith.addf %133, %132 : vector<8x128xf32>
    %135 = arith.divf %133, %134 : vector<8x128xf32>
    %136 = vector.extract_strided_slice %126 {offsets = [0, 128], sizes = [8, 128], strides = [1, 1]} : vector<8x384xf32> to vector<8x128xf32>
    %137 = vector.extract_strided_slice %127 {offsets = [0, 128], sizes = [8, 128], strides = [1, 1]} : vector<8x384xf32> to vector<8x128xf32>
    %138 = arith.addf %136, %137 : vector<8x128xf32>
    %139 = arith.negf %138 : vector<8x128xf32>
    %140 = math.exp %139 : vector<8x128xf32>
    %cst_42 = arith.constant 1.000000e+00 : f32
    %141 = vector.broadcast %cst_42 : f32 to vector<8x128xf32>
    %142 = arith.addf %141, %140 : vector<8x128xf32>
    %143 = arith.divf %141, %142 : vector<8x128xf32>
    %144 = vector.extract_strided_slice %126 {offsets = [0, 256], sizes = [8, 128], strides = [1, 1]} : vector<8x384xf32> to vector<8x128xf32>
    %145 = vector.extract_strided_slice %127 {offsets = [0, 256], sizes = [8, 128], strides = [1, 1]} : vector<8x384xf32> to vector<8x128xf32>
    %146 = vector.broadcast %6 : vector<1x128xf32> to vector<8x128xf32>
    %147 = arith.addf %145, %146 : vector<8x128xf32>
    %148 = arith.mulf %135, %147 : vector<8x128xf32>
    %149 = arith.addf %144, %148 : vector<8x128xf32>
    %150 = math.tanh %149 : vector<8x128xf32>
    %cst_43 = arith.constant 1.000000e+00 : f32
    %151 = vector.broadcast %cst_43 : f32 to vector<8x128xf32>
    %152 = arith.subf %151, %143 : vector<8x128xf32>
    %153 = arith.mulf %152, %150 : vector<8x128xf32>
    %154 = arith.mulf %143, %117 : vector<8x128xf32>
    %155 = arith.addf %153, %154 : vector<8x128xf32>
    %156 = arith.index_cast %c3_i32 : i32 to index
    %c0_44 = arith.constant 0 : index
    %c0_45 = arith.constant 0 : index
    %157 = vector.load %arg7[%156, %c0_44, %c0_45] : memref<8x8x128xf32, #tpu.memory_space<vmem>>, vector<1x8x128xf32>
    %158 = vector.shape_cast %157 : vector<1x8x128xf32> to vector<8x128xf32>
    %159 = vector.shape_cast %155 : vector<8x128xf32> to vector<1x8x128xf32>
    tpu.vector_store %arg7[%156, %c0_44, %c0_45], %159 {strides = array<i32>} : memref<8x8x128xf32, #tpu.memory_space<vmem>>, vector<1x8x128xf32>,
    %c4_i32 = arith.constant 4 : i32
    %160 = arith.index_cast %c4_i32 : i32 to index
    %c0_46 = arith.constant 0 : index
    %c0_47 = arith.constant 0 : index
    %161 = vector.load %arg1[%160, %c0_46, %c0_47] : memref<8x8x128xf32, #tpu.memory_space<vmem>>, vector<1x8x128xf32>
    %162 = vector.shape_cast %161 : vector<1x8x128xf32> to vector<8x128xf32>
    %cst_48 = arith.constant dense<0.000000e+00> : vector<8x384xf32>
    %163 = tpu.matmul %162, %3, %cst_48 {dimension_numbers = #tpu.dot_dimension_numbers<[1], [0], [0], [1], [0, 0, 1, 1], [], []>} : vector<8x128xf32>, vector<128x384xf32>, vector<8x384xf32> -> vector<8x384xf32>
    %164 = arith.addf %163, %5 : vector<8x384xf32>
    %cst_49 = arith.constant dense<0.000000e+00> : vector<8x384xf32>
    %165 = tpu.matmul %155, %4, %cst_49 {dimension_numbers = #tpu.dot_dimension_numbers<[1], [0], [0], [1], [0, 0, 1, 1], [], []>} : vector<8x128xf32>, vector<128x384xf32>, vector<8x384xf32> -> vector<8x384xf32>
    %166 = vector.extract_strided_slice %164 {offsets = [0, 0], sizes = [8, 128], strides = [1, 1]} : vector<8x384xf32> to vector<8x128xf32>
    %167 = vector.extract_strided_slice %165 {offsets = [0, 0], sizes = [8, 128], strides = [1, 1]} : vector<8x384xf32> to vector<8x128xf32>
    %168 = arith.addf %166, %167 : vector<8x128xf32>
    %169 = arith.negf %168 : vector<8x128xf32>
    %170 = math.exp %169 : vector<8x128xf32>
    %cst_50 = arith.constant 1.000000e+00 : f32
    %171 = vector.broadcast %cst_50 : f32 to vector<8x128xf32>
    %172 = arith.addf %171, %170 : vector<8x128xf32>
    %173 = arith.divf %171, %172 : vector<8x128xf32>
    %174 = vector.extract_strided_slice %164 {offsets = [0, 128], sizes = [8, 128], strides = [1, 1]} : vector<8x384xf32> to vector<8x128xf32>
    %175 = vector.extract_strided_slice %165 {offsets = [0, 128], sizes = [8, 128], strides = [1, 1]} : vector<8x384xf32> to vector<8x128xf32>
    %176 = arith.addf %174, %175 : vector<8x128xf32>
    %177 = arith.negf %176 : vector<8x128xf32>
    %178 = math.exp %177 : vector<8x128xf32>
    %cst_51 = arith.constant 1.000000e+00 : f32
    %179 = vector.broadcast %cst_51 : f32 to vector<8x128xf32>
    %180 = arith.addf %179, %178 : vector<8x128xf32>
    %181 = arith.divf %179, %180 : vector<8x128xf32>
    %182 = vector.extract_strided_slice %164 {offsets = [0, 256], sizes = [8, 128], strides = [1, 1]} : vector<8x384xf32> to vector<8x128xf32>
    %183 = vector.extract_strided_slice %165 {offsets = [0, 256], sizes = [8, 128], strides = [1, 1]} : vector<8x384xf32> to vector<8x128xf32>
    %184 = vector.broadcast %6 : vector<1x128xf32> to vector<8x128xf32>
    %185 = arith.addf %183, %184 : vector<8x128xf32>
    %186 = arith.mulf %173, %185 : vector<8x128xf32>
    %187 = arith.addf %182, %186 : vector<8x128xf32>
    %188 = math.tanh %187 : vector<8x128xf32>
    %cst_52 = arith.constant 1.000000e+00 : f32
    %189 = vector.broadcast %cst_52 : f32 to vector<8x128xf32>
    %190 = arith.subf %189, %181 : vector<8x128xf32>
    %191 = arith.mulf %190, %188 : vector<8x128xf32>
    %192 = arith.mulf %181, %155 : vector<8x128xf32>
    %193 = arith.addf %191, %192 : vector<8x128xf32>
    %194 = arith.index_cast %c4_i32 : i32 to index
    %c0_53 = arith.constant 0 : index
    %c0_54 = arith.constant 0 : index
    %195 = vector.load %arg7[%194, %c0_53, %c0_54] : memref<8x8x128xf32, #tpu.memory_space<vmem>>, vector<1x8x128xf32>
    %196 = vector.shape_cast %195 : vector<1x8x128xf32> to vector<8x128xf32>
    %197 = vector.shape_cast %193 : vector<8x128xf32> to vector<1x8x128xf32>
    tpu.vector_store %arg7[%194, %c0_53, %c0_54], %197 {strides = array<i32>} : memref<8x8x128xf32, #tpu.memory_space<vmem>>, vector<1x8x128xf32>,
    %c5_i32 = arith.constant 5 : i32
    %198 = arith.index_cast %c5_i32 : i32 to index
    %c0_55 = arith.constant 0 : index
    %c0_56 = arith.constant 0 : index
    %199 = vector.load %arg1[%198, %c0_55, %c0_56] : memref<8x8x128xf32, #tpu.memory_space<vmem>>, vector<1x8x128xf32>
    %200 = vector.shape_cast %199 : vector<1x8x128xf32> to vector<8x128xf32>
    %cst_57 = arith.constant dense<0.000000e+00> : vector<8x384xf32>
    %201 = tpu.matmul %200, %3, %cst_57 {dimension_numbers = #tpu.dot_dimension_numbers<[1], [0], [0], [1], [0, 0, 1, 1], [], []>} : vector<8x128xf32>, vector<128x384xf32>, vector<8x384xf32> -> vector<8x384xf32>
    %202 = arith.addf %201, %5 : vector<8x384xf32>
    %cst_58 = arith.constant dense<0.000000e+00> : vector<8x384xf32>
    %203 = tpu.matmul %193, %4, %cst_58 {dimension_numbers = #tpu.dot_dimension_numbers<[1], [0], [0], [1], [0, 0, 1, 1], [], []>} : vector<8x128xf32>, vector<128x384xf32>, vector<8x384xf32> -> vector<8x384xf32>
    %204 = vector.extract_strided_slice %202 {offsets = [0, 0], sizes = [8, 128], strides = [1, 1]} : vector<8x384xf32> to vector<8x128xf32>
    %205 = vector.extract_strided_slice %203 {offsets = [0, 0], sizes = [8, 128], strides = [1, 1]} : vector<8x384xf32> to vector<8x128xf32>
    %206 = arith.addf %204, %205 : vector<8x128xf32>
    %207 = arith.negf %206 : vector<8x128xf32>
    %208 = math.exp %207 : vector<8x128xf32>
    %cst_59 = arith.constant 1.000000e+00 : f32
    %209 = vector.broadcast %cst_59 : f32 to vector<8x128xf32>
    %210 = arith.addf %209, %208 : vector<8x128xf32>
    %211 = arith.divf %209, %210 : vector<8x128xf32>
    %212 = vector.extract_strided_slice %202 {offsets = [0, 128], sizes = [8, 128], strides = [1, 1]} : vector<8x384xf32> to vector<8x128xf32>
    %213 = vector.extract_strided_slice %203 {offsets = [0, 128], sizes = [8, 128], strides = [1, 1]} : vector<8x384xf32> to vector<8x128xf32>
    %214 = arith.addf %212, %213 : vector<8x128xf32>
    %215 = arith.negf %214 : vector<8x128xf32>
    %216 = math.exp %215 : vector<8x128xf32>
    %cst_60 = arith.constant 1.000000e+00 : f32
    %217 = vector.broadcast %cst_60 : f32 to vector<8x128xf32>
    %218 = arith.addf %217, %216 : vector<8x128xf32>
    %219 = arith.divf %217, %218 : vector<8x128xf32>
    %220 = vector.extract_strided_slice %202 {offsets = [0, 256], sizes = [8, 128], strides = [1, 1]} : vector<8x384xf32> to vector<8x128xf32>
    %221 = vector.extract_strided_slice %203 {offsets = [0, 256], sizes = [8, 128], strides = [1, 1]} : vector<8x384xf32> to vector<8x128xf32>
    %222 = vector.broadcast %6 : vector<1x128xf32> to vector<8x128xf32>
    %223 = arith.addf %221, %222 : vector<8x128xf32>
    %224 = arith.mulf %211, %223 : vector<8x128xf32>
    %225 = arith.addf %220, %224 : vector<8x128xf32>
    %226 = math.tanh %225 : vector<8x128xf32>
    %cst_61 = arith.constant 1.000000e+00 : f32
    %227 = vector.broadcast %cst_61 : f32 to vector<8x128xf32>
    %228 = arith.subf %227, %219 : vector<8x128xf32>
    %229 = arith.mulf %228, %226 : vector<8x128xf32>
    %230 = arith.mulf %219, %193 : vector<8x128xf32>
    %231 = arith.addf %229, %230 : vector<8x128xf32>
    %232 = arith.index_cast %c5_i32 : i32 to index
    %c0_62 = arith.constant 0 : index
    %c0_63 = arith.constant 0 : index
    %233 = vector.load %arg7[%232, %c0_62, %c0_63] : memref<8x8x128xf32, #tpu.memory_space<vmem>>, vector<1x8x128xf32>
    %234 = vector.shape_cast %233 : vector<1x8x128xf32> to vector<8x128xf32>
    %235 = vector.shape_cast %231 : vector<8x128xf32> to vector<1x8x128xf32>
    tpu.vector_store %arg7[%232, %c0_62, %c0_63], %235 {strides = array<i32>} : memref<8x8x128xf32, #tpu.memory_space<vmem>>, vector<1x8x128xf32>,
    %c6_i32 = arith.constant 6 : i32
    %236 = arith.index_cast %c6_i32 : i32 to index
    %c0_64 = arith.constant 0 : index
    %c0_65 = arith.constant 0 : index
    %237 = vector.load %arg1[%236, %c0_64, %c0_65] : memref<8x8x128xf32, #tpu.memory_space<vmem>>, vector<1x8x128xf32>
    %238 = vector.shape_cast %237 : vector<1x8x128xf32> to vector<8x128xf32>
    %cst_66 = arith.constant dense<0.000000e+00> : vector<8x384xf32>
    %239 = tpu.matmul %238, %3, %cst_66 {dimension_numbers = #tpu.dot_dimension_numbers<[1], [0], [0], [1], [0, 0, 1, 1], [], []>} : vector<8x128xf32>, vector<128x384xf32>, vector<8x384xf32> -> vector<8x384xf32>
    %240 = arith.addf %239, %5 : vector<8x384xf32>
    %cst_67 = arith.constant dense<0.000000e+00> : vector<8x384xf32>
    %241 = tpu.matmul %231, %4, %cst_67 {dimension_numbers = #tpu.dot_dimension_numbers<[1], [0], [0], [1], [0, 0, 1, 1], [], []>} : vector<8x128xf32>, vector<128x384xf32>, vector<8x384xf32> -> vector<8x384xf32>
    %242 = vector.extract_strided_slice %240 {offsets = [0, 0], sizes = [8, 128], strides = [1, 1]} : vector<8x384xf32> to vector<8x128xf32>
    %243 = vector.extract_strided_slice %241 {offsets = [0, 0], sizes = [8, 128], strides = [1, 1]} : vector<8x384xf32> to vector<8x128xf32>
    %244 = arith.addf %242, %243 : vector<8x128xf32>
    %245 = arith.negf %244 : vector<8x128xf32>
    %246 = math.exp %245 : vector<8x128xf32>
    %cst_68 = arith.constant 1.000000e+00 : f32
    %247 = vector.broadcast %cst_68 : f32 to vector<8x128xf32>
    %248 = arith.addf %247, %246 : vector<8x128xf32>
    %249 = arith.divf %247, %248 : vector<8x128xf32>
    %250 = vector.extract_strided_slice %240 {offsets = [0, 128], sizes = [8, 128], strides = [1, 1]} : vector<8x384xf32> to vector<8x128xf32>
    %251 = vector.extract_strided_slice %241 {offsets = [0, 128], sizes = [8, 128], strides = [1, 1]} : vector<8x384xf32> to vector<8x128xf32>
    %252 = arith.addf %250, %251 : vector<8x128xf32>
    %253 = arith.negf %252 : vector<8x128xf32>
    %254 = math.exp %253 : vector<8x128xf32>
    %cst_69 = arith.constant 1.000000e+00 : f32
    %255 = vector.broadcast %cst_69 : f32 to vector<8x128xf32>
    %256 = arith.addf %255, %254 : vector<8x128xf32>
    %257 = arith.divf %255, %256 : vector<8x128xf32>
    %258 = vector.extract_strided_slice %240 {offsets = [0, 256], sizes = [8, 128], strides = [1, 1]} : vector<8x384xf32> to vector<8x128xf32>
    %259 = vector.extract_strided_slice %241 {offsets = [0, 256], sizes = [8, 128], strides = [1, 1]} : vector<8x384xf32> to vector<8x128xf32>
    %260 = vector.broadcast %6 : vector<1x128xf32> to vector<8x128xf32>
    %261 = arith.addf %259, %260 : vector<8x128xf32>
    %262 = arith.mulf %249, %261 : vector<8x128xf32>
    %263 = arith.addf %258, %262 : vector<8x128xf32>
    %264 = math.tanh %263 : vector<8x128xf32>
    %cst_70 = arith.constant 1.000000e+00 : f32
    %265 = vector.broadcast %cst_70 : f32 to vector<8x128xf32>
    %266 = arith.subf %265, %257 : vector<8x128xf32>
    %267 = arith.mulf %266, %264 : vector<8x128xf32>
    %268 = arith.mulf %257, %231 : vector<8x128xf32>
    %269 = arith.addf %267, %268 : vector<8x128xf32>
    %270 = arith.index_cast %c6_i32 : i32 to index
    %c0_71 = arith.constant 0 : index
    %c0_72 = arith.constant 0 : index
    %271 = vector.load %arg7[%270, %c0_71, %c0_72] : memref<8x8x128xf32, #tpu.memory_space<vmem>>, vector<1x8x128xf32>
    %272 = vector.shape_cast %271 : vector<1x8x128xf32> to vector<8x128xf32>
    %273 = vector.shape_cast %269 : vector<8x128xf32> to vector<1x8x128xf32>
    tpu.vector_store %arg7[%270, %c0_71, %c0_72], %273 {strides = array<i32>} : memref<8x8x128xf32, #tpu.memory_space<vmem>>, vector<1x8x128xf32>,
    %c7_i32 = arith.constant 7 : i32
    %274 = arith.index_cast %c7_i32 : i32 to index
    %c0_73 = arith.constant 0 : index
    %c0_74 = arith.constant 0 : index
    %275 = vector.load %arg1[%274, %c0_73, %c0_74] : memref<8x8x128xf32, #tpu.memory_space<vmem>>, vector<1x8x128xf32>
    %276 = vector.shape_cast %275 : vector<1x8x128xf32> to vector<8x128xf32>
    %cst_75 = arith.constant dense<0.000000e+00> : vector<8x384xf32>
    %277 = tpu.matmul %276, %3, %cst_75 {dimension_numbers = #tpu.dot_dimension_numbers<[1], [0], [0], [1], [0, 0, 1, 1], [], []>} : vector<8x128xf32>, vector<128x384xf32>, vector<8x384xf32> -> vector<8x384xf32>
    %278 = arith.addf %277, %5 : vector<8x384xf32>
    %cst_76 = arith.constant dense<0.000000e+00> : vector<8x384xf32>
    %279 = tpu.matmul %269, %4, %cst_76 {dimension_numbers = #tpu.dot_dimension_numbers<[1], [0], [0], [1], [0, 0, 1, 1], [], []>} : vector<8x128xf32>, vector<128x384xf32>, vector<8x384xf32> -> vector<8x384xf32>
    %280 = vector.extract_strided_slice %278 {offsets = [0, 0], sizes = [8, 128], strides = [1, 1]} : vector<8x384xf32> to vector<8x128xf32>
    %281 = vector.extract_strided_slice %279 {offsets = [0, 0], sizes = [8, 128], strides = [1, 1]} : vector<8x384xf32> to vector<8x128xf32>
    %282 = arith.addf %280, %281 : vector<8x128xf32>
    %283 = arith.negf %282 : vector<8x128xf32>
    %284 = math.exp %283 : vector<8x128xf32>
    %cst_77 = arith.constant 1.000000e+00 : f32
    %285 = vector.broadcast %cst_77 : f32 to vector<8x128xf32>
    %286 = arith.addf %285, %284 : vector<8x128xf32>
    %287 = arith.divf %285, %286 : vector<8x128xf32>
    %288 = vector.extract_strided_slice %278 {offsets = [0, 128], sizes = [8, 128], strides = [1, 1]} : vector<8x384xf32> to vector<8x128xf32>
    %289 = vector.extract_strided_slice %279 {offsets = [0, 128], sizes = [8, 128], strides = [1, 1]} : vector<8x384xf32> to vector<8x128xf32>
    %290 = arith.addf %288, %289 : vector<8x128xf32>
    %291 = arith.negf %290 : vector<8x128xf32>
    %292 = math.exp %291 : vector<8x128xf32>
    %cst_78 = arith.constant 1.000000e+00 : f32
    %293 = vector.broadcast %cst_78 : f32 to vector<8x128xf32>
    %294 = arith.addf %293, %292 : vector<8x128xf32>
    %295 = arith.divf %293, %294 : vector<8x128xf32>
    %296 = vector.extract_strided_slice %278 {offsets = [0, 256], sizes = [8, 128], strides = [1, 1]} : vector<8x384xf32> to vector<8x128xf32>
    %297 = vector.extract_strided_slice %279 {offsets = [0, 256], sizes = [8, 128], strides = [1, 1]} : vector<8x384xf32> to vector<8x128xf32>
    %298 = vector.broadcast %6 : vector<1x128xf32> to vector<8x128xf32>
    %299 = arith.addf %297, %298 : vector<8x128xf32>
    %300 = arith.mulf %287, %299 : vector<8x128xf32>
    %301 = arith.addf %296, %300 : vector<8x128xf32>
    %302 = math.tanh %301 : vector<8x128xf32>
    %cst_79 = arith.constant 1.000000e+00 : f32
    %303 = vector.broadcast %cst_79 : f32 to vector<8x128xf32>
    %304 = arith.subf %303, %295 : vector<8x128xf32>
    %305 = arith.mulf %304, %302 : vector<8x128xf32>
    %306 = arith.mulf %295, %269 : vector<8x128xf32>
    %307 = arith.addf %305, %306 : vector<8x128xf32>
    %308 = arith.index_cast %c7_i32 : i32 to index
    %c0_80 = arith.constant 0 : index
    %c0_81 = arith.constant 0 : index
    %309 = vector.load %arg7[%308, %c0_80, %c0_81] : memref<8x8x128xf32, #tpu.memory_space<vmem>>, vector<1x8x128xf32>
    %310 = vector.shape_cast %309 : vector<1x8x128xf32> to vector<8x128xf32>
    %311 = vector.shape_cast %307 : vector<8x128xf32> to vector<1x8x128xf32>
    tpu.vector_store %arg7[%308, %c0_80, %c0_81], %311 {strides = array<i32>} : memref<8x8x128xf32, #tpu.memory_space<vmem>>, vector<1x8x128xf32>,
    %c8_i32 = arith.constant 8 : i32
    %c0_82 = arith.constant 0 : index
    %c0_83 = arith.constant 0 : index
    %312 = vector.load %arg8[%c0_82, %c0_83] : memref<8x128xf32, #tpu.memory_space<vmem>>, vector<8x128xf32>
    tpu.vector_store %arg8[%c0_82, %c0_83], %307 {strides = array<i32>} : memref<8x128xf32, #tpu.memory_space<vmem>>, vector<8x128xf32>,
    return
  }
  func.func @transform_0(%arg0: i32) -> (i32, i32, i32) {
    %c0_i32 = arith.constant 0 : i32
    %c0_i32_0 = arith.constant 0 : i32
    %c0_i32_1 = arith.constant 0 : i32
    return %arg0, %c0_i32, %c0_i32_0 : i32, i32, i32
  }
  func.func @transform_1(%arg0: i32) -> (i32, i32) {
    %c0_i32 = arith.constant 0 : i32
    %c0_i32_0 = arith.constant 0 : i32
    %c0_i32_1 = arith.constant 0 : i32
    return %c0_i32, %c0_i32_0 : i32, i32
  }
  func.func @transform_2(%arg0: i32) -> (i32, i32) {
    %c0_i32 = arith.constant 0 : i32
    %c0_i32_0 = arith.constant 0 : i32
    %c0_i32_1 = arith.constant 0 : i32
    return %c0_i32, %c0_i32_0 : i32, i32
  }
  func.func @transform_3(%arg0: i32) -> (i32, i32) {
    %c0_i32 = arith.constant 0 : i32
    %c0_i32_0 = arith.constant 0 : i32
    %c0_i32_1 = arith.constant 0 : i32
    return %c0_i32, %c0_i32_0 : i32, i32
  }
  func.func @transform_4(%arg0: i32) -> (i32, i32) {
    %c0_i32 = arith.constant 0 : i32
    %c0_i32_0 = arith.constant 0 : i32
    %c0_i32_1 = arith.constant 0 : i32
    return %c0_i32, %c0_i32_0 : i32, i32
  }
  func.func @transform_5(%arg0: i32) -> (i32, i32) {
    %c0_i32 = arith.constant 0 : i32
    %c0_i32_0 = arith.constant 0 : i32
    %c0_i32_1 = arith.constant 0 : i32
    return %c0_i32, %c0_i32_0 : i32, i32
  }
  func.func @transform_6(%arg0: i32) -> (i32, i32, i32) {
    %c0_i32 = arith.constant 0 : i32
    %c0_i32_0 = arith.constant 0 : i32
    %c0_i32_1 = arith.constant 0 : i32
    return %arg0, %c0_i32, %c0_i32_0 : i32, i32, i32
  }
}

</mosaic_0001>

<llo_original>
// kernel: tpu_custom_call.1
$region0: #{tpu_custom_call.1}
  #allocation0 [shape = 'u32[]', space=smem, size = 0x4, offset = 0x4, fixed_abs, tag = 'smem constant byte address 0x4 - core index']
  #allocation1 [shape = 'u32[144,128]{1,0:T(1,128)}', space=vmem, size = 0x12000, scoped, tag = 'internal scratch']
  #allocation2 [shape = 'f32[8,128]{1,0:T(8,128)}', space=vmem, size = 0x1000, scoped, tag = 'scratch operand']
  %s0 = inlined_call_operand.hbm [shape: f32[8,8,128], index: 0, kind: input, shape index: {}]
  %s1 = inlined_call_operand.hbm [shape: f32[8,128], index: 1, kind: input, shape index: {}]
  %s2 = inlined_call_operand.hbm [shape: f32[8,384], index: 2, kind: input, shape index: {}]
  %s3 = inlined_call_operand.hbm [shape: f32[128,384], index: 3, kind: input, shape index: {}]
  %s4 = inlined_call_operand.hbm [shape: f32[128,384], index: 4, kind: input, shape index: {}]
  %s5 = inlined_call_operand.vmem [shape: f32[1,128], index: 5, kind: input, shape index: {}]
  %s6 = inlined_call_operand.hbm [shape: f32[8,8,128], index: 6, kind: output, shape index: {}]
  %s7 = sld [smem:[#allocation0]]
  $region58: #{tpu_custom_call.1} parent=0
    _
  %s9 = ssub.s32 1, %s7
  %s10 = scalar_select 0, %s9, %s7
  $region1: #{tpu_custom_call.1} parent=0
    #allocation3 [shape = 'u8[32768]{0}', space=vmem, size = 0x8000, scoped, tag = 'input window, operand 0, single buffered']
    #allocation4 [shape = 's32[1]{0}', space=sflag, size = 0x4, scoped, tag = 'scoped memory for tpu_custom_call.1']
    #allocation5 [shape = 's32[1]{0}', space=sflag, size = 0x4, scoped, tag = 'scoped memory for tpu_custom_call.1']
    #allocation6 [shape = 'u8[4096]{0}', space=vmem, size = 0x1000, scoped, tag = 'input window, operand 1, single buffered']
    #allocation7 [shape = 's32[1]{0}', space=sflag, size = 0x4, scoped, tag = 'scoped memory for tpu_custom_call.1']
    #allocation8 [shape = 'u8[12288]{0}', space=vmem, size = 0x3000, scoped, tag = 'input window, operand 2, single buffered']
    #allocation9 [shape = 'u8[196608]{0}', space=vmem, size = 0x30000, scoped, tag = 'input window, operand 3, single buffered']
    #allocation10 [shape = 's32[1]{0}', space=sflag, size = 0x4, scoped, tag = 'scoped memory for tpu_custom_call.1']
    #allocation11 [shape = 'u8[196608]{0}', space=vmem, size = 0x30000, scoped, tag = 'input window, operand 4, single buffered']
    #allocation12 [shape = 'u8[32768]{0}', space=vmem, size = 0x8000, scoped, tag = 'output window, operand 0, single buffered']
    %11 = vsyncpa [#allocation4], 0
    %12 = vsyncpa [#allocation7], 0
    %13 = vsyncpa [#allocation10], 0
    %14 = vsyncpa [#allocation5], 0
    // Predicated region
    $region2: #{tpu_custom_call.1} parent=1 // pred_check
      _
    $region3: #{tpu_custom_call.1} parent=1 // pred_check_branch
      %16 = sbr.rel (0) target = $region5
    $region4: #{tpu_custom_call.1} parent=1 // pred_region
      %s18 = ssub.s32 1024, 1024
      %19 = vsyncadd [#allocation4], %s18
      %s20 = sshll.u32 [#allocation3], 4
      %s21 = int_to_ptr.vmem [resolvable:$true] %s20
      %26 = dma.hbm_to_vmem [thread:$0]  %s0, 1024, %s21, [#allocation4], 128, 128, 8
    $region5: #{tpu_custom_call.1} parent=1 // pred_fallthru
      _
    // Predicated region
    $region6: #{tpu_custom_call.1} parent=1 // pred_check
      _
    $region7: #{tpu_custom_call.1} parent=1 // pred_check_branch
      %28 = sbr.rel (0) target = $region9
    $region8: #{tpu_custom_call.1} parent=1 // pred_region
      %s30 = ssub.s32 128, 128
      %31 = vsyncadd [#allocation7], %s30
      %s33 = sshll.u32 [#allocation6], 4
      %s34 = int_to_ptr.vmem [resolvable:$true] %s33
      %36 = dma.hbm_to_vmem [thread:$0]  %s1, 128, %s34, [#allocation7]
    $region9: #{tpu_custom_call.1} parent=1 // pred_fallthru
      _
    // Predicated region
    $region10: #{tpu_custom_call.1} parent=1 // pred_check
      _
    $region11: #{tpu_custom_call.1} parent=1 // pred_check_branch
      %38 = sbr.rel (0) target = $region13
    $region12: #{tpu_custom_call.1} parent=1 // pred_region
      %s40 = ssub.s32 384, 384
      %41 = vsyncadd [#allocation7], %s40
      %s43 = sshll.u32 [#allocation8], 4
      %s44 = int_to_ptr.vmem [resolvable:$true] %s43
      %46 = dma.hbm_to_vmem [thread:$0]  %s2, 384, %s44, [#allocation7]
    $region13: #{tpu_custom_call.1} parent=1 // pred_fallthru
      _
    // Predicated region
    $region14: #{tpu_custom_call.1} parent=1 // pred_check
      _
    $region15: #{tpu_custom_call.1} parent=1 // pred_check_branch
      %48 = sbr.rel (0) target = $region17
    $region16: #{tpu_custom_call.1} parent=1 // pred_region
      %s50 = ssub.s32 6144, 6144
      %51 = vsyncadd [#allocation10], %s50
      %s52 = sshll.u32 [#allocation9], 4
      %s53 = int_to_ptr.vmem [resolvable:$true] %s52
      %58 = dma.hbm_to_vmem [thread:$0]  %s3, 6144, %s53, [#allocation10], 384, 384, 24
    $region17: #{tpu_custom_call.1} parent=1 // pred_fallthru
      _
    // Predicated region
    $region18: #{tpu_custom_call.1} parent=1 // pred_check
      _
    $region19: #{tpu_custom_call.1} parent=1 // pred_check_branch
      %60 = sbr.rel (0) target = $region21
    $region20: #{tpu_custom_call.1} parent=1 // pred_region
      %s62 = ssub.s32 6144, 6144
      %63 = vsyncadd [#allocation10], %s62
      %s64 = sshll.u32 [#allocation11], 4
      %s65 = int_to_ptr.vmem [resolvable:$true] %s64
      %70 = dma.hbm_to_vmem [thread:$0]  %s4, 6144, %s65, [#allocation10], 384, 384, 24
    $region21: #{tpu_custom_call.1} parent=1 // pred_fallthru
      _
    // Predicated region
    $region22: #{tpu_custom_call.1} parent=1 // pred_check
      _
    $region23: #{tpu_custom_call.1} parent=1 // pred_check_branch
      %72 = sbr.rel (0) target = $region25
    $region24: #{tpu_custom_call.1} parent=1 // pred_region
      _
    $region25: #{tpu_custom_call.1} parent=1 // pred_fallthru
      _
    // Predicated region
    $region26: #{tpu_custom_call.1} parent=1 // pred_check
      _
    $region27: #{tpu_custom_call.1} parent=1 // pred_check_branch
      %74 = sbr.rel (0) target = $region29
    $region28: #{tpu_custom_call.1} parent=1 // pred_region
      %75 = dma.done [#allocation4], 1024
    $region29: #{tpu_custom_call.1} parent=1 // pred_fallthru
      _
    // Predicated region
    $region30: #{tpu_custom_call.1} parent=1 // pred_check
      _
    $region31: #{tpu_custom_call.1} parent=1 // pred_check_branch
      %77 = sbr.rel (0) target = $region33
    $region32: #{tpu_custom_call.1} parent=1 // pred_region
      %78 = dma.done [#allocation7], 128
    $region33: #{tpu_custom_call.1} parent=1 // pred_fallthru
      _
    // Predicated region
    $region34: #{tpu_custom_call.1} parent=1 // pred_check
      _
    $region35: #{tpu_custom_call.1} parent=1 // pred_check_branch
      %80 = sbr.rel (0) target = $region37
    $region36: #{tpu_custom_call.1} parent=1 // pred_region
      %81 = dma.done [#allocation7], 384
    $region37: #{tpu_custom_call.1} parent=1 // pred_fallthru
      _
    // Predicated region
    $region38: #{tpu_custom_call.1} parent=1 // pred_check
      _
    $region39: #{tpu_custom_call.1} parent=1 // pred_check_branch
      %83 = sbr.rel (0) target = $region41
    $region40: #{tpu_custom_call.1} parent=1 // pred_region
      %84 = dma.done [#allocation10], 6144
    $region41: #{tpu_custom_call.1} parent=1 // pred_fallthru
      _
    // Predicated region
    $region42: #{tpu_custom_call.1} parent=1 // pred_check
      _
    $region43: #{tpu_custom_call.1} parent=1 // pred_check_branch
      %86 = sbr.rel (0) target = $region45
    $region44: #{tpu_custom_call.1} parent=1 // pred_region
      %87 = dma.done [#allocation10], 6144
    $region45: #{tpu_custom_call.1} parent=1 // pred_fallthru
      _
    %p88 = scmp.eq.s32.totalorder 0, 0
    // Predicated region
    $region46: #{tpu_custom_call.1} parent=1 // pred_check
      %p89 = pneg %p88
    $region47: #{tpu_custom_call.1} parent=1 // pred_check_branch
      %91 = sbr.rel (%p89) target = $region49
    $region48: #{tpu_custom_call.1} parent=1 // pred_region
      %v92 = vld [vmem:[#allocation6] sm:$0xff]
      %93 = vst [vmem:[#allocation2] sm:$0xff] %v92
    $region49: #{tpu_custom_call.1} parent=1 // pred_fallthru
      _
    %v94 = vld [vmem:[#allocation9] sm:$0xff]
    %v95 = vld [vmem:[#allocation9 + $0x8] sm:$0xff]
    %v96 = vld [vmem:[#allocation9 + $0x10] sm:$0xff]
    %v97 = vld [vmem:[#allocation9 + $0x18] sm:$0xff]
    %v98 = vld [vmem:[#allocation9 + $0x20] sm:$0xff]
    %v99 = vld [vmem:[#allocation9 + $0x28] sm:$0xff]
    %v100 = vld [vmem:[#allocation9 + $0x30] sm:$0xff]
    %v101 = vld [vmem:[#allocation9 + $0x38] sm:$0xff]
    %v102 = vld [vmem:[#allocation9 + $0x40] sm:$0xff]
    %v103 = vld [vmem:[#allocation9 + $0x48] sm:$0xff]
    %v104 = vld [vmem:[#allocation9 + $0x50] sm:$0xff]
    %v105 = vld [vmem:[#allocation9 + $0x58] sm:$0xff]
    %v106 = vld [vmem:[#allocation9 + $0x60] sm:$0xff]
    %v107 = vld [vmem:[#allocation9 + $0x68] sm:$0xff]
    %v108 = vld [vmem:[#allocation9 + $0x70] sm:$0xff]
    %v109 = vld [vmem:[#allocation9 + $0x78] sm:$0xff]
    %v110 = vld [vmem:[#allocation9 + $0x80] sm:$0xff]
    %v111 = vld [vmem:[#allocation9 + $0x88] sm:$0xff]
    %v112 = vld [vmem:[#allocation9 + $0x90] sm:$0xff]
    %v113 = vld [vmem:[#allocation9 + $0x98] sm:$0xff]
    %v114 = vld [vmem:[#allocation9 + $0xa0] sm:$0xff]
    %v115 = vld [vmem:[#allocation9 + $0xa8] sm:$0xff]
    %v116 = vld [vmem:[#allocation9 + $0xb0] sm:$0xff]
    %v117 = vld [vmem:[#allocation9 + $0xb8] sm:$0xff]
    %v118 = vld [vmem:[#allocation9 + $0xc0] sm:$0xff]
    %v119 = vld [vmem:[#allocation9 + $0xc8] sm:$0xff]
    %v120 = vld [vmem:[#allocation9 + $0xd0] sm:$0xff]
    %v121 = vld [vmem:[#allocation9 + $0xd8] sm:$0xff]
    %v122 = vld [vmem:[#allocation9 + $0xe0] sm:$0xff]
    %v123 = vld [vmem:[#allocation9 + $0xe8] sm:$0xff]
    %v124 = vld [vmem:[#allocation9 + $0xf0] sm:$0xff]
    %v125 = vld [vmem:[#allocation9 + $0xf8] sm:$0xff]
    %v126 = vld [vmem:[#allocation9 + $0x100] sm:$0xff]
    %v127 = vld [vmem:[#allocation9 + $0x108] sm:$0xff]
    %v128 = vld [vmem:[#allocation9 + $0x110] sm:$0xff]
    %v129 = vld [vmem:[#allocation9 + $0x118] sm:$0xff]
    %v130 = vld [vmem:[#allocation9 + $0x120] sm:$0xff]
    %v131 = vld [vmem:[#allocation9 + $0x128] sm:$0xff]
    %v132 = vld [vmem:[#allocation9 + $0x130] sm:$0xff]
    %v133 = vld [vmem:[#allocation9 + $0x138] sm:$0xff]
    %v134 = vld [vmem:[#allocation9 + $0x140] sm:$0xff]
    %v135 = vld [vmem:[#allocation9 + $0x148] sm:$0xff]
    %v136 = vld [vmem:[#allocation9 + $0x150] sm:$0xff]
    %v137 = vld [vmem:[#allocation9 + $0x158] sm:$0xff]
    %v138 = vld [vmem:[#allocation9 + $0x160] sm:$0xff]
    %v139 = vld [vmem:[#allocation9 + $0x168] sm:$0xff]
    %v140 = vld [vmem:[#allocation9 + $0x170] sm:$0xff]
    %v141 = vld [vmem:[#allocation9 + $0x178] sm:$0xff]
    %v142 = vld [vmem:[#allocation11] sm:$0xff]
    %v143 = vld [vmem:[#allocation11 + $0x8] sm:$0xff]
    %v144 = vld [vmem:[#allocation11 + $0x10] sm:$0xff]
    %v145 = vld [vmem:[#allocation11 + $0x18] sm:$0xff]
    %v146 = vld [vmem:[#allocation11 + $0x20] sm:$0xff]
    %v147 = vld [vmem:[#allocation11 + $0x28] sm:$0xff]
    %v148 = vld [vmem:[#allocation11 + $0x30] sm:$0xff]
    %v149 = vld [vmem:[#allocation11 + $0x38] sm:$0xff]
    %v150 = vld [vmem:[#allocation11 + $0x40] sm:$0xff]
    %v151 = vld [vmem:[#allocation11 + $0x48] sm:$0xff]
    %v152 = vld [vmem:[#allocation11 + $0x50] sm:$0xff]
    %v153 = vld [vmem:[#allocation11 + $0x58] sm:$0xff]
    %v154 = vld [vmem:[#allocation11 + $0x60] sm:$0xff]
    %v155 = vld [vmem:[#allocation11 + $0x68] sm:$0xff]
    %v156 = vld [vmem:[#allocation11 + $0x70] sm:$0xff]
    %v157 = vld [vmem:[#allocation11 + $0x78] sm:$0xff]
    %v158 = vld [vmem:[#allocation11 + $0x80] sm:$0xff]
    %v159 = vld [vmem:[#allocation11 + $0x88] sm:$0xff]
    %v160 = vld [vmem:[#allocation11 + $0x90] sm:$0xff]
    %v161 = vld [vmem:[#allocation11 + $0x98] sm:$0xff]
    %v162 = vld [vmem:[#allocation11 + $0xa0] sm:$0xff]
    %v163 = vld [vmem:[#allocation11 + $0xa8] sm:$0xff]
    %v164 = vld [vmem:[#allocation11 + $0xb0] sm:$0xff]
    %v165 = vld [vmem:[#allocation11 + $0xb8] sm:$0xff]
    %v166 = vld [vmem:[#allocation11 + $0xc0] sm:$0xff]
    %v167 = vld [vmem:[#allocation11 + $0xc8] sm:$0xff]
    %v168 = vld [vmem:[#allocation11 + $0xd0] sm:$0xff]
    %v169 = vld [vmem:[#allocation11 + $0xd8] sm:$0xff]
    %v170 = vld [vmem:[#allocation11 + $0xe0] sm:$0xff]
    %v171 = vld [vmem:[#allocation11 + $0xe8] sm:$0xff]
    %v172 = vld [vmem:[#allocation11 + $0xf0] sm:$0xff]
    %v173 = vld [vmem:[#allocation11 + $0xf8] sm:$0xff]
    %v174 = vld [vmem:[#allocation11 + $0x100] sm:$0xff]
    %v175 = vld [vmem:[#allocation11 + $0x108] sm:$0xff]
    %v176 = vld [vmem:[#allocation11 + $0x110] sm:$0xff]
    %v177 = vld [vmem:[#allocation11 + $0x118] sm:$0xff]
    %v178 = vld [vmem:[#allocation11 + $0x120] sm:$0xff]
    %v179 = vld [vmem:[#allocation11 + $0x128] sm:$0xff]
    %v180 = vld [vmem:[#allocation11 + $0x130] sm:$0xff]
    %v181 = vld [vmem:[#allocation11 + $0x138] sm:$0xff]
    %v182 = vld [vmem:[#allocation11 + $0x140] sm:$0xff]
    %v183 = vld [vmem:[#allocation11 + $0x148] sm:$0xff]
    %v184 = vld [vmem:[#allocation11 + $0x150] sm:$0xff]
    %v185 = vld [vmem:[#allocation11 + $0x158] sm:$0xff]
    %v186 = vld [vmem:[#allocation11 + $0x160] sm:$0xff]
    %v187 = vld [vmem:[#allocation11 + $0x168] sm:$0xff]
    %v188 = vld [vmem:[#allocation11 + $0x170] sm:$0xff]
    %v189 = vld [vmem:[#allocation11 + $0x178] sm:$0xff]
    %v190 = vld [vmem:[#allocation8] sm:$0xff]
    %v191 = vld [vmem:[#allocation8 + $0x8] sm:$0xff]
    %v192 = vld [vmem:[#allocation8 + $0x10] sm:$0xff]
    %v193 = vld [vmem:[%s5] sm:$0x1]
    %v194 = vld [vmem:[#allocation2] sm:$0xff]
    %v195 = vld [vmem:[#allocation3] sm:$0xff]
    %196 = vmatprep.subr.mxu0 %v95
    %197 = vmatpush1.msra.mxu0 %v94
    %198 = vmatprep.subr.mxu0 %v98
    %199 = vmatpush1.msra.mxu0 %v97
    %200 = vmatprep.subr.mxu0 %v101
    %201 = vmatpush1.msra.mxu0 %v100
    %202 = vmatprep.subr.mxu0 %v104
    %203 = vmatpush1.msra.mxu0 %v103
    %204 = vmatprep.subr.mxu0 %v107
    %205 = vmatpush1.msra.mxu0 %v106
    %206 = vmatprep.subr.mxu0 %v110
    %207 = vmatpush1.msra.mxu0 %v109
    %208 = vmatprep.subr.mxu0 %v113
    %209 = vmatpush1.msra.mxu0 %v112
    %210 = vmatprep.subr.mxu0 %v116
    %211 = vmatpush1.msra.mxu0 %v115
    %212 = vmatprep.subr.mxu0 %v119
    %213 = vmatpush1.msra.mxu0 %v118
    %214 = vmatprep.subr.mxu0 %v122
    %215 = vmatpush1.msra.mxu0 %v121
    %216 = vmatprep.subr.mxu0 %v125
    %217 = vmatpush1.msra.mxu0 %v124
    %218 = vmatprep.subr.mxu0 %v128
    %219 = vmatpush1.msra.mxu0 %v127
    %220 = vmatprep.subr.mxu0 %v131
    %221 = vmatpush1.msra.mxu0 %v130
    %222 = vmatprep.subr.mxu0 %v134
    %223 = vmatpush1.msra.mxu0 %v133
    %224 = vmatprep.subr.mxu0 %v137
    %225 = vmatpush1.msra.mxu0 %v136
    %226 = vmatprep.subr.mxu0 %v140
    %227 = vmatpush1.msra.mxu0 %v139
    %228 = vmatprep.subr.mxu0 0.0
    %229 = vmatpush1.msra.mxu0 0.0
    %230 = vmatprep.subr.mxu0 0.0
    %231 = vmatpush1.msra.mxu0 0.0
    %232 = vmatprep.subr.mxu0 0.0
    %233 = vmatpush1.msra.mxu0 0.0
    %234 = vmatprep.subr.mxu0 0.0
    %235 = vmatpush1.msra.mxu0 0.0
    %236 = vmatprep.subr.mxu0 0.0
    %237 = vmatpush1.msra.mxu0 0.0
    %238 = vmatprep.subr.mxu0 0.0
    %239 = vmatpush1.msra.mxu0 0.0
    %240 = vmatprep.subr.mxu0 0.0
    %241 = vmatpush1.msra.mxu0 0.0
    %242 = vmatprep.subr.mxu0 0.0
    %243 = vmatpush1.msra.mxu0 0.0
    %244 = vmatprep.subr.mxu0 0.0
    %245 = vmatpush1.msra.mxu0 0.0
    %246 = vmatprep.subr.mxu0 0.0
    %247 = vmatpush1.msra.mxu0 0.0
    %248 = vmatprep.subr.mxu0 0.0
    %249 = vmatpush1.msra.mxu0 0.0
    %250 = vmatprep.subr.mxu0 0.0
    %251 = vmatpush1.msra.mxu0 0.0
    %252 = vmatprep.subr.mxu0 0.0
    %253 = vmatpush1.msra.mxu0 0.0
    %254 = vmatprep.subr.mxu0 0.0
    %255 = vmatpush1.msra.mxu0 0.0
    %256 = vmatprep.subr.mxu0 0.0
    %257 = vmatpush1.msra.mxu0 0.0
    %258 = vmatprep.subr.mxu0 0.0
    %259 = vmatpush1.msra.mxu0 0.0
    %260 = vmatprep.mubr.f32.mxu0 0.0
    %261 = vmatmul.mubr.f32.gmra.mrb[0].mxu0 %v195
    %v262 = vpop.f32.mrb[0].mxu0
    %v263 = vadd.f32 %v190, %v262
    %v264 = vpop.f32.mrb[0].mxu0
    %v265 = vadd.f32 %v191, %v264
    %266 = vdwg.mxu0
    %267 = vmatprep.subr.mxu0 0.0
    %268 = vmatpush1.msra.mxu0 %v96
    %269 = vmatprep.subr.mxu0 0.0
    %270 = vmatpush1.msra.mxu0 %v99
    %271 = vmatprep.subr.mxu0 0.0
    %272 = vmatpush1.msra.mxu0 %v102
    %273 = vmatprep.subr.mxu0 0.0
    %274 = vmatpush1.msra.mxu0 %v105
    %275 = vmatprep.subr.mxu0 0.0
    %276 = vmatpush1.msra.mxu0 %v108
    %277 = vmatprep.subr.mxu0 0.0
    %278 = vmatpush1.msra.mxu0 %v111
    %279 = vmatprep.subr.mxu0 0.0
    %280 = vmatpush1.msra.mxu0 %v114
    %281 = vmatprep.subr.mxu0 0.0
    %282 = vmatpush1.msra.mxu0 %v117
    %283 = vmatprep.subr.mxu0 0.0
    %284 = vmatpush1.msra.mxu0 %v120
    %285 = vmatprep.subr.mxu0 0.0
    %286 = vmatpush1.msra.mxu0 %v123
    %287 = vmatprep.subr.mxu0 0.0
    %288 = vmatpush1.msra.mxu0 %v126
    %289 = vmatprep.subr.mxu0 0.0
    %290 = vmatpush1.msra.mxu0 %v129
    %291 = vmatprep.subr.mxu0 0.0
    %292 = vmatpush1.msra.mxu0 %v132
    %293 = vmatprep.subr.mxu0 0.0
    %294 = vmatpush1.msra.mxu0 %v135
    %295 = vmatprep.subr.mxu0 0.0
    %296 = vmatpush1.msra.mxu0 %v138
    %297 = vmatprep.subr.mxu0 0.0
    %298 = vmatpush1.msra.mxu0 %v141
    %299 = vmatprep.subr.mxu0 0.0
    %300 = vmatpush1.msra.mxu0 0.0
    %301 = vmatprep.subr.mxu0 0.0
    %302 = vmatpush1.msra.mxu0 0.0
    %303 = vmatprep.subr.mxu0 0.0
    %304 = vmatpush1.msra.mxu0 0.0
    %305 = vmatprep.subr.mxu0 0.0
    %306 = vmatpush1.msra.mxu0 0.0
    %307 = vmatprep.subr.mxu0 0.0
    %308 = vmatpush1.msra.mxu0 0.0
    %309 = vmatprep.subr.mxu0 0.0
    %310 = vmatpush1.msra.mxu0 0.0
    %311 = vmatprep.subr.mxu0 0.0
    %312 = vmatpush1.msra.mxu0 0.0
    %313 = vmatprep.subr.mxu0 0.0
    %314 = vmatpush1.msra.mxu0 0.0
    %315 = vmatprep.subr.mxu0 0.0
    %316 = vmatpush1.msra.mxu0 0.0
    %317 = vmatprep.subr.mxu0 0.0
    %318 = vmatpush1.msra.mxu0 0.0
    %319 = vmatprep.subr.mxu0 0.0
    %320 = vmatpush1.msra.mxu0 0.0
    %321 = vmatprep.subr.mxu0 0.0
    %322 = vmatpush1.msra.mxu0 0.0
    %323 = vmatprep.subr.mxu0 0.0
    %324 = vmatpush1.msra.mxu0 0.0
    %325 = vmatprep.subr.mxu0 0.0
    %326 = vmatpush1.msra.mxu0 0.0
    %327 = vmatprep.subr.mxu0 0.0
    %328 = vmatpush1.msra.mxu0 0.0
    %329 = vmatprep.subr.mxu0 0.0
    %330 = vmatpush1.msra.mxu0 0.0
    %331 = vmatprep.mubr.f32.mxu0 0.0
    %332 = vmatmul.mubr.f32.gmra.mrb[0].mxu0 %v195
    %v333 = vpop.f32.mrb[0].mxu0
    %v334 = vadd.f32 %v192, %v333
    %v335 = vpop.f32.mrb[0].mxu0
    %336 = vdwg.mxu0
    %337 = vmatprep.subr.mxu0 %v143
    %338 = vmatpush1.msra.mxu0 %v142
    %339 = vmatprep.subr.mxu0 %v146
    %340 = vmatpush1.msra.mxu0 %v145
    %341 = vmatprep.subr.mxu0 %v149
    %342 = vmatpush1.msra.mxu0 %v148
    %343 = vmatprep.subr.mxu0 %v152
    %344 = vmatpush1.msra.mxu0 %v151
    %345 = vmatprep.subr.mxu0 %v155
    %346 = vmatpush1.msra.mxu0 %v154
    %347 = vmatprep.subr.mxu0 %v158
    %348 = vmatpush1.msra.mxu0 %v157
    %349 = vmatprep.subr.mxu0 %v161
    %350 = vmatpush1.msra.mxu0 %v160
    %351 = vmatprep.subr.mxu0 %v164
    %352 = vmatpush1.msra.mxu0 %v163
    %353 = vmatprep.subr.mxu0 %v167
    %354 = vmatpush1.msra.mxu0 %v166
    %355 = vmatprep.subr.mxu0 %v170
    %356 = vmatpush1.msra.mxu0 %v169
    %357 = vmatprep.subr.mxu0 %v173
    %358 = vmatpush1.msra.mxu0 %v172
    %359 = vmatprep.subr.mxu0 %v176
    %360 = vmatpush1.msra.mxu0 %v175
    %361 = vmatprep.subr.mxu0 %v179
    %362 = vmatpush1.msra.mxu0 %v178
    %363 = vmatprep.subr.mxu0 %v182
    %364 = vmatpush1.msra.mxu0 %v181
    %365 = vmatprep.subr.mxu0 %v185
    %366 = vmatpush1.msra.mxu0 %v184
    %367 = vmatprep.subr.mxu0 %v188
    %368 = vmatpush1.msra.mxu0 %v187
    %369 = vmatprep.subr.mxu0 0.0
    %370 = vmatpush1.msra.mxu0 0.0
    %371 = vmatprep.subr.mxu0 0.0
    %372 = vmatpush1.msra.mxu0 0.0
    %373 = vmatprep.subr.mxu0 0.0
    %374 = vmatpush1.msra.mxu0 0.0
    %375 = vmatprep.subr.mxu0 0.0
    %376 = vmatpush1.msra.mxu0 0.0
    %377 = vmatprep.subr.mxu0 0.0
    %378 = vmatpush1.msra.mxu0 0.0
    %379 = vmatprep.subr.mxu0 0.0
    %380 = vmatpush1.msra.mxu0 0.0
    %381 = vmatprep.subr.mxu0 0.0
    %382 = vmatpush1.msra.mxu0 0.0
    %383 = vmatprep.subr.mxu0 0.0
    %384 = vmatpush1.msra.mxu0 0.0
    %385 = vmatprep.subr.mxu0 0.0
    %386 = vmatpush1.msra.mxu0 0.0
    %387 = vmatprep.subr.mxu0 0.0
    %388 = vmatpush1.msra.mxu0 0.0
    %389 = vmatprep.subr.mxu0 0.0
    %390 = vmatpush1.msra.mxu0 0.0
    %391 = vmatprep.subr.mxu0 0.0
    %392 = vmatpush1.msra.mxu0 0.0
    %393 = vmatprep.subr.mxu0 0.0
    %394 = vmatpush1.msra.mxu0 0.0
    %395 = vmatprep.subr.mxu0 0.0
    %396 = vmatpush1.msra.mxu0 0.0
    %397 = vmatprep.subr.mxu0 0.0
    %398 = vmatpush1.msra.mxu0 0.0
    %399 = vmatprep.subr.mxu0 0.0
    %400 = vmatpush1.msra.mxu0 0.0
    %401 = vmatprep.mubr.f32.mxu0 0.0
    %402 = vmatmul.mubr.f32.gmra.mrb[0].mxu0 %v194
    %v403 = vpop.f32.mrb[0].mxu0
    %v404 = vadd.f32 0.0, %v403
    %v405 = vpop.f32.mrb[0].mxu0
    %v406 = vadd.f32 0.0, %v405
    %407 = vdwg.mxu0
    %408 = vmatprep.subr.mxu0 0.0
    %409 = vmatpush1.msra.mxu0 %v144
    %410 = vmatprep.subr.mxu0 0.0
    %411 = vmatpush1.msra.mxu0 %v147
    %412 = vmatprep.subr.mxu0 0.0
    %413 = vmatpush1.msra.mxu0 %v150
    %414 = vmatprep.subr.mxu0 0.0
    %415 = vmatpush1.msra.mxu0 %v153
    %416 = vmatprep.subr.mxu0 0.0
    %417 = vmatpush1.msra.mxu0 %v156
    %418 = vmatprep.subr.mxu0 0.0
    %419 = vmatpush1.msra.mxu0 %v159
    %420 = vmatprep.subr.mxu0 0.0
    %421 = vmatpush1.msra.mxu0 %v162
    %422 = vmatprep.subr.mxu0 0.0
    %423 = vmatpush1.msra.mxu0 %v165
    %424 = vmatprep.subr.mxu0 0.0
    %425 = vmatpush1.msra.mxu0 %v168
    %426 = vmatprep.subr.mxu0 0.0
    %427 = vmatpush1.msra.mxu0 %v171
    %428 = vmatprep.subr.mxu0 0.0
    %429 = vmatpush1.msra.mxu0 %v174
    %430 = vmatprep.subr.mxu0 0.0
    %431 = vmatpush1.msra.mxu0 %v177
    %432 = vmatprep.subr.mxu0 0.0
    %433 = vmatpush1.msra.mxu0 %v180
    %434 = vmatprep.subr.mxu0 0.0
    %435 = vmatpush1.msra.mxu0 %v183
    %436 = vmatprep.subr.mxu0 0.0
    %437 = vmatpush1.msra.mxu0 %v186
    %438 = vmatprep.subr.mxu0 0.0
    %439 = vmatpush1.msra.mxu0 %v189
    %440 = vmatprep.subr.mxu0 0.0
    %441 = vmatpush1.msra.mxu0 0.0
    %442 = vmatprep.subr.mxu0 0.0
    %443 = vmatpush1.msra.mxu0 0.0
    %444 = vmatprep.subr.mxu0 0.0
    %445 = vmatpush1.msra.mxu0 0.0
    %446 = vmatprep.subr.mxu0 0.0
    %447 = vmatpush1.msra.mxu0 0.0
    %448 = vmatprep.subr.mxu0 0.0
    %449 = vmatpush1.msra.mxu0 0.0
    %450 = vmatprep.subr.mxu0 0.0
    %451 = vmatpush1.msra.mxu0 0.0
    %452 = vmatprep.subr.mxu0 0.0
    %453 = vmatpush1.msra.mxu0 0.0
    %454 = vmatprep.subr.mxu0 0.0
    %455 = vmatpush1.msra.mxu0 0.0
    %456 = vmatprep.subr.mxu0 0.0
    %457 = vmatpush1.msra.mxu0 0.0
    %458 = vmatprep.subr.mxu0 0.0
    %459 = vmatpush1.msra.mxu0 0.0
    %460 = vmatprep.subr.mxu0 0.0
    %461 = vmatpush1.msra.mxu0 0.0
    %462 = vmatprep.subr.mxu0 0.0
    %463 = vmatpush1.msra.mxu0 0.0
    %464 = vmatprep.subr.mxu0 0.0
    %465 = vmatpush1.msra.mxu0 0.0
    %466 = vmatprep.subr.mxu0 0.0
    %467 = vmatpush1.msra.mxu0 0.0
    %468 = vmatprep.subr.mxu0 0.0
    %469 = vmatpush1.msra.mxu0 0.0
    %470 = vmatprep.subr.mxu0 0.0
    %471 = vmatpush1.msra.mxu0 0.0
    %472 = vmatprep.mubr.f32.mxu0 0.0
    %473 = vmatmul.mubr.f32.gmra.mrb[0].mxu0 %v194
    %v474 = vpop.f32.mrb[0].mxu0
    %v475 = vadd.f32 0.0, %v474
    %v476 = vpop.f32.mrb[0].mxu0
    %477 = vdwg.mxu0
    %v478 = vadd.f32 %v263, %v404
    %v479 = vxor.u32 %v478, 2147483648
    %v480 = vmul.f32 %v479, 1.442695
    %v481 = vpow.pop %v480
    %v482 = vadd.f32 %v481, 1.0
    %v483 = vrcp.pop %v482
    %v484 = vmul.f32 1.0, %v483
    %v485 = vadd.f32 %v265, %v406
    %v486 = vxor.u32 %v485, 2147483648
    %v487 = vmul.f32 %v486, 1.442695
    %v488 = vpow.pop %v487
    %v489 = vadd.f32 %v488, 1.0
    %v490 = vrcp.pop %v489
    %v491 = vmul.f32 1.0, %v490
    %v493 = vlaneseq
    %v494 = vshrl.u32 %v493, 7
    %v495 = vsub.s32 0, %v494
    %v496 = vrot.slane %v193, %v495
    %v498 = vadd.f32 %v475, %v496
    %v499 = vmul.f32 %v484, %v498
    %v500 = vadd.f32 %v334, %v499
    %v501 = vtanh.pop %v500
    %v502 = vsub.f32 1.0, %v491
    %v503 = vmul.f32 %v502, %v501
    %v504 = vmul.f32 %v491, %v194
    %v505 = vadd.f32 %v503, %v504
    %506 = vst [vmem:[#allocation12] sm:$0xff] %v505
    %s507 = scalar_lea.vmem [#allocation3], 8
    %v508 = vld [vmem:[%s507] sm:$0xff]
    %509 = vmatprep.subr.mxu0 %v95
    %510 = vmatpush1.msra.mxu0 %v94
    %511 = vmatprep.subr.mxu0 %v98
    %512 = vmatpush1.msra.mxu0 %v97
    %513 = vmatprep.subr.mxu0 %v101
    %514 = vmatpush1.msra.mxu0 %v100
    %515 = vmatprep.subr.mxu0 %v104
    %516 = vmatpush1.msra.mxu0 %v103
    %517 = vmatprep.subr.mxu0 %v107
    %518 = vmatpush1.msra.mxu0 %v106
    %519 = vmatprep.subr.mxu0 %v110
    %520 = vmatpush1.msra.mxu0 %v109
    %521 = vmatprep.subr.mxu0 %v113
    %522 = vmatpush1.msra.mxu0 %v112
    %523 = vmatprep.subr.mxu0 %v116
    %524 = vmatpush1.msra.mxu0 %v115
    %525 = vmatprep.subr.mxu0 %v119
    %526 = vmatpush1.msra.mxu0 %v118
    %527 = vmatprep.subr.mxu0 %v122
    %528 = vmatpush1.msra.mxu0 %v121
    %529 = vmatprep.subr.mxu0 %v125
    %530 = vmatpush1.msra.mxu0 %v124
    %531 = vmatprep.subr.mxu0 %v128
    %532 = vmatpush1.msra.mxu0 %v127
    %533 = vmatprep.subr.mxu0 %v131
    %534 = vmatpush1.msra.mxu0 %v130
    %535 = vmatprep.subr.mxu0 %v134
    %536 = vmatpush1.msra.mxu0 %v133
    %537 = vmatprep.subr.mxu0 %v137
    %538 = vmatpush1.msra.mxu0 %v136
    %539 = vmatprep.subr.mxu0 %v140
    %540 = vmatpush1.msra.mxu0 %v139
    %541 = vmatprep.subr.mxu0 0.0
    %542 = vmatpush1.msra.mxu0 0.0
    %543 = vmatprep.subr.mxu0 0.0
    %544 = vmatpush1.msra.mxu0 0.0
    %545 = vmatprep.subr.mxu0 0.0
    %546 = vmatpush1.msra.mxu0 0.0
    %547 = vmatprep.subr.mxu0 0.0
    %548 = vmatpush1.msra.mxu0 0.0
    %549 = vmatprep.subr.mxu0 0.0
    %550 = vmatpush1.msra.mxu0 0.0
    %551 = vmatprep.subr.mxu0 0.0
    %552 = vmatpush1.msra.mxu0 0.0
    %553 = vmatprep.subr.mxu0 0.0
    %554 = vmatpush1.msra.mxu0 0.0
    %555 = vmatprep.subr.mxu0 0.0
    %556 = vmatpush1.msra.mxu0 0.0
    %557 = vmatprep.subr.mxu0 0.0
    %558 = vmatpush1.msra.mxu0 0.0
    %559 = vmatprep.subr.mxu0 0.0
    %560 = vmatpush1.msra.mxu0 0.0
    %561 = vmatprep.subr.mxu0 0.0
    %562 = vmatpush1.msra.mxu0 0.0
    %563 = vmatprep.subr.mxu0 0.0
    %564 = vmatpush1.msra.mxu0 0.0
    %565 = vmatprep.subr.mxu0 0.0
    %566 = vmatpush1.msra.mxu0 0.0
    %567 = vmatprep.subr.mxu0 0.0
    %568 = vmatpush1.msra.mxu0 0.0
    %569 = vmatprep.subr.mxu0 0.0
    %570 = vmatpush1.msra.mxu0 0.0
    %571 = vmatprep.subr.mxu0 0.0
    %572 = vmatpush1.msra.mxu0 0.0
    %573 = vmatprep.mubr.f32.mxu0 0.0
    %574 = vmatmul.mubr.f32.gmra.mrb[0].mxu0 %v508
    %v575 = vpop.f32.mrb[0].mxu0
    %v576 = vadd.f32 %v190, %v575
    %v577 = vpop.f32.mrb[0].mxu0
    %v578 = vadd.f32 %v191, %v577
    %579 = vdwg.mxu0
    %580 = vmatprep.subr.mxu0 0.0
    %581 = vmatpush1.msra.mxu0 %v96
    %582 = vmatprep.subr.mxu0 0.0
    %583 = vmatpush1.msra.mxu0 %v99
    %584 = vmatprep.subr.mxu0 0.0
    %585 = vmatpush1.msra.mxu0 %v102
    %586 = vmatprep.subr.mxu0 0.0
    %587 = vmatpush1.msra.mxu0 %v105
    %588 = vmatprep.subr.mxu0 0.0
    %589 = vmatpush1.msra.mxu0 %v108
    %590 = vmatprep.subr.mxu0 0.0
    %591 = vmatpush1.msra.mxu0 %v111
    %592 = vmatprep.subr.mxu0 0.0
    %593 = vmatpush1.msra.mxu0 %v114
    %594 = vmatprep.subr.mxu0 0.0
    %595 = vmatpush1.msra.mxu0 %v117
    %596 = vmatprep.subr.mxu0 0.0
    %597 = vmatpush1.msra.mxu0 %v120
    %598 = vmatprep.subr.mxu0 0.0
    %599 = vmatpush1.msra.mxu0 %v123
    %600 = vmatprep.subr.mxu0 0.0
    %601 = vmatpush1.msra.mxu0 %v126
    %602 = vmatprep.subr.mxu0 0.0
    %603 = vmatpush1.msra.mxu0 %v129
    %604 = vmatprep.subr.mxu0 0.0
    %605 = vmatpush1.msra.mxu0 %v132
    %606 = vmatprep.subr.mxu0 0.0
    %607 = vmatpush1.msra.mxu0 %v135
    %608 = vmatprep.subr.mxu0 0.0
    %609 = vmatpush1.msra.mxu0 %v138
    %610 = vmatprep.subr.mxu0 0.0
    %611 = vmatpush1.msra.mxu0 %v141
    %612 = vmatprep.subr.mxu0 0.0
    %613 = vmatpush1.msra.mxu0 0.0
    %614 = vmatprep.subr.mxu0 0.0
    %615 = vmatpush1.msra.mxu0 0.0
    %616 = vmatprep.subr.mxu0 0.0
    %617 = vmatpush1.msra.mxu0 0.0
    %618 = vmatprep.subr.mxu0 0.0
    %619 = vmatpush1.msra.mxu0 0.0
    %620 = vmatprep.subr.mxu0 0.0
    %621 = vmatpush1.msra.mxu0 0.0
    %622 = vmatprep.subr.mxu0 0.0
    %623 = vmatpush1.msra.mxu0 0.0
    %624 = vmatprep.subr.mxu0 0.0
    %625 = vmatpush1.msra.mxu0 0.0
    %626 = vmatprep.subr.mxu0 0.0
    %627 = vmatpush1.msra.mxu0 0.0
    %628 = vmatprep.subr.mxu0 0.0
    %629 = vmatpush1.msra.mxu0 0.0
    %630 = vmatprep.subr.mxu0 0.0
    %631 = vmatpush1.msra.mxu0 0.0
    %632 = vmatprep.subr.mxu0 0.0
    %633 = vmatpush1.msra.mxu0 0.0
    %634 = vmatprep.subr.mxu0 0.0
    %635 = vmatpush1.msra.mxu0 0.0
    %636 = vmatprep.subr.mxu0 0.0
    %637 = vmatpush1.msra.mxu0 0.0
    %638 = vmatprep.subr.mxu0 0.0
    %639 = vmatpush1.msra.mxu0 0.0
    %640 = vmatprep.subr.mxu0 0.0
    %641 = vmatpush1.msra.mxu0 0.0
    %642 = vmatprep.subr.mxu0 0.0
    %643 = vmatpush1.msra.mxu0 0.0
    %644 = vmatprep.mubr.f32.mxu0 0.0
    %645 = vmatmul.mubr.f32.gmra.mrb[0].mxu0 %v508
    %v646 = vpop.f32.mrb[0].mxu0
    %v647 = vadd.f32 %v192, %v646
    %v648 = vpop.f32.mrb[0].mxu0
    %649 = vdwg.mxu0
    %650 = vmatprep.subr.mxu0 %v143
    %651 = vmatpush1.msra.mxu0 %v142
    %652 = vmatprep.subr.mxu0 %v146
    %653 = vmatpush1.msra.mxu0 %v145
    %654 = vmatprep.subr.mxu0 %v149
    %655 = vmatpush1.msra.mxu0 %v148
    %656 = vmatprep.subr.mxu0 %v152
    %657 = vmatpush1.msra.mxu0 %v151
    %658 = vmatprep.subr.mxu0 %v155
    %659 = vmatpush1.msra.mxu0 %v154
    %660 = vmatprep.subr.mxu0 %v158
    %661 = vmatpush1.msra.mxu0 %v157
    %662 = vmatprep.subr.mxu0 %v161
    %663 = vmatpush1.msra.mxu0 %v160
    %664 = vmatprep.subr.mxu0 %v164
    %665 = vmatpush1.msra.mxu0 %v163
    %666 = vmatprep.subr.mxu0 %v167
    %667 = vmatpush1.msra.mxu0 %v166
    %668 = vmatprep.subr.mxu0 %v170
    %669 = vmatpush1.msra.mxu0 %v169
    %670 = vmatprep.subr.mxu0 %v173
    %671 = vmatpush1.msra.mxu0 %v172
    %672 = vmatprep.subr.mxu0 %v176
    %673 = vmatpush1.msra.mxu0 %v175
    %674 = vmatprep.subr.mxu0 %v179
    %675 = vmatpush1.msra.mxu0 %v178
    %676 = vmatprep.subr.mxu0 %v182
    %677 = vmatpush1.msra.mxu0 %v181
    %678 = vmatprep.subr.mxu0 %v185
    %679 = vmatpush1.msra.mxu0 %v184
    %680 = vmatprep.subr.mxu0 %v188
    %681 = vmatpush1.msra.mxu0 %v187
    %682 = vmatprep.subr.mxu0 0.0
    %683 = vmatpush1.msra.mxu0 0.0
    %684 = vmatprep.subr.mxu0 0.0
    %685 = vmatpush1.msra.mxu0 0.0
    %686 = vmatprep.subr.mxu0 0.0
    %687 = vmatpush1.msra.mxu0 0.0
    %688 = vmatprep.subr.mxu0 0.0
    %689 = vmatpush1.msra.mxu0 0.0
    %690 = vmatprep.subr.mxu0 0.0
    %691 = vmatpush1.msra.mxu0 0.0
    %692 = vmatprep.subr.mxu0 0.0
    %693 = vmatpush1.msra.mxu0 0.0
    %694 = vmatprep.subr.mxu0 0.0
    %695 = vmatpush1.msra.mxu0 0.0
    %696 = vmatprep.subr.mxu0 0.0
    %697 = vmatpush1.msra.mxu0 0.0
    %698 = vmatprep.subr.mxu0 0.0
    %699 = vmatpush1.msra.mxu0 0.0
    %700 = vmatprep.subr.mxu0 0.0
    %701 = vmatpush1.msra.mxu0 0.0
    %702 = vmatprep.subr.mxu0 0.0
    %703 = vmatpush1.msra.mxu0 0.0
    %704 = vmatprep.subr.mxu0 0.0
    %705 = vmatpush1.msra.mxu0 0.0
    %706 = vmatprep.subr.mxu0 0.0
    %707 = vmatpush1.msra.mxu0 0.0
    %708 = vmatprep.subr.mxu0 0.0
    %709 = vmatpush1.msra.mxu0 0.0
    %710 = vmatprep.subr.mxu0 0.0
    %711 = vmatpush1.msra.mxu0 0.0
    %712 = vmatprep.subr.mxu0 0.0
    %713 = vmatpush1.msra.mxu0 0.0
    %714 = vmatprep.mubr.f32.mxu0 0.0
    %715 = vmatmul.mubr.f32.gmra.mrb[0].mxu0 %v505
    %v716 = vpop.f32.mrb[0].mxu0
    %v717 = vadd.f32 0.0, %v716
    %v718 = vpop.f32.mrb[0].mxu0
    %v719 = vadd.f32 0.0, %v718
    %720 = vdwg.mxu0
    %721 = vmatprep.subr.mxu0 0.0
    %722 = vmatpush1.msra.mxu0 %v144
    %723 = vmatprep.subr.mxu0 0.0
    %724 = vmatpush1.msra.mxu0 %v147
    %725 = vmatprep.subr.mxu0 0.0
    %726 = vmatpush1.msra.mxu0 %v150
    %727 = vmatprep.subr.mxu0 0.0
    %728 = vmatpush1.msra.mxu0 %v153
    %729 = vmatprep.subr.mxu0 0.0
    %730 = vmatpush1.msra.mxu0 %v156
    %731 = vmatprep.subr.mxu0 0.0
    %732 = vmatpush1.msra.mxu0 %v159
    %733 = vmatprep.subr.mxu0 0.0
    %734 = vmatpush1.msra.mxu0 %v162
    %735 = vmatprep.subr.mxu0 0.0
    %736 = vmatpush1.msra.mxu0 %v165
    %737 = vmatprep.subr.mxu0 0.0
    %738 = vmatpush1.msra.mxu0 %v168
    %739 = vmatprep.subr.mxu0 0.0
    %740 = vmatpush1.msra.mxu0 %v171
    %741 = vmatprep.subr.mxu0 0.0
    %742 = vmatpush1.msra.mxu0 %v174
    %743 = vmatprep.subr.mxu0 0.0
    %744 = vmatpush1.msra.mxu0 %v177
    %745 = vmatprep.subr.mxu0 0.0
    %746 = vmatpush1.msra.mxu0 %v180
    %747 = vmatprep.subr.mxu0 0.0
    %748 = vmatpush1.msra.mxu0 %v183
    %749 = vmatprep.subr.mxu0 0.0
    %750 = vmatpush1.msra.mxu0 %v186
    %751 = vmatprep.subr.mxu0 0.0
    %752 = vmatpush1.msra.mxu0 %v189
    %753 = vmatprep.subr.mxu0 0.0
    %754 = vmatpush1.msra.mxu0 0.0
    %755 = vmatprep.subr.mxu0 0.0
    %756 = vmatpush1.msra.mxu0 0.0
    %757 = vmatprep.subr.mxu0 0.0
    %758 = vmatpush1.msra.mxu0 0.0
    %759 = vmatprep.subr.mxu0 0.0
    %760 = vmatpush1.msra.mxu0 0.0
    %761 = vmatprep.subr.mxu0 0.0
    %762 = vmatpush1.msra.mxu0 0.0
    %763 = vmatprep.subr.mxu0 0.0
    %764 = vmatpush1.msra.mxu0 0.0
    %765 = vmatprep.subr.mxu0 0.0
    %766 = vmatpush1.msra.mxu0 0.0
    %767 = vmatprep.subr.mxu0 0.0
    %768 = vmatpush1.msra.mxu0 0.0
    %769 = vmatprep.subr.mxu0 0.0
    %770 = vmatpush1.msra.mxu0 0.0
    %771 = vmatprep.subr.mxu0 0.0
    %772 = vmatpush1.msra.mxu0 0.0
    %773 = vmatprep.subr.mxu0 0.0
    %774 = vmatpush1.msra.mxu0 0.0
    %775 = vmatprep.subr.mxu0 0.0
    %776 = vmatpush1.msra.mxu0 0.0
    %777 = vmatprep.subr.mxu0 0.0
    %778 = vmatpush1.msra.mxu0 0.0
    %779 = vmatprep.subr.mxu0 0.0
    %780 = vmatpush1.msra.mxu0 0.0
    %781 = vmatprep.subr.mxu0 0.0
    %782 = vmatpush1.msra.mxu0 0.0
    %783 = vmatprep.subr.mxu0 0.0
    %784 = vmatpush1.msra.mxu0 0.0
    %785 = vmatprep.mubr.f32.mxu0 0.0
    %786 = vmatmul.mubr.f32.gmra.mrb[0].mxu0 %v505
    %v787 = vpop.f32.mrb[0].mxu0
    %v788 = vadd.f32 0.0, %v787
    %v789 = vpop.f32.mrb[0].mxu0
    %790 = vdwg.mxu0
    %v791 = vadd.f32 %v576, %v717
    %v792 = vxor.u32 %v791, 2147483648
    %v793 = vmul.f32 %v792, 1.442695
    %v794 = vpow.pop %v793
    %v795 = vadd.f32 %v794, 1.0
    %v796 = vrcp.pop %v795
    %v797 = vmul.f32 1.0, %v796
    %v798 = vadd.f32 %v578, %v719
    %v799 = vxor.u32 %v798, 2147483648
    %v800 = vmul.f32 %v799, 1.442695
    %v801 = vpow.pop %v800
    %v802 = vadd.f32 %v801, 1.0
    %v803 = vrcp.pop %v802
    %v804 = vmul.f32 1.0, %v803
    %v805 = vadd.f32 %v788, %v496
    %v806 = vmul.f32 %v797, %v805
    %v807 = vadd.f32 %v647, %v806
    %v808 = vtanh.pop %v807
    %v809 = vsub.f32 1.0, %v804
    %v810 = vmul.f32 %v809, %v808
    %v811 = vmul.f32 %v804, %v505
    %v812 = vadd.f32 %v810, %v811
    %s813 = scalar_lea.vmem [#allocation12], 8
    %814 = vst [vmem:[%s813] sm:$0xff] %v812
    %s815 = scalar_lea.vmem [#allocation3], 16
    %v816 = vld [vmem:[%s815] sm:$0xff]
    %817 = vmatprep.subr.mxu0 %v95
    %818 = vmatpush1.msra.mxu0 %v94
    %819 = vmatprep.subr.mxu0 %v98
    %820 = vmatpush1.msra.mxu0 %v97
    %821 = vmatprep.subr.mxu0 %v101
    %822 = vmatpush1.msra.mxu0 %v100
    %823 = vmatprep.subr.mxu0 %v104
    %824 = vmatpush1.msra.mxu0 %v103
    %825 = vmatprep.subr.mxu0 %v107
    %826 = vmatpush1.msra.mxu0 %v106
    %827 = vmatprep.subr.mxu0 %v110
    %828 = vmatpush1.msra.mxu0 %v109
    %829 = vmatprep.subr.mxu0 %v113
    %830 = vmatpush1.msra.mxu0 %v112
    %831 = vmatprep.subr.mxu0 %v116
    %832 = vmatpush1.msra.mxu0 %v115
    %833 = vmatprep.subr.mxu0 %v119
    %834 = vmatpush1.msra.mxu0 %v118
    %835 = vmatprep.subr.mxu0 %v122
    %836 = vmatpush1.msra.mxu0 %v121
    %837 = vmatprep.subr.mxu0 %v125
    %838 = vmatpush1.msra.mxu0 %v124
    %839 = vmatprep.subr.mxu0 %v128
    %840 = vmatpush1.msra.mxu0 %v127
    %841 = vmatprep.subr.mxu0 %v131
    %842 = vmatpush1.msra.mxu0 %v130
    %843 = vmatprep.subr.mxu0 %v134
    %844 = vmatpush1.msra.mxu0 %v133
    %845 = vmatprep.subr.mxu0 %v137
    %846 = vmatpush1.msra.mxu0 %v136
    %847 = vmatprep.subr.mxu0 %v140
    %848 = vmatpush1.msra.mxu0 %v139
    %849 = vmatprep.subr.mxu0 0.0
    %850 = vmatpush1.msra.mxu0 0.0
    %851 = vmatprep.subr.mxu0 0.0
    %852 = vmatpush1.msra.mxu0 0.0
    %853 = vmatprep.subr.mxu0 0.0
    %854 = vmatpush1.msra.mxu0 0.0
    %855 = vmatprep.subr.mxu0 0.0
    %856 = vmatpush1.msra.mxu0 0.0
    %857 = vmatprep.subr.mxu0 0.0
    %858 = vmatpush1.msra.mxu0 0.0
    %859 = vmatprep.subr.mxu0 0.0
    %860 = vmatpush1.msra.mxu0 0.0
    %861 = vmatprep.subr.mxu0 0.0
    %862 = vmatpush1.msra.mxu0 0.0
    %863 = vmatprep.subr.mxu0 0.0
    %864 = vmatpush1.msra.mxu0 0.0
    %865 = vmatprep.subr.mxu0 0.0
    %866 = vmatpush1.msra.mxu0 0.0
    %867 = vmatprep.subr.mxu0 0.0
    %868 = vmatpush1.msra.mxu0 0.0
    %869 = vmatprep.subr.mxu0 0.0
    %870 = vmatpush1.msra.mxu0 0.0
    %871 = vmatprep.subr.mxu0 0.0
    %872 = vmatpush1.msra.mxu0 0.0
    %873 = vmatprep.subr.mxu0 0.0
    %874 = vmatpush1.msra.mxu0 0.0
    %875 = vmatprep.subr.mxu0 0.0
    %876 = vmatpush1.msra.mxu0 0.0
    %877 = vmatprep.subr.mxu0 0.0
    %878 = vmatpush1.msra.mxu0 0.0
    %879 = vmatprep.subr.mxu0 0.0
    %880 = vmatpush1.msra.mxu0 0.0
    %881 = vmatprep.mubr.f32.mxu0 0.0
    %882 = vmatmul.mubr.f32.gmra.mrb[0].mxu0 %v816
    %v883 = vpop.f32.mrb[0].mxu0
    %v884 = vadd.f32 %v190, %v883
    %v885 = vpop.f32.mrb[0].mxu0
    %v886 = vadd.f32 %v191, %v885
    %887 = vdwg.mxu0
    %888 = vmatprep.subr.mxu0 0.0
    %889 = vmatpush1.msra.mxu0 %v96
    %890 = vmatprep.subr.mxu0 0.0
    %891 = vmatpush1.msra.mxu0 %v99
    %892 = vmatprep.subr.mxu0 0.0
    %893 = vmatpush1.msra.mxu0 %v102
    %894 = vmatprep.subr.mxu0 0.0
    %895 = vmatpush1.msra.mxu0 %v105
    %896 = vmatprep.subr.mxu0 0.0
    %897 = vmatpush1.msra.mxu0 %v108
    %898 = vmatprep.subr.mxu0 0.0
    %899 = vmatpush1.msra.mxu0 %v111
    %900 = vmatprep.subr.mxu0 0.0
    %901 = vmatpush1.msra.mxu0 %v114
    %902 = vmatprep.subr.mxu0 0.0
    %903 = vmatpush1.msra.mxu0 %v117
    %904 = vmatprep.subr.mxu0 0.0
    %905 = vmatpush1.msra.mxu0 %v120
    %906 = vmatprep.subr.mxu0 0.0
    %907 = vmatpush1.msra.mxu0 %v123
    %908 = vmatprep.subr.mxu0 0.0
    %909 = vmatpush1.msra.mxu0 %v126
    %910 = vmatprep.subr.mxu0 0.0
    %911 = vmatpush1.msra.mxu0 %v129
    %912 = vmatprep.subr.mxu0 0.0
    %913 = vmatpush1.msra.mxu0 %v132
    %914 = vmatprep.subr.mxu0 0.0
    %915 = vmatpush1.msra.mxu0 %v135
    %916 = vmatprep.subr.mxu0 0.0
    %917 = vmatpush1.msra.mxu0 %v138
    %918 = vmatprep.subr.mxu0 0.0
    %919 = vmatpush1.msra.mxu0 %v141
    %920 = vmatprep.subr.mxu0 0.0
    %921 = vmatpush1.msra.mxu0 0.0
    %922 = vmatprep.subr.mxu0 0.0
    %923 = vmatpush1.msra.mxu0 0.0
    %924 = vmatprep.subr.mxu0 0.0
    %925 = vmatpush1.msra.mxu0 0.0
    %926 = vmatprep.subr.mxu0 0.0
    %927 = vmatpush1.msra.mxu0 0.0
    %928 = vmatprep.subr.mxu0 0.0
    %929 = vmatpush1.msra.mxu0 0.0
    %930 = vmatprep.subr.mxu0 0.0
    %931 = vmatpush1.msra.mxu0 0.0
    %932 = vmatprep.subr.mxu0 0.0
    %933 = vmatpush1.msra.mxu0 0.0
    %934 = vmatprep.subr.mxu0 0.0
    %935 = vmatpush1.msra.mxu0 0.0
    %936 = vmatprep.subr.mxu0 0.0
    %937 = vmatpush1.msra.mxu0 0.0
    %938 = vmatprep.subr.mxu0 0.0
    %939 = vmatpush1.msra.mxu0 0.0
    %940 = vmatprep.subr.mxu0 0.0
    %941 = vmatpush1.msra.mxu0 0.0
    %942 = vmatprep.subr.mxu0 0.0
    %943 = vmatpush1.msra.mxu0 0.0
    %944 = vmatprep.subr.mxu0 0.0
    %945 = vmatpush1.msra.mxu0 0.0
    %946 = vmatprep.subr.mxu0 0.0
    %947 = vmatpush1.msra.mxu0 0.0
    %948 = vmatprep.subr.mxu0 0.0
    %949 = vmatpush1.msra.mxu0 0.0
    %950 = vmatprep.subr.mxu0 0.0
    %951 = vmatpush1.msra.mxu0 0.0
    %952 = vmatprep.mubr.f32.mxu0 0.0
    %953 = vmatmul.mubr.f32.gmra.mrb[0].mxu0 %v816
    %v954 = vpop.f32.mrb[0].mxu0
    %v955 = vadd.f32 %v192, %v954
    %v956 = vpop.f32.mrb[0].mxu0
    %957 = vdwg.mxu0
    %958 = vmatprep.subr.mxu0 %v143
    %959 = vmatpush1.msra.mxu0 %v142
    %960 = vmatprep.subr.mxu0 %v146
    %961 = vmatpush1.msra.mxu0 %v145
    %962 = vmatprep.subr.mxu0 %v149
    %963 = vmatpush1.msra.mxu0 %v148
    %964 = vmatprep.subr.mxu0 %v152
    %965 = vmatpush1.msra.mxu0 %v151
    %966 = vmatprep.subr.mxu0 %v155
    %967 = vmatpush1.msra.mxu0 %v154
    %968 = vmatprep.subr.mxu0 %v158
    %969 = vmatpush1.msra.mxu0 %v157
    %970 = vmatprep.subr.mxu0 %v161
    %971 = vmatpush1.msra.mxu0 %v160
    %972 = vmatprep.subr.mxu0 %v164
    %973 = vmatpush1.msra.mxu0 %v163
    %974 = vmatprep.subr.mxu0 %v167
    %975 = vmatpush1.msra.mxu0 %v166
    %976 = vmatprep.subr.mxu0 %v170
    %977 = vmatpush1.msra.mxu0 %v169
    %978 = vmatprep.subr.mxu0 %v173
    %979 = vmatpush1.msra.mxu0 %v172
    %980 = vmatprep.subr.mxu0 %v176
    %981 = vmatpush1.msra.mxu0 %v175
    %982 = vmatprep.subr.mxu0 %v179
    %983 = vmatpush1.msra.mxu0 %v178
    %984 = vmatprep.subr.mxu0 %v182
    %985 = vmatpush1.msra.mxu0 %v181
    %986 = vmatprep.subr.mxu0 %v185
    %987 = vmatpush1.msra.mxu0 %v184
    %988 = vmatprep.subr.mxu0 %v188
    %989 = vmatpush1.msra.mxu0 %v187
    %990 = vmatprep.subr.mxu0 0.0
    %991 = vmatpush1.msra.mxu0 0.0
    %992 = vmatprep.subr.mxu0 0.0
    %993 = vmatpush1.msra.mxu0 0.0
    %994 = vmatprep.subr.mxu0 0.0
    %995 = vmatpush1.msra.mxu0 0.0
    %996 = vmatprep.subr.mxu0 0.0
    %997 = vmatpush1.msra.mxu0 0.0
    %998 = vmatprep.subr.mxu0 0.0
    %999 = vmatpush1.msra.mxu0 0.0
    %1000 = vmatprep.subr.mxu0 0.0
    %1001 = vmatpush1.msra.mxu0 0.0
    %1002 = vmatprep.subr.mxu0 0.0
    %1003 = vmatpush1.msra.mxu0 0.0
    %1004 = vmatprep.subr.mxu0 0.0
    %1005 = vmatpush1.msra.mxu0 0.0
    %1006 = vmatprep.subr.mxu0 0.0
    %1007 = vmatpush1.msra.mxu0 0.0
    %1008 = vmatprep.subr.mxu0 0.0
    %1009 = vmatpush1.msra.mxu0 0.0
    %1010 = vmatprep.subr.mxu0 0.0
    %1011 = vmatpush1.msra.mxu0 0.0
    %1012 = vmatprep.subr.mxu0 0.0
    %1013 = vmatpush1.msra.mxu0 0.0
    %1014 = vmatprep.subr.mxu0 0.0
    %1015 = vmatpush1.msra.mxu0 0.0
    %1016 = vmatprep.subr.mxu0 0.0
    %1017 = vmatpush1.msra.mxu0 0.0
    %1018 = vmatprep.subr.mxu0 0.0
    %1019 = vmatpush1.msra.mxu0 0.0
    %1020 = vmatprep.subr.mxu0 0.0
    %1021 = vmatpush1.msra.mxu0 0.0
    %1022 = vmatprep.mubr.f32.mxu0 0.0
    %1023 = vmatmul.mubr.f32.gmra.mrb[0].mxu0 %v812
    %v1024 = vpop.f32.mrb[0].mxu0
    %v1025 = vadd.f32 0.0, %v1024
    %v1026 = vpop.f32.mrb[0].mxu0
    %v1027 = vadd.f32 0.0, %v1026
    %1028 = vdwg.mxu0
    %1029 = vmatprep.subr.mxu0 0.0
    %1030 = vmatpush1.msra.mxu0 %v144
    %1031 = vmatprep.subr.mxu0 0.0
    %1032 = vmatpush1.msra.mxu0 %v147
    %1033 = vmatprep.subr.mxu0 0.0
    %1034 = vmatpush1.msra.mxu0 %v150
    %1035 = vmatprep.subr.mxu0 0.0
    %1036 = vmatpush1.msra.mxu0 %v153
    %1037 = vmatprep.subr.mxu0 0.0
    %1038 = vmatpush1.msra.mxu0 %v156
    %1039 = vmatprep.subr.mxu0 0.0
    %1040 = vmatpush1.msra.mxu0 %v159
    %1041 = vmatprep.subr.mxu0 0.0
    %1042 = vmatpush1.msra.mxu0 %v162
    %1043 = vmatprep.subr.mxu0 0.0
    %1044 = vmatpush1.msra.mxu0 %v165
    %1045 = vmatprep.subr.mxu0 0.0
    %1046 = vmatpush1.msra.mxu0 %v168
    %1047 = vmatprep.subr.mxu0 0.0
    %1048 = vmatpush1.msra.mxu0 %v171
    %1049 = vmatprep.subr.mxu0 0.0
    %1050 = vmatpush1.msra.mxu0 %v174
    %1051 = vmatprep.subr.mxu0 0.0
    %1052 = vmatpush1.msra.mxu0 %v177
    %1053 = vmatprep.subr.mxu0 0.0
    %1054 = vmatpush1.msra.mxu0 %v180
    %1055 = vmatprep.subr.mxu0 0.0
    %1056 = vmatpush1.msra.mxu0 %v183
    %1057 = vmatprep.subr.mxu0 0.0
    %1058 = vmatpush1.msra.mxu0 %v186
    %1059 = vmatprep.subr.mxu0 0.0
    %1060 = vmatpush1.msra.mxu0 %v189
    %1061 = vmatprep.subr.mxu0 0.0
    %1062 = vmatpush1.msra.mxu0 0.0
    %1063 = vmatprep.subr.mxu0 0.0
    %1064 = vmatpush1.msra.mxu0 0.0
    %1065 = vmatprep.subr.mxu0 0.0
    %1066 = vmatpush1.msra.mxu0 0.0
    %1067 = vmatprep.subr.mxu0 0.0
    %1068 = vmatpush1.msra.mxu0 0.0
    %1069 = vmatprep.subr.mxu0 0.0
    %1070 = vmatpush1.msra.mxu0 0.0
    %1071 = vmatprep.subr.mxu0 0.0
    %1072 = vmatpush1.msra.mxu0 0.0
    %1073 = vmatprep.subr.mxu0 0.0
    %1074 = vmatpush1.msra.mxu0 0.0
    %1075 = vmatprep.subr.mxu0 0.0
    %1076 = vmatpush1.msra.mxu0 0.0
    %1077 = vmatprep.subr.mxu0 0.0
    %1078 = vmatpush1.msra.mxu0 0.0
    %1079 = vmatprep.subr.mxu0 0.0
    %1080 = vmatpush1.msra.mxu0 0.0
    %1081 = vmatprep.subr.mxu0 0.0
    %1082 = vmatpush1.msra.mxu0 0.0
    %1083 = vmatprep.subr.mxu0 0.0
    %1084 = vmatpush1.msra.mxu0 0.0
    %1085 = vmatprep.subr.mxu0 0.0
    %1086 = vmatpush1.msra.mxu0 0.0
    %1087 = vmatprep.subr.mxu0 0.0
    %1088 = vmatpush1.msra.mxu0 0.0
    %1089 = vmatprep.subr.mxu0 0.0
    %1090 = vmatpush1.msra.mxu0 0.0
    %1091 = vmatprep.subr.mxu0 0.0
    %1092 = vmatpush1.msra.mxu0 0.0
    %1093 = vmatprep.mubr.f32.mxu0 0.0
    %1094 = vmatmul.mubr.f32.gmra.mrb[0].mxu0 %v812
    %v1095 = vpop.f32.mrb[0].mxu0
    %v1096 = vadd.f32 0.0, %v1095
    %v1097 = vpop.f32.mrb[0].mxu0
    %1098 = vdwg.mxu0
    %v1099 = vadd.f32 %v884, %v1025
    %v1100 = vxor.u32 %v1099, 2147483648
    %v1101 = vmul.f32 %v1100, 1.442695
    %v1102 = vpow.pop %v1101
    %v1103 = vadd.f32 %v1102, 1.0
    %v1104 = vrcp.pop %v1103
    %v1105 = vmul.f32 1.0, %v1104
    %v1106 = vadd.f32 %v886, %v1027
    %v1107 = vxor.u32 %v1106, 2147483648
    %v1108 = vmul.f32 %v1107, 1.442695
    %v1109 = vpow.pop %v1108
    %v1110 = vadd.f32 %v1109, 1.0
    %v1111 = vrcp.pop %v1110
    %v1112 = vmul.f32 1.0, %v1111
    %v1113 = vadd.f32 %v1096, %v496
    %v1114 = vmul.f32 %v1105, %v1113
    %v1115 = vadd.f32 %v955, %v1114
    %v1116 = vtanh.pop %v1115
    %v1117 = vsub.f32 1.0, %v1112
    %v1118 = vmul.f32 %v1117, %v1116
    %v1119 = vmul.f32 %v1112, %v812
    %v1120 = vadd.f32 %v1118, %v1119
    %s1121 = scalar_lea.vmem [#allocation12], 16
    %1122 = vst [vmem:[%s1121] sm:$0xff] %v1120
    %s1123 = scalar_lea.vmem [#allocation3], 24
    %v1124 = vld [vmem:[%s1123] sm:$0xff]
    %1125 = vmatprep.subr.mxu0 %v95
    %1126 = vmatpush1.msra.mxu0 %v94
    %1127 = vmatprep.subr.mxu0 %v98
    %1128 = vmatpush1.msra.mxu0 %v97
    %1129 = vmatprep.subr.mxu0 %v101
    %1130 = vmatpush1.msra.mxu0 %v100
    %1131 = vmatprep.subr.mxu0 %v104
    %1132 = vmatpush1.msra.mxu0 %v103
    %1133 = vmatprep.subr.mxu0 %v107
    %1134 = vmatpush1.msra.mxu0 %v106
    %1135 = vmatprep.subr.mxu0 %v110
    %1136 = vmatpush1.msra.mxu0 %v109
    %1137 = vmatprep.subr.mxu0 %v113
    %1138 = vmatpush1.msra.mxu0 %v112
    %1139 = vmatprep.subr.mxu0 %v116
    %1140 = vmatpush1.msra.mxu0 %v115
    %1141 = vmatprep.subr.mxu0 %v119
    %1142 = vmatpush1.msra.mxu0 %v118
    %1143 = vmatprep.subr.mxu0 %v122
    %1144 = vmatpush1.msra.mxu0 %v121
    %1145 = vmatprep.subr.mxu0 %v125
    %1146 = vmatpush1.msra.mxu0 %v124
    %1147 = vmatprep.subr.mxu0 %v128
    %1148 = vmatpush1.msra.mxu0 %v127
    %1149 = vmatprep.subr.mxu0 %v131
    %1150 = vmatpush1.msra.mxu0 %v130
    %1151 = vmatprep.subr.mxu0 %v134
    %1152 = vmatpush1.msra.mxu0 %v133
    %1153 = vmatprep.subr.mxu0 %v137
    %1154 = vmatpush1.msra.mxu0 %v136
    %1155 = vmatprep.subr.mxu0 %v140
    %1156 = vmatpush1.msra.mxu0 %v139
    %1157 = vmatprep.subr.mxu0 0.0
    %1158 = vmatpush1.msra.mxu0 0.0
    %1159 = vmatprep.subr.mxu0 0.0
    %1160 = vmatpush1.msra.mxu0 0.0
    %1161 = vmatprep.subr.mxu0 0.0
    %1162 = vmatpush1.msra.mxu0 0.0
    %1163 = vmatprep.subr.mxu0 0.0
    %1164 = vmatpush1.msra.mxu0 0.0
    %1165 = vmatprep.subr.mxu0 0.0
    %1166 = vmatpush1.msra.mxu0 0.0
    %1167 = vmatprep.subr.mxu0 0.0
    %1168 = vmatpush1.msra.mxu0 0.0
    %1169 = vmatprep.subr.mxu0 0.0
    %1170 = vmatpush1.msra.mxu0 0.0
    %1171 = vmatprep.subr.mxu0 0.0
    %1172 = vmatpush1.msra.mxu0 0.0
    %1173 = vmatprep.subr.mxu0 0.0
    %1174 = vmatpush1.msra.mxu0 0.0
    %1175 = vmatprep.subr.mxu0 0.0
    %1176 = vmatpush1.msra.mxu0 0.0
    %1177 = vmatprep.subr.mxu0 0.0
    %1178 = vmatpush1.msra.mxu0 0.0
    %1179 = vmatprep.subr.mxu0 0.0
    %1180 = vmatpush1.msra.mxu0 0.0
    %1181 = vmatprep.subr.mxu0 0.0
    %1182 = vmatpush1.msra.mxu0 0.0
    %1183 = vmatprep.subr.mxu0 0.0
    %1184 = vmatpush1.msra.mxu0 0.0
    %1185 = vmatprep.subr.mxu0 0.0
    %1186 = vmatpush1.msra.mxu0 0.0
    %1187 = vmatprep.subr.mxu0 0.0
    %1188 = vmatpush1.msra.mxu0 0.0
    %1189 = vmatprep.mubr.f32.mxu0 0.0
    %1190 = vmatmul.mubr.f32.gmra.mrb[0].mxu0 %v1124
    %v1191 = vpop.f32.mrb[0].mxu0
    %v1192 = vadd.f32 %v190, %v1191
    %v1193 = vpop.f32.mrb[0].mxu0
    %v1194 = vadd.f32 %v191, %v1193
    %1195 = vdwg.mxu0
    %1196 = vmatprep.subr.mxu0 0.0
    %1197 = vmatpush1.msra.mxu0 %v96
    %1198 = vmatprep.subr.mxu0 0.0
    %1199 = vmatpush1.msra.mxu0 %v99
    %1200 = vmatprep.subr.mxu0 0.0
    %1201 = vmatpush1.msra.mxu0 %v102
    %1202 = vmatprep.subr.mxu0 0.0
    %1203 = vmatpush1.msra.mxu0 %v105
    %1204 = vmatprep.subr.mxu0 0.0
    %1205 = vmatpush1.msra.mxu0 %v108
    %1206 = vmatprep.subr.mxu0 0.0
    %1207 = vmatpush1.msra.mxu0 %v111
    %1208 = vmatprep.subr.mxu0 0.0
    %1209 = vmatpush1.msra.mxu0 %v114
    %1210 = vmatprep.subr.mxu0 0.0
    %1211 = vmatpush1.msra.mxu0 %v117
    %1212 = vmatprep.subr.mxu0 0.0
    %1213 = vmatpush1.msra.mxu0 %v120
    %1214 = vmatprep.subr.mxu0 0.0
    %1215 = vmatpush1.msra.mxu0 %v123
    %1216 = vmatprep.subr.mxu0 0.0
    %1217 = vmatpush1.msra.mxu0 %v126
    %1218 = vmatprep.subr.mxu0 0.0
    %1219 = vmatpush1.msra.mxu0 %v129
    %1220 = vmatprep.subr.mxu0 0.0
    %1221 = vmatpush1.msra.mxu0 %v132
    %1222 = vmatprep.subr.mxu0 0.0
    %1223 = vmatpush1.msra.mxu0 %v135
    %1224 = vmatprep.subr.mxu0 0.0
    %1225 = vmatpush1.msra.mxu0 %v138
    %1226 = vmatprep.subr.mxu0 0.0
    %1227 = vmatpush1.msra.mxu0 %v141
    %1228 = vmatprep.subr.mxu0 0.0
    %1229 = vmatpush1.msra.mxu0 0.0
    %1230 = vmatprep.subr.mxu0 0.0
    %1231 = vmatpush1.msra.mxu0 0.0
    %1232 = vmatprep.subr.mxu0 0.0
    %1233 = vmatpush1.msra.mxu0 0.0
    %1234 = vmatprep.subr.mxu0 0.0
    %1235 = vmatpush1.msra.mxu0 0.0
    %1236 = vmatprep.subr.mxu0 0.0
    %1237 = vmatpush1.msra.mxu0 0.0
    %1238 = vmatprep.subr.mxu0 0.0
    %1239 = vmatpush1.msra.mxu0 0.0
    %1240 = vmatprep.subr.mxu0 0.0
    %1241 = vmatpush1.msra.mxu0 0.0
    %1242 = vmatprep.subr.mxu0 0.0
    %1243 = vmatpush1.msra.mxu0 0.0
    %1244 = vmatprep.subr.mxu0 0.0
    %1245 = vmatpush1.msra.mxu0 0.0
    %1246 = vmatprep.subr.mxu0 0.0
    %1247 = vmatpush1.msra.mxu0 0.0
    %1248 = vmatprep.subr.mxu0 0.0
    %1249 = vmatpush1.msra.mxu0 0.0
    %1250 = vmatprep.subr.mxu0 0.0
    %1251 = vmatpush1.msra.mxu0 0.0
    %1252 = vmatprep.subr.mxu0 0.0
    %1253 = vmatpush1.msra.mxu0 0.0
    %1254 = vmatprep.subr.mxu0 0.0
    %1255 = vmatpush1.msra.mxu0 0.0
    %1256 = vmatprep.subr.mxu0 0.0
    %1257 = vmatpush1.msra.mxu0 0.0
    %1258 = vmatprep.subr.mxu0 0.0
    %1259 = vmatpush1.msra.mxu0 0.0
    %1260 = vmatprep.mubr.f32.mxu0 0.0
    %1261 = vmatmul.mubr.f32.gmra.mrb[0].mxu0 %v1124
    %v1262 = vpop.f32.mrb[0].mxu0
    %v1263 = vadd.f32 %v192, %v1262
    %v1264 = vpop.f32.mrb[0].mxu0
    %1265 = vdwg.mxu0
    %1266 = vmatprep.subr.mxu0 %v143
    %1267 = vmatpush1.msra.mxu0 %v142
    %1268 = vmatprep.subr.mxu0 %v146
    %1269 = vmatpush1.msra.mxu0 %v145
    %1270 = vmatprep.subr.mxu0 %v149
    %1271 = vmatpush1.msra.mxu0 %v148
    %1272 = vmatprep.subr.mxu0 %v152
    %1273 = vmatpush1.msra.mxu0 %v151
    %1274 = vmatprep.subr.mxu0 %v155
    %1275 = vmatpush1.msra.mxu0 %v154
    %1276 = vmatprep.subr.mxu0 %v158
    %1277 = vmatpush1.msra.mxu0 %v157
    %1278 = vmatprep.subr.mxu0 %v161
    %1279 = vmatpush1.msra.mxu0 %v160
    %1280 = vmatprep.subr.mxu0 %v164
    %1281 = vmatpush1.msra.mxu0 %v163
    %1282 = vmatprep.subr.mxu0 %v167
    %1283 = vmatpush1.msra.mxu0 %v166
    %1284 = vmatprep.subr.mxu0 %v170
    %1285 = vmatpush1.msra.mxu0 %v169
    %1286 = vmatprep.subr.mxu0 %v173
    %1287 = vmatpush1.msra.mxu0 %v172
    %1288 = vmatprep.subr.mxu0 %v176
    %1289 = vmatpush1.msra.mxu0 %v175
    %1290 = vmatprep.subr.mxu0 %v179
    %1291 = vmatpush1.msra.mxu0 %v178
    %1292 = vmatprep.subr.mxu0 %v182
    %1293 = vmatpush1.msra.mxu0 %v181
    %1294 = vmatprep.subr.mxu0 %v185
    %1295 = vmatpush1.msra.mxu0 %v184
    %1296 = vmatprep.subr.mxu0 %v188
    %1297 = vmatpush1.msra.mxu0 %v187
    %1298 = vmatprep.subr.mxu0 0.0
    %1299 = vmatpush1.msra.mxu0 0.0
    %1300 = vmatprep.subr.mxu0 0.0
    %1301 = vmatpush1.msra.mxu0 0.0
    %1302 = vmatprep.subr.mxu0 0.0
    %1303 = vmatpush1.msra.mxu0 0.0
    %1304 = vmatprep.subr.mxu0 0.0
    %1305 = vmatpush1.msra.mxu0 0.0
    %1306 = vmatprep.subr.mxu0 0.0
    %1307 = vmatpush1.msra.mxu0 0.0
    %1308 = vmatprep.subr.mxu0 0.0
    %1309 = vmatpush1.msra.mxu0 0.0
    %1310 = vmatprep.subr.mxu0 0.0
    %1311 = vmatpush1.msra.mxu0 0.0
    %1312 = vmatprep.subr.mxu0 0.0
    %1313 = vmatpush1.msra.mxu0 0.0
    %1314 = vmatprep.subr.mxu0 0.0
    %1315 = vmatpush1.msra.mxu0 0.0
    %1316 = vmatprep.subr.mxu0 0.0
    %1317 = vmatpush1.msra.mxu0 0.0
    %1318 = vmatprep.subr.mxu0 0.0
    %1319 = vmatpush1.msra.mxu0 0.0
    %1320 = vmatprep.subr.mxu0 0.0
    %1321 = vmatpush1.msra.mxu0 0.0
    %1322 = vmatprep.subr.mxu0 0.0
    %1323 = vmatpush1.msra.mxu0 0.0
    %1324 = vmatprep.subr.mxu0 0.0
    %1325 = vmatpush1.msra.mxu0 0.0
    %1326 = vmatprep.subr.mxu0 0.0
    %1327 = vmatpush1.msra.mxu0 0.0
    %1328 = vmatprep.subr.mxu0 0.0
    %1329 = vmatpush1.msra.mxu0 0.0
    %1330 = vmatprep.mubr.f32.mxu0 0.0
    %1331 = vmatmul.mubr.f32.gmra.mrb[0].mxu0 %v1120
    %v1332 = vpop.f32.mrb[0].mxu0
    %v1333 = vadd.f32 0.0, %v1332
    %v1334 = vpop.f32.mrb[0].mxu0
    %v1335 = vadd.f32 0.0, %v1334
    %1336 = vdwg.mxu0
    %1337 = vmatprep.subr.mxu0 0.0
    %1338 = vmatpush1.msra.mxu0 %v144
    %1339 = vmatprep.subr.mxu0 0.0
    %1340 = vmatpush1.msra.mxu0 %v147
    %1341 = vmatprep.subr.mxu0 0.0
    %1342 = vmatpush1.msra.mxu0 %v150
    %1343 = vmatprep.subr.mxu0 0.0
    %1344 = vmatpush1.msra.mxu0 %v153
    %1345 = vmatprep.subr.mxu0 0.0
    %1346 = vmatpush1.msra.mxu0 %v156
    %1347 = vmatprep.subr.mxu0 0.0
    %1348 = vmatpush1.msra.mxu0 %v159
    %1349 = vmatprep.subr.mxu0 0.0
    %1350 = vmatpush1.msra.mxu0 %v162
    %1351 = vmatprep.subr.mxu0 0.0
    %1352 = vmatpush1.msra.mxu0 %v165
    %1353 = vmatprep.subr.mxu0 0.0
    %1354 = vmatpush1.msra.mxu0 %v168
    %1355 = vmatprep.subr.mxu0 0.0
    %1356 = vmatpush1.msra.mxu0 %v171
    %1357 = vmatprep.subr.mxu0 0.0
    %1358 = vmatpush1.msra.mxu0 %v174
    %1359 = vmatprep.subr.mxu0 0.0
    %1360 = vmatpush1.msra.mxu0 %v177
    %1361 = vmatprep.subr.mxu0 0.0
    %1362 = vmatpush1.msra.mxu0 %v180
    %1363 = vmatprep.subr.mxu0 0.0
    %1364 = vmatpush1.msra.mxu0 %v183
    %1365 = vmatprep.subr.mxu0 0.0
    %1366 = vmatpush1.msra.mxu0 %v186
    %1367 = vmatprep.subr.mxu0 0.0
    %1368 = vmatpush1.msra.mxu0 %v189
    %1369 = vmatprep.subr.mxu0 0.0
    %1370 = vmatpush1.msra.mxu0 0.0
    %1371 = vmatprep.subr.mxu0 0.0
    %1372 = vmatpush1.msra.mxu0 0.0
    %1373 = vmatprep.subr.mxu0 0.0
    %1374 = vmatpush1.msra.mxu0 0.0
    %1375 = vmatprep.subr.mxu0 0.0
    %1376 = vmatpush1.msra.mxu0 0.0
    %1377 = vmatprep.subr.mxu0 0.0
    %1378 = vmatpush1.msra.mxu0 0.0
    %1379 = vmatprep.subr.mxu0 0.0
    %1380 = vmatpush1.msra.mxu0 0.0
    %1381 = vmatprep.subr.mxu0 0.0
    %1382 = vmatpush1.msra.mxu0 0.0
    %1383 = vmatprep.subr.mxu0 0.0
    %1384 = vmatpush1.msra.mxu0 0.0
    %1385 = vmatprep.subr.mxu0 0.0
    %1386 = vmatpush1.msra.mxu0 0.0
    %1387 = vmatprep.subr.mxu0 0.0
    %1388 = vmatpush1.msra.mxu0 0.0
    %1389 = vmatprep.subr.mxu0 0.0
    %1390 = vmatpush1.msra.mxu0 0.0
    %1391 = vmatprep.subr.mxu0 0.0
    %1392 = vmatpush1.msra.mxu0 0.0
    %1393 = vmatprep.subr.mxu0 0.0
    %1394 = vmatpush1.msra.mxu0 0.0
    %1395 = vmatprep.subr.mxu0 0.0
    %1396 = vmatpush1.msra.mxu0 0.0
    %1397 = vmatprep.subr.mxu0 0.0
    %1398 = vmatpush1.msra.mxu0 0.0
    %1399 = vmatprep.subr.mxu0 0.0
    %1400 = vmatpush1.msra.mxu0 0.0
    %1401 = vmatprep.mubr.f32.mxu0 0.0
    %1402 = vmatmul.mubr.f32.gmra.mrb[0].mxu0 %v1120
    %v1403 = vpop.f32.mrb[0].mxu0
    %v1404 = vadd.f32 0.0, %v1403
    %v1405 = vpop.f32.mrb[0].mxu0
    %1406 = vdwg.mxu0
    %v1407 = vadd.f32 %v1192, %v1333
    %v1408 = vxor.u32 %v1407, 2147483648
    %v1409 = vmul.f32 %v1408, 1.442695
    %v1410 = vpow.pop %v1409
    %v1411 = vadd.f32 %v1410, 1.0
    %v1412 = vrcp.pop %v1411
    %v1413 = vmul.f32 1.0, %v1412
    %v1414 = vadd.f32 %v1194, %v1335
    %v1415 = vxor.u32 %v1414, 2147483648
    %v1416 = vmul.f32 %v1415, 1.442695
    %v1417 = vpow.pop %v1416
    %v1418 = vadd.f32 %v1417, 1.0
    %v1419 = vrcp.pop %v1418
    %v1420 = vmul.f32 1.0, %v1419
    %v1421 = vadd.f32 %v1404, %v496
    %v1422 = vmul.f32 %v1413, %v1421
    %v1423 = vadd.f32 %v1263, %v1422
    %v1424 = vtanh.pop %v1423
    %v1425 = vsub.f32 1.0, %v1420
    %v1426 = vmul.f32 %v1425, %v1424
    %v1427 = vmul.f32 %v1420, %v1120
    %v1428 = vadd.f32 %v1426, %v1427
    %s1429 = scalar_lea.vmem [#allocation12], 24
    %1430 = vst [vmem:[%s1429] sm:$0xff] %v1428
    %s1431 = scalar_lea.vmem [#allocation3], 32
    %v1432 = vld [vmem:[%s1431] sm:$0xff]
    %1433 = vmatprep.subr.mxu0 %v95
    %1434 = vmatpush1.msra.mxu0 %v94
    %1435 = vmatprep.subr.mxu0 %v98
    %1436 = vmatpush1.msra.mxu0 %v97
    %1437 = vmatprep.subr.mxu0 %v101
    %1438 = vmatpush1.msra.mxu0 %v100
    %1439 = vmatprep.subr.mxu0 %v104
    %1440 = vmatpush1.msra.mxu0 %v103
    %1441 = vmatprep.subr.mxu0 %v107
    %1442 = vmatpush1.msra.mxu0 %v106
    %1443 = vmatprep.subr.mxu0 %v110
    %1444 = vmatpush1.msra.mxu0 %v109
    %1445 = vmatprep.subr.mxu0 %v113
    %1446 = vmatpush1.msra.mxu0 %v112
    %1447 = vmatprep.subr.mxu0 %v116
    %1448 = vmatpush1.msra.mxu0 %v115
    %1449 = vmatprep.subr.mxu0 %v119
    %1450 = vmatpush1.msra.mxu0 %v118
    %1451 = vmatprep.subr.mxu0 %v122
    %1452 = vmatpush1.msra.mxu0 %v121
    %1453 = vmatprep.subr.mxu0 %v125
    %1454 = vmatpush1.msra.mxu0 %v124
    %1455 = vmatprep.subr.mxu0 %v128
    %1456 = vmatpush1.msra.mxu0 %v127
    %1457 = vmatprep.subr.mxu0 %v131
    %1458 = vmatpush1.msra.mxu0 %v130
    %1459 = vmatprep.subr.mxu0 %v134
    %1460 = vmatpush1.msra.mxu0 %v133
    %1461 = vmatprep.subr.mxu0 %v137
    %1462 = vmatpush1.msra.mxu0 %v136
    %1463 = vmatprep.subr.mxu0 %v140
    %1464 = vmatpush1.msra.mxu0 %v139
    %1465 = vmatprep.subr.mxu0 0.0
    %1466 = vmatpush1.msra.mxu0 0.0
    %1467 = vmatprep.subr.mxu0 0.0
    %1468 = vmatpush1.msra.mxu0 0.0
    %1469 = vmatprep.subr.mxu0 0.0
    %1470 = vmatpush1.msra.mxu0 0.0
    %1471 = vmatprep.subr.mxu0 0.0
    %1472 = vmatpush1.msra.mxu0 0.0
    %1473 = vmatprep.subr.mxu0 0.0
    %1474 = vmatpush1.msra.mxu0 0.0
    %1475 = vmatprep.subr.mxu0 0.0
    %1476 = vmatpush1.msra.mxu0 0.0
    %1477 = vmatprep.subr.mxu0 0.0
    %1478 = vmatpush1.msra.mxu0 0.0
    %1479 = vmatprep.subr.mxu0 0.0
    %1480 = vmatpush1.msra.mxu0 0.0
    %1481 = vmatprep.subr.mxu0 0.0
    %1482 = vmatpush1.msra.mxu0 0.0
    %1483 = vmatprep.subr.mxu0 0.0
    %1484 = vmatpush1.msra.mxu0 0.0
    %1485 = vmatprep.subr.mxu0 0.0
    %1486 = vmatpush1.msra.mxu0 0.0
    %1487 = vmatprep.subr.mxu0 0.0
    %1488 = vmatpush1.msra.mxu0 0.0
    %1489 = vmatprep.subr.mxu0 0.0
    %1490 = vmatpush1.msra.mxu0 0.0
    %1491 = vmatprep.subr.mxu0 0.0
    %1492 = vmatpush1.msra.mxu0 0.0
    %1493 = vmatprep.subr.mxu0 0.0
    %1494 = vmatpush1.msra.mxu0 0.0
    %1495 = vmatprep.subr.mxu0 0.0
    %1496 = vmatpush1.msra.mxu0 0.0
    %1497 = vmatprep.mubr.f32.mxu0 0.0
    %1498 = vmatmul.mubr.f32.gmra.mrb[0].mxu0 %v1432
    %v1499 = vpop.f32.mrb[0].mxu0
    %v1500 = vadd.f32 %v190, %v1499
    %v1501 = vpop.f32.mrb[0].mxu0
    %v1502 = vadd.f32 %v191, %v1501
    %1503 = vdwg.mxu0
    %1504 = vmatprep.subr.mxu0 0.0
    %1505 = vmatpush1.msra.mxu0 %v96
    %1506 = vmatprep.subr.mxu0 0.0
    %1507 = vmatpush1.msra.mxu0 %v99
    %1508 = vmatprep.subr.mxu0 0.0
    %1509 = vmatpush1.msra.mxu0 %v102
    %1510 = vmatprep.subr.mxu0 0.0
    %1511 = vmatpush1.msra.mxu0 %v105
    %1512 = vmatprep.subr.mxu0 0.0
    %1513 = vmatpush1.msra.mxu0 %v108
    %1514 = vmatprep.subr.mxu0 0.0
    %1515 = vmatpush1.msra.mxu0 %v111
    %1516 = vmatprep.subr.mxu0 0.0
    %1517 = vmatpush1.msra.mxu0 %v114
    %1518 = vmatprep.subr.mxu0 0.0
    %1519 = vmatpush1.msra.mxu0 %v117
    %1520 = vmatprep.subr.mxu0 0.0
    %1521 = vmatpush1.msra.mxu0 %v120
    %1522 = vmatprep.subr.mxu0 0.0
    %1523 = vmatpush1.msra.mxu0 %v123
    %1524 = vmatprep.subr.mxu0 0.0
    %1525 = vmatpush1.msra.mxu0 %v126
    %1526 = vmatprep.subr.mxu0 0.0
    %1527 = vmatpush1.msra.mxu0 %v129
    %1528 = vmatprep.subr.mxu0 0.0
    %1529 = vmatpush1.msra.mxu0 %v132
    %1530 = vmatprep.subr.mxu0 0.0
    %1531 = vmatpush1.msra.mxu0 %v135
    %1532 = vmatprep.subr.mxu0 0.0
    %1533 = vmatpush1.msra.mxu0 %v138
    %1534 = vmatprep.subr.mxu0 0.0
    %1535 = vmatpush1.msra.mxu0 %v141
    %1536 = vmatprep.subr.mxu0 0.0
    %1537 = vmatpush1.msra.mxu0 0.0
    %1538 = vmatprep.subr.mxu0 0.0
    %1539 = vmatpush1.msra.mxu0 0.0
    %1540 = vmatprep.subr.mxu0 0.0
    %1541 = vmatpush1.msra.mxu0 0.0
    %1542 = vmatprep.subr.mxu0 0.0
    %1543 = vmatpush1.msra.mxu0 0.0
    %1544 = vmatprep.subr.mxu0 0.0
    %1545 = vmatpush1.msra.mxu0 0.0
    %1546 = vmatprep.subr.mxu0 0.0
    %1547 = vmatpush1.msra.mxu0 0.0
    %1548 = vmatprep.subr.mxu0 0.0
    %1549 = vmatpush1.msra.mxu0 0.0
    %1550 = vmatprep.subr.mxu0 0.0
    %1551 = vmatpush1.msra.mxu0 0.0
    %1552 = vmatprep.subr.mxu0 0.0
    %1553 = vmatpush1.msra.mxu0 0.0
    %1554 = vmatprep.subr.mxu0 0.0
    %1555 = vmatpush1.msra.mxu0 0.0
    %1556 = vmatprep.subr.mxu0 0.0
    %1557 = vmatpush1.msra.mxu0 0.0
    %1558 = vmatprep.subr.mxu0 0.0
    %1559 = vmatpush1.msra.mxu0 0.0
    %1560 = vmatprep.subr.mxu0 0.0
    %1561 = vmatpush1.msra.mxu0 0.0
    %1562 = vmatprep.subr.mxu0 0.0
    %1563 = vmatpush1.msra.mxu0 0.0
    %1564 = vmatprep.subr.mxu0 0.0
    %1565 = vmatpush1.msra.mxu0 0.0
    %1566 = vmatprep.subr.mxu0 0.0
    %1567 = vmatpush1.msra.mxu0 0.0
    %1568 = vmatprep.mubr.f32.mxu0 0.0
    %1569 = vmatmul.mubr.f32.gmra.mrb[0].mxu0 %v1432
    %v1570 = vpop.f32.mrb[0].mxu0
    %v1571 = vadd.f32 %v192, %v1570
    %v1572 = vpop.f32.mrb[0].mxu0
    %1573 = vdwg.mxu0
    %1574 = vmatprep.subr.mxu0 %v143
    %1575 = vmatpush1.msra.mxu0 %v142
    %1576 = vmatprep.subr.mxu0 %v146
    %1577 = vmatpush1.msra.mxu0 %v145
    %1578 = vmatprep.subr.mxu0 %v149
    %1579 = vmatpush1.msra.mxu0 %v148
    %1580 = vmatprep.subr.mxu0 %v152
    %1581 = vmatpush1.msra.mxu0 %v151
    %1582 = vmatprep.subr.mxu0 %v155
    %1583 = vmatpush1.msra.mxu0 %v154
    %1584 = vmatprep.subr.mxu0 %v158
    %1585 = vmatpush1.msra.mxu0 %v157
    %1586 = vmatprep.subr.mxu0 %v161
    %1587 = vmatpush1.msra.mxu0 %v160
    %1588 = vmatprep.subr.mxu0 %v164
    %1589 = vmatpush1.msra.mxu0 %v163
    %1590 = vmatprep.subr.mxu0 %v167
    %1591 = vmatpush1.msra.mxu0 %v166
    %1592 = vmatprep.subr.mxu0 %v170
    %1593 = vmatpush1.msra.mxu0 %v169
    %1594 = vmatprep.subr.mxu0 %v173
    %1595 = vmatpush1.msra.mxu0 %v172
    %1596 = vmatprep.subr.mxu0 %v176
    %1597 = vmatpush1.msra.mxu0 %v175
    %1598 = vmatprep.subr.mxu0 %v179
    %1599 = vmatpush1.msra.mxu0 %v178
    %1600 = vmatprep.subr.mxu0 %v182
    %1601 = vmatpush1.msra.mxu0 %v181
    %1602 = vmatprep.subr.mxu0 %v185
    %1603 = vmatpush1.msra.mxu0 %v184
    %1604 = vmatprep.subr.mxu0 %v188
    %1605 = vmatpush1.msra.mxu0 %v187
    %1606 = vmatprep.subr.mxu0 0.0
    %1607 = vmatpush1.msra.mxu0 0.0
    %1608 = vmatprep.subr.mxu0 0.0
    %1609 = vmatpush1.msra.mxu0 0.0
    %1610 = vmatprep.subr.mxu0 0.0
    %1611 = vmatpush1.msra.mxu0 0.0
    %1612 = vmatprep.subr.mxu0 0.0
    %1613 = vmatpush1.msra.mxu0 0.0
    %1614 = vmatprep.subr.mxu0 0.0
    %1615 = vmatpush1.msra.mxu0 0.0
    %1616 = vmatprep.subr.mxu0 0.0
    %1617 = vmatpush1.msra.mxu0 0.0
    %1618 = vmatprep.subr.mxu0 0.0
    %1619 = vmatpush1.msra.mxu0 0.0
    %1620 = vmatprep.subr.mxu0 0.0
    %1621 = vmatpush1.msra.mxu0 0.0
    %1622 = vmatprep.subr.mxu0 0.0
    %1623 = vmatpush1.msra.mxu0 0.0
    %1624 = vmatprep.subr.mxu0 0.0
    %1625 = vmatpush1.msra.mxu0 0.0
    %1626 = vmatprep.subr.mxu0 0.0
    %1627 = vmatpush1.msra.mxu0 0.0
    %1628 = vmatprep.subr.mxu0 0.0
    %1629 = vmatpush1.msra.mxu0 0.0
    %1630 = vmatprep.subr.mxu0 0.0
    %1631 = vmatpush1.msra.mxu0 0.0
    %1632 = vmatprep.subr.mxu0 0.0
    %1633 = vmatpush1.msra.mxu0 0.0
    %1634 = vmatprep.subr.mxu0 0.0
    %1635 = vmatpush1.msra.mxu0 0.0
    %1636 = vmatprep.subr.mxu0 0.0
    %1637 = vmatpush1.msra.mxu0 0.0
    %1638 = vmatprep.mubr.f32.mxu0 0.0
    %1639 = vmatmul.mubr.f32.gmra.mrb[0].mxu0 %v1428
    %v1640 = vpop.f32.mrb[0].mxu0
    %v1641 = vadd.f32 0.0, %v1640
    %v1642 = vpop.f32.mrb[0].mxu0
    %v1643 = vadd.f32 0.0, %v1642
    %1644 = vdwg.mxu0
    %1645 = vmatprep.subr.mxu0 0.0
    %1646 = vmatpush1.msra.mxu0 %v144
    %1647 = vmatprep.subr.mxu0 0.0
    %1648 = vmatpush1.msra.mxu0 %v147
    %1649 = vmatprep.subr.mxu0 0.0
    %1650 = vmatpush1.msra.mxu0 %v150
    %1651 = vmatprep.subr.mxu0 0.0
    %1652 = vmatpush1.msra.mxu0 %v153
    %1653 = vmatprep.subr.mxu0 0.0
    %1654 = vmatpush1.msra.mxu0 %v156
    %1655 = vmatprep.subr.mxu0 0.0
    %1656 = vmatpush1.msra.mxu0 %v159
    %1657 = vmatprep.subr.mxu0 0.0
    %1658 = vmatpush1.msra.mxu0 %v162
    %1659 = vmatprep.subr.mxu0 0.0
    %1660 = vmatpush1.msra.mxu0 %v165
    %1661 = vmatprep.subr.mxu0 0.0
    %1662 = vmatpush1.msra.mxu0 %v168
    %1663 = vmatprep.subr.mxu0 0.0
    %1664 = vmatpush1.msra.mxu0 %v171
    %1665 = vmatprep.subr.mxu0 0.0
    %1666 = vmatpush1.msra.mxu0 %v174
    %1667 = vmatprep.subr.mxu0 0.0
    %1668 = vmatpush1.msra.mxu0 %v177
    %1669 = vmatprep.subr.mxu0 0.0
    %1670 = vmatpush1.msra.mxu0 %v180
    %1671 = vmatprep.subr.mxu0 0.0
    %1672 = vmatpush1.msra.mxu0 %v183
    %1673 = vmatprep.subr.mxu0 0.0
    %1674 = vmatpush1.msra.mxu0 %v186
    %1675 = vmatprep.subr.mxu0 0.0
    %1676 = vmatpush1.msra.mxu0 %v189
    %1677 = vmatprep.subr.mxu0 0.0
    %1678 = vmatpush1.msra.mxu0 0.0
    %1679 = vmatprep.subr.mxu0 0.0
    %1680 = vmatpush1.msra.mxu0 0.0
    %1681 = vmatprep.subr.mxu0 0.0
    %1682 = vmatpush1.msra.mxu0 0.0
    %1683 = vmatprep.subr.mxu0 0.0
    %1684 = vmatpush1.msra.mxu0 0.0
    %1685 = vmatprep.subr.mxu0 0.0
    %1686 = vmatpush1.msra.mxu0 0.0
    %1687 = vmatprep.subr.mxu0 0.0
    %1688 = vmatpush1.msra.mxu0 0.0
    %1689 = vmatprep.subr.mxu0 0.0
    %1690 = vmatpush1.msra.mxu0 0.0
    %1691 = vmatprep.subr.mxu0 0.0
    %1692 = vmatpush1.msra.mxu0 0.0
    %1693 = vmatprep.subr.mxu0 0.0
    %1694 = vmatpush1.msra.mxu0 0.0
    %1695 = vmatprep.subr.mxu0 0.0
    %1696 = vmatpush1.msra.mxu0 0.0
    %1697 = vmatprep.subr.mxu0 0.0
    %1698 = vmatpush1.msra.mxu0 0.0
    %1699 = vmatprep.subr.mxu0 0.0
    %1700 = vmatpush1.msra.mxu0 0.0
    %1701 = vmatprep.subr.mxu0 0.0
    %1702 = vmatpush1.msra.mxu0 0.0
    %1703 = vmatprep.subr.mxu0 0.0
    %1704 = vmatpush1.msra.mxu0 0.0
    %1705 = vmatprep.subr.mxu0 0.0
    %1706 = vmatpush1.msra.mxu0 0.0
    %1707 = vmatprep.subr.mxu0 0.0
    %1708 = vmatpush1.msra.mxu0 0.0
    %1709 = vmatprep.mubr.f32.mxu0 0.0
    %1710 = vmatmul.mubr.f32.gmra.mrb[0].mxu0 %v1428
    %v1711 = vpop.f32.mrb[0].mxu0
    %v1712 = vadd.f32 0.0, %v1711
    %v1713 = vpop.f32.mrb[0].mxu0
    %1714 = vdwg.mxu0
    %v1715 = vadd.f32 %v1500, %v1641
    %v1716 = vxor.u32 %v1715, 2147483648
    %v1717 = vmul.f32 %v1716, 1.442695
    %v1718 = vpow.pop %v1717
    %v1719 = vadd.f32 %v1718, 1.0
    %v1720 = vrcp.pop %v1719
    %v1721 = vmul.f32 1.0, %v1720
    %v1722 = vadd.f32 %v1502, %v1643
    %v1723 = vxor.u32 %v1722, 2147483648
    %v1724 = vmul.f32 %v1723, 1.442695
    %v1725 = vpow.pop %v1724
    %v1726 = vadd.f32 %v1725, 1.0
    %v1727 = vrcp.pop %v1726
    %v1728 = vmul.f32 1.0, %v1727
    %v1729 = vadd.f32 %v1712, %v496
    %v1730 = vmul.f32 %v1721, %v1729
    %v1731 = vadd.f32 %v1571, %v1730
    %v1732 = vtanh.pop %v1731
    %v1733 = vsub.f32 1.0, %v1728
    %v1734 = vmul.f32 %v1733, %v1732
    %v1735 = vmul.f32 %v1728, %v1428
    %v1736 = vadd.f32 %v1734, %v1735
    %s1737 = scalar_lea.vmem [#allocation12], 32
    %1738 = vst [vmem:[%s1737] sm:$0xff] %v1736
    %s1739 = scalar_lea.vmem [#allocation3], 40
    %v1740 = vld [vmem:[%s1739] sm:$0xff]
    %1741 = vmatprep.subr.mxu0 %v95
    %1742 = vmatpush1.msra.mxu0 %v94
    %1743 = vmatprep.subr.mxu0 %v98
    %1744 = vmatpush1.msra.mxu0 %v97
    %1745 = vmatprep.subr.mxu0 %v101
    %1746 = vmatpush1.msra.mxu0 %v100
    %1747 = vmatprep.subr.mxu0 %v104
    %1748 = vmatpush1.msra.mxu0 %v103
    %1749 = vmatprep.subr.mxu0 %v107
    %1750 = vmatpush1.msra.mxu0 %v106
    %1751 = vmatprep.subr.mxu0 %v110
    %1752 = vmatpush1.msra.mxu0 %v109
    %1753 = vmatprep.subr.mxu0 %v113
    %1754 = vmatpush1.msra.mxu0 %v112
    %1755 = vmatprep.subr.mxu0 %v116
    %1756 = vmatpush1.msra.mxu0 %v115
    %1757 = vmatprep.subr.mxu0 %v119
    %1758 = vmatpush1.msra.mxu0 %v118
    %1759 = vmatprep.subr.mxu0 %v122
    %1760 = vmatpush1.msra.mxu0 %v121
    %1761 = vmatprep.subr.mxu0 %v125
    %1762 = vmatpush1.msra.mxu0 %v124
    %1763 = vmatprep.subr.mxu0 %v128
    %1764 = vmatpush1.msra.mxu0 %v127
    %1765 = vmatprep.subr.mxu0 %v131
    %1766 = vmatpush1.msra.mxu0 %v130
    %1767 = vmatprep.subr.mxu0 %v134
    %1768 = vmatpush1.msra.mxu0 %v133
    %1769 = vmatprep.subr.mxu0 %v137
    %1770 = vmatpush1.msra.mxu0 %v136
    %1771 = vmatprep.subr.mxu0 %v140
    %1772 = vmatpush1.msra.mxu0 %v139
    %1773 = vmatprep.subr.mxu0 0.0
    %1774 = vmatpush1.msra.mxu0 0.0
    %1775 = vmatprep.subr.mxu0 0.0
    %1776 = vmatpush1.msra.mxu0 0.0
    %1777 = vmatprep.subr.mxu0 0.0
    %1778 = vmatpush1.msra.mxu0 0.0
    %1779 = vmatprep.subr.mxu0 0.0
    %1780 = vmatpush1.msra.mxu0 0.0
    %1781 = vmatprep.subr.mxu0 0.0
    %1782 = vmatpush1.msra.mxu0 0.0
    %1783 = vmatprep.subr.mxu0 0.0
    %1784 = vmatpush1.msra.mxu0 0.0
    %1785 = vmatprep.subr.mxu0 0.0
    %1786 = vmatpush1.msra.mxu0 0.0
    %1787 = vmatprep.subr.mxu0 0.0
    %1788 = vmatpush1.msra.mxu0 0.0
    %1789 = vmatprep.subr.mxu0 0.0
    %1790 = vmatpush1.msra.mxu0 0.0
    %1791 = vmatprep.subr.mxu0 0.0
    %1792 = vmatpush1.msra.mxu0 0.0
    %1793 = vmatprep.subr.mxu0 0.0
    %1794 = vmatpush1.msra.mxu0 0.0
    %1795 = vmatprep.subr.mxu0 0.0
    %1796 = vmatpush1.msra.mxu0 0.0
    %1797 = vmatprep.subr.mxu0 0.0
    %1798 = vmatpush1.msra.mxu0 0.0
    %1799 = vmatprep.subr.mxu0 0.0
    %1800 = vmatpush1.msra.mxu0 0.0
    %1801 = vmatprep.subr.mxu0 0.0
    %1802 = vmatpush1.msra.mxu0 0.0
    %1803 = vmatprep.subr.mxu0 0.0
    %1804 = vmatpush1.msra.mxu0 0.0
    %1805 = vmatprep.mubr.f32.mxu0 0.0
    %1806 = vmatmul.mubr.f32.gmra.mrb[0].mxu0 %v1740
    %v1807 = vpop.f32.mrb[0].mxu0
    %v1808 = vadd.f32 %v190, %v1807
    %v1809 = vpop.f32.mrb[0].mxu0
    %v1810 = vadd.f32 %v191, %v1809
    %1811 = vdwg.mxu0
    %1812 = vmatprep.subr.mxu0 0.0
    %1813 = vmatpush1.msra.mxu0 %v96
    %1814 = vmatprep.subr.mxu0 0.0
    %1815 = vmatpush1.msra.mxu0 %v99
    %1816 = vmatprep.subr.mxu0 0.0
    %1817 = vmatpush1.msra.mxu0 %v102
    %1818 = vmatprep.subr.mxu0 0.0
    %1819 = vmatpush1.msra.mxu0 %v105
    %1820 = vmatprep.subr.mxu0 0.0
    %1821 = vmatpush1.msra.mxu0 %v108
    %1822 = vmatprep.subr.mxu0 0.0
    %1823 = vmatpush1.msra.mxu0 %v111
    %1824 = vmatprep.subr.mxu0 0.0
    %1825 = vmatpush1.msra.mxu0 %v114
    %1826 = vmatprep.subr.mxu0 0.0
    %1827 = vmatpush1.msra.mxu0 %v117
    %1828 = vmatprep.subr.mxu0 0.0
    %1829 = vmatpush1.msra.mxu0 %v120
    %1830 = vmatprep.subr.mxu0 0.0
    %1831 = vmatpush1.msra.mxu0 %v123
    %1832 = vmatprep.subr.mxu0 0.0
    %1833 = vmatpush1.msra.mxu0 %v126
    %1834 = vmatprep.subr.mxu0 0.0
    %1835 = vmatpush1.msra.mxu0 %v129
    %1836 = vmatprep.subr.mxu0 0.0
    %1837 = vmatpush1.msra.mxu0 %v132
    %1838 = vmatprep.subr.mxu0 0.0
    %1839 = vmatpush1.msra.mxu0 %v135
    %1840 = vmatprep.subr.mxu0 0.0
    %1841 = vmatpush1.msra.mxu0 %v138
    %1842 = vmatprep.subr.mxu0 0.0
    %1843 = vmatpush1.msra.mxu0 %v141
    %1844 = vmatprep.subr.mxu0 0.0
    %1845 = vmatpush1.msra.mxu0 0.0
    %1846 = vmatprep.subr.mxu0 0.0
    %1847 = vmatpush1.msra.mxu0 0.0
    %1848 = vmatprep.subr.mxu0 0.0
    %1849 = vmatpush1.msra.mxu0 0.0
    %1850 = vmatprep.subr.mxu0 0.0
    %1851 = vmatpush1.msra.mxu0 0.0
    %1852 = vmatprep.subr.mxu0 0.0
    %1853 = vmatpush1.msra.mxu0 0.0
    %1854 = vmatprep.subr.mxu0 0.0
    %1855 = vmatpush1.msra.mxu0 0.0
    %1856 = vmatprep.subr.mxu0 0.0
    %1857 = vmatpush1.msra.mxu0 0.0
    %1858 = vmatprep.subr.mxu0 0.0
    %1859 = vmatpush1.msra.mxu0 0.0
    %1860 = vmatprep.subr.mxu0 0.0
    %1861 = vmatpush1.msra.mxu0 0.0
    %1862 = vmatprep.subr.mxu0 0.0
    %1863 = vmatpush1.msra.mxu0 0.0
    %1864 = vmatprep.subr.mxu0 0.0
    %1865 = vmatpush1.msra.mxu0 0.0
    %1866 = vmatprep.subr.mxu0 0.0
    %1867 = vmatpush1.msra.mxu0 0.0
    %1868 = vmatprep.subr.mxu0 0.0
    %1869 = vmatpush1.msra.mxu0 0.0
    %1870 = vmatprep.subr.mxu0 0.0
    %1871 = vmatpush1.msra.mxu0 0.0
    %1872 = vmatprep.subr.mxu0 0.0
    %1873 = vmatpush1.msra.mxu0 0.0
    %1874 = vmatprep.subr.mxu0 0.0
    %1875 = vmatpush1.msra.mxu0 0.0
    %1876 = vmatprep.mubr.f32.mxu0 0.0
    %1877 = vmatmul.mubr.f32.gmra.mrb[0].mxu0 %v1740
    %v1878 = vpop.f32.mrb[0].mxu0
    %v1879 = vadd.f32 %v192, %v1878
    %v1880 = vpop.f32.mrb[0].mxu0
    %1881 = vdwg.mxu0
    %1882 = vmatprep.subr.mxu0 %v143
    %1883 = vmatpush1.msra.mxu0 %v142
    %1884 = vmatprep.subr.mxu0 %v146
    %1885 = vmatpush1.msra.mxu0 %v145
    %1886 = vmatprep.subr.mxu0 %v149
    %1887 = vmatpush1.msra.mxu0 %v148
    %1888 = vmatprep.subr.mxu0 %v152
    %1889 = vmatpush1.msra.mxu0 %v151
    %1890 = vmatprep.subr.mxu0 %v155
    %1891 = vmatpush1.msra.mxu0 %v154
    %1892 = vmatprep.subr.mxu0 %v158
    %1893 = vmatpush1.msra.mxu0 %v157
    %1894 = vmatprep.subr.mxu0 %v161
    %1895 = vmatpush1.msra.mxu0 %v160
    %1896 = vmatprep.subr.mxu0 %v164
    %1897 = vmatpush1.msra.mxu0 %v163
    %1898 = vmatprep.subr.mxu0 %v167
    %1899 = vmatpush1.msra.mxu0 %v166
    %1900 = vmatprep.subr.mxu0 %v170
    %1901 = vmatpush1.msra.mxu0 %v169
    %1902 = vmatprep.subr.mxu0 %v173
    %1903 = vmatpush1.msra.mxu0 %v172
    %1904 = vmatprep.subr.mxu0 %v176
    %1905 = vmatpush1.msra.mxu0 %v175
    %1906 = vmatprep.subr.mxu0 %v179
    %1907 = vmatpush1.msra.mxu0 %v178
    %1908 = vmatprep.subr.mxu0 %v182
    %1909 = vmatpush1.msra.mxu0 %v181
    %1910 = vmatprep.subr.mxu0 %v185
    %1911 = vmatpush1.msra.mxu0 %v184
    %1912 = vmatprep.subr.mxu0 %v188
    %1913 = vmatpush1.msra.mxu0 %v187
    %1914 = vmatprep.subr.mxu0 0.0
    %1915 = vmatpush1.msra.mxu0 0.0
    %1916 = vmatprep.subr.mxu0 0.0
    %1917 = vmatpush1.msra.mxu0 0.0
    %1918 = vmatprep.subr.mxu0 0.0
    %1919 = vmatpush1.msra.mxu0 0.0
    %1920 = vmatprep.subr.mxu0 0.0
    %1921 = vmatpush1.msra.mxu0 0.0
    %1922 = vmatprep.subr.mxu0 0.0
    %1923 = vmatpush1.msra.mxu0 0.0
    %1924 = vmatprep.subr.mxu0 0.0
    %1925 = vmatpush1.msra.mxu0 0.0
    %1926 = vmatprep.subr.mxu0 0.0
    %1927 = vmatpush1.msra.mxu0 0.0
    %1928 = vmatprep.subr.mxu0 0.0
    %1929 = vmatpush1.msra.mxu0 0.0
    %1930 = vmatprep.subr.mxu0 0.0
    %1931 = vmatpush1.msra.mxu0 0.0
    %1932 = vmatprep.subr.mxu0 0.0
    %1933 = vmatpush1.msra.mxu0 0.0
    %1934 = vmatprep.subr.mxu0 0.0
    %1935 = vmatpush1.msra.mxu0 0.0
    %1936 = vmatprep.subr.mxu0 0.0
    %1937 = vmatpush1.msra.mxu0 0.0
    %1938 = vmatprep.subr.mxu0 0.0
    %1939 = vmatpush1.msra.mxu0 0.0
    %1940 = vmatprep.subr.mxu0 0.0
    %1941 = vmatpush1.msra.mxu0 0.0
    %1942 = vmatprep.subr.mxu0 0.0
    %1943 = vmatpush1.msra.mxu0 0.0
    %1944 = vmatprep.subr.mxu0 0.0
    %1945 = vmatpush1.msra.mxu0 0.0
    %1946 = vmatprep.mubr.f32.mxu0 0.0
    %1947 = vmatmul.mubr.f32.gmra.mrb[0].mxu0 %v1736
    %v1948 = vpop.f32.mrb[0].mxu0
    %v1949 = vadd.f32 0.0, %v1948
    %v1950 = vpop.f32.mrb[0].mxu0
    %v1951 = vadd.f32 0.0, %v1950
    %1952 = vdwg.mxu0
    %1953 = vmatprep.subr.mxu0 0.0
    %1954 = vmatpush1.msra.mxu0 %v144
    %1955 = vmatprep.subr.mxu0 0.0
    %1956 = vmatpush1.msra.mxu0 %v147
    %1957 = vmatprep.subr.mxu0 0.0
    %1958 = vmatpush1.msra.mxu0 %v150
    %1959 = vmatprep.subr.mxu0 0.0
    %1960 = vmatpush1.msra.mxu0 %v153
    %1961 = vmatprep.subr.mxu0 0.0
    %1962 = vmatpush1.msra.mxu0 %v156
    %1963 = vmatprep.subr.mxu0 0.0
    %1964 = vmatpush1.msra.mxu0 %v159
    %1965 = vmatprep.subr.mxu0 0.0
    %1966 = vmatpush1.msra.mxu0 %v162
    %1967 = vmatprep.subr.mxu0 0.0
    %1968 = vmatpush1.msra.mxu0 %v165
    %1969 = vmatprep.subr.mxu0 0.0
    %1970 = vmatpush1.msra.mxu0 %v168
    %1971 = vmatprep.subr.mxu0 0.0
    %1972 = vmatpush1.msra.mxu0 %v171
    %1973 = vmatprep.subr.mxu0 0.0
    %1974 = vmatpush1.msra.mxu0 %v174
    %1975 = vmatprep.subr.mxu0 0.0
    %1976 = vmatpush1.msra.mxu0 %v177
    %1977 = vmatprep.subr.mxu0 0.0
    %1978 = vmatpush1.msra.mxu0 %v180
    %1979 = vmatprep.subr.mxu0 0.0
    %1980 = vmatpush1.msra.mxu0 %v183
    %1981 = vmatprep.subr.mxu0 0.0
    %1982 = vmatpush1.msra.mxu0 %v186
    %1983 = vmatprep.subr.mxu0 0.0
    %1984 = vmatpush1.msra.mxu0 %v189
    %1985 = vmatprep.subr.mxu0 0.0
    %1986 = vmatpush1.msra.mxu0 0.0
    %1987 = vmatprep.subr.mxu0 0.0
    %1988 = vmatpush1.msra.mxu0 0.0
    %1989 = vmatprep.subr.mxu0 0.0
    %1990 = vmatpush1.msra.mxu0 0.0
    %1991 = vmatprep.subr.mxu0 0.0
    %1992 = vmatpush1.msra.mxu0 0.0
    %1993 = vmatprep.subr.mxu0 0.0
    %1994 = vmatpush1.msra.mxu0 0.0
    %1995 = vmatprep.subr.mxu0 0.0
    %1996 = vmatpush1.msra.mxu0 0.0
    %1997 = vmatprep.subr.mxu0 0.0
    %1998 = vmatpush1.msra.mxu0 0.0
    %1999 = vmatprep.subr.mxu0 0.0
    %2000 = vmatpush1.msra.mxu0 0.0
    %2001 = vmatprep.subr.mxu0 0.0
    %2002 = vmatpush1.msra.mxu0 0.0
    %2003 = vmatprep.subr.mxu0 0.0
    %2004 = vmatpush1.msra.mxu0 0.0
    %2005 = vmatprep.subr.mxu0 0.0
    %2006 = vmatpush1.msra.mxu0 0.0
    %2007 = vmatprep.subr.mxu0 0.0
    %2008 = vmatpush1.msra.mxu0 0.0
    %2009 = vmatprep.subr.mxu0 0.0
    %2010 = vmatpush1.msra.mxu0 0.0
    %2011 = vmatprep.subr.mxu0 0.0
    %2012 = vmatpush1.msra.mxu0 0.0
    %2013 = vmatprep.subr.mxu0 0.0
    %2014 = vmatpush1.msra.mxu0 0.0
    %2015 = vmatprep.subr.mxu0 0.0
    %2016 = vmatpush1.msra.mxu0 0.0
    %2017 = vmatprep.mubr.f32.mxu0 0.0
    %2018 = vmatmul.mubr.f32.gmra.mrb[0].mxu0 %v1736
    %v2019 = vpop.f32.mrb[0].mxu0
    %v2020 = vadd.f32 0.0, %v2019
    %v2021 = vpop.f32.mrb[0].mxu0
    %2022 = vdwg.mxu0
    %v2023 = vadd.f32 %v1808, %v1949
    %v2024 = vxor.u32 %v2023, 2147483648
    %v2025 = vmul.f32 %v2024, 1.442695
    %v2026 = vpow.pop %v2025
    %v2027 = vadd.f32 %v2026, 1.0
    %v2028 = vrcp.pop %v2027
    %v2029 = vmul.f32 1.0, %v2028
    %v2030 = vadd.f32 %v1810, %v1951
    %v2031 = vxor.u32 %v2030, 2147483648
    %v2032 = vmul.f32 %v2031, 1.442695
    %v2033 = vpow.pop %v2032
    %v2034 = vadd.f32 %v2033, 1.0
    %v2035 = vrcp.pop %v2034
    %v2036 = vmul.f32 1.0, %v2035
    %v2037 = vadd.f32 %v2020, %v496
    %v2038 = vmul.f32 %v2029, %v2037
    %v2039 = vadd.f32 %v1879, %v2038
    %v2040 = vtanh.pop %v2039
    %v2041 = vsub.f32 1.0, %v2036
    %v2042 = vmul.f32 %v2041, %v2040
    %v2043 = vmul.f32 %v2036, %v1736
    %v2044 = vadd.f32 %v2042, %v2043
    %s2045 = scalar_lea.vmem [#allocation12], 40
    %2046 = vst [vmem:[%s2045] sm:$0xff] %v2044
    %s2047 = scalar_lea.vmem [#allocation3], 48
    %v2048 = vld [vmem:[%s2047] sm:$0xff]
    %2049 = vmatprep.subr.mxu0 %v95
    %2050 = vmatpush1.msra.mxu0 %v94
    %2051 = vmatprep.subr.mxu0 %v98
    %2052 = vmatpush1.msra.mxu0 %v97
    %2053 = vmatprep.subr.mxu0 %v101
    %2054 = vmatpush1.msra.mxu0 %v100
    %2055 = vmatprep.subr.mxu0 %v104
    %2056 = vmatpush1.msra.mxu0 %v103
    %2057 = vmatprep.subr.mxu0 %v107
    %2058 = vmatpush1.msra.mxu0 %v106
    %2059 = vmatprep.subr.mxu0 %v110
    %2060 = vmatpush1.msra.mxu0 %v109
    %2061 = vmatprep.subr.mxu0 %v113
    %2062 = vmatpush1.msra.mxu0 %v112
    %2063 = vmatprep.subr.mxu0 %v116
    %2064 = vmatpush1.msra.mxu0 %v115
    %2065 = vmatprep.subr.mxu0 %v119
    %2066 = vmatpush1.msra.mxu0 %v118
    %2067 = vmatprep.subr.mxu0 %v122
    %2068 = vmatpush1.msra.mxu0 %v121
    %2069 = vmatprep.subr.mxu0 %v125
    %2070 = vmatpush1.msra.mxu0 %v124
    %2071 = vmatprep.subr.mxu0 %v128
    %2072 = vmatpush1.msra.mxu0 %v127
    %2073 = vmatprep.subr.mxu0 %v131
    %2074 = vmatpush1.msra.mxu0 %v130
    %2075 = vmatprep.subr.mxu0 %v134
    %2076 = vmatpush1.msra.mxu0 %v133
    %2077 = vmatprep.subr.mxu0 %v137
    %2078 = vmatpush1.msra.mxu0 %v136
    %2079 = vmatprep.subr.mxu0 %v140
    %2080 = vmatpush1.msra.mxu0 %v139
    %2081 = vmatprep.subr.mxu0 0.0
    %2082 = vmatpush1.msra.mxu0 0.0
    %2083 = vmatprep.subr.mxu0 0.0
    %2084 = vmatpush1.msra.mxu0 0.0
    %2085 = vmatprep.subr.mxu0 0.0
    %2086 = vmatpush1.msra.mxu0 0.0
    %2087 = vmatprep.subr.mxu0 0.0
    %2088 = vmatpush1.msra.mxu0 0.0
    %2089 = vmatprep.subr.mxu0 0.0
    %2090 = vmatpush1.msra.mxu0 0.0
    %2091 = vmatprep.subr.mxu0 0.0
    %2092 = vmatpush1.msra.mxu0 0.0
    %2093 = vmatprep.subr.mxu0 0.0
    %2094 = vmatpush1.msra.mxu0 0.0
    %2095 = vmatprep.subr.mxu0 0.0
    %2096 = vmatpush1.msra.mxu0 0.0
    %2097 = vmatprep.subr.mxu0 0.0
    %2098 = vmatpush1.msra.mxu0 0.0
    %2099 = vmatprep.subr.mxu0 0.0
    %2100 = vmatpush1.msra.mxu0 0.0
    %2101 = vmatprep.subr.mxu0 0.0
    %2102 = vmatpush1.msra.mxu0 0.0
    %2103 = vmatprep.subr.mxu0 0.0
    %2104 = vmatpush1.msra.mxu0 0.0
    %2105 = vmatprep.subr.mxu0 0.0
    %2106 = vmatpush1.msra.mxu0 0.0
    %2107 = vmatprep.subr.mxu0 0.0
    %2108 = vmatpush1.msra.mxu0 0.0
    %2109 = vmatprep.subr.mxu0 0.0
    %2110 = vmatpush1.msra.mxu0 0.0
    %2111 = vmatprep.subr.mxu0 0.0
    %2112 = vmatpush1.msra.mxu0 0.0
    %2113 = vmatprep.mubr.f32.mxu0 0.0
    %2114 = vmatmul.mubr.f32.gmra.mrb[0].mxu0 %v2048
    %v2115 = vpop.f32.mrb[0].mxu0
    %v2116 = vadd.f32 %v190, %v2115
    %v2117 = vpop.f32.mrb[0].mxu0
    %v2118 = vadd.f32 %v191, %v2117
    %2119 = vdwg.mxu0
    %2120 = vmatprep.subr.mxu0 0.0
    %2121 = vmatpush1.msra.mxu0 %v96
    %2122 = vmatprep.subr.mxu0 0.0
    %2123 = vmatpush1.msra.mxu0 %v99
    %2124 = vmatprep.subr.mxu0 0.0
    %2125 = vmatpush1.msra.mxu0 %v102
    %2126 = vmatprep.subr.mxu0 0.0
    %2127 = vmatpush1.msra.mxu0 %v105
    %2128 = vmatprep.subr.mxu0 0.0
    %2129 = vmatpush1.msra.mxu0 %v108
    %2130 = vmatprep.subr.mxu0 0.0
    %2131 = vmatpush1.msra.mxu0 %v111
    %2132 = vmatprep.subr.mxu0 0.0
    %2133 = vmatpush1.msra.mxu0 %v114
    %2134 = vmatprep.subr.mxu0 0.0
    %2135 = vmatpush1.msra.mxu0 %v117
    %2136 = vmatprep.subr.mxu0 0.0
    %2137 = vmatpush1.msra.mxu0 %v120
    %2138 = vmatprep.subr.mxu0 0.0
    %2139 = vmatpush1.msra.mxu0 %v123
    %2140 = vmatprep.subr.mxu0 0.0
    %2141 = vmatpush1.msra.mxu0 %v126
    %2142 = vmatprep.subr.mxu0 0.0
    %2143 = vmatpush1.msra.mxu0 %v129
    %2144 = vmatprep.subr.mxu0 0.0
    %2145 = vmatpush1.msra.mxu0 %v132
    %2146 = vmatprep.subr.mxu0 0.0
    %2147 = vmatpush1.msra.mxu0 %v135
    %2148 = vmatprep.subr.mxu0 0.0
    %2149 = vmatpush1.msra.mxu0 %v138
    %2150 = vmatprep.subr.mxu0 0.0
    %2151 = vmatpush1.msra.mxu0 %v141
    %2152 = vmatprep.subr.mxu0 0.0
    %2153 = vmatpush1.msra.mxu0 0.0
    %2154 = vmatprep.subr.mxu0 0.0
    %2155 = vmatpush1.msra.mxu0 0.0
    %2156 = vmatprep.subr.mxu0 0.0
    %2157 = vmatpush1.msra.mxu0 0.0
    %2158 = vmatprep.subr.mxu0 0.0
    %2159 = vmatpush1.msra.mxu0 0.0
    %2160 = vmatprep.subr.mxu0 0.0
    %2161 = vmatpush1.msra.mxu0 0.0
    %2162 = vmatprep.subr.mxu0 0.0
    %2163 = vmatpush1.msra.mxu0 0.0
    %2164 = vmatprep.subr.mxu0 0.0
    %2165 = vmatpush1.msra.mxu0 0.0
    %2166 = vmatprep.subr.mxu0 0.0
    %2167 = vmatpush1.msra.mxu0 0.0
    %2168 = vmatprep.subr.mxu0 0.0
    %2169 = vmatpush1.msra.mxu0 0.0
    %2170 = vmatprep.subr.mxu0 0.0
    %2171 = vmatpush1.msra.mxu0 0.0
    %2172 = vmatprep.subr.mxu0 0.0
    %2173 = vmatpush1.msra.mxu0 0.0
    %2174 = vmatprep.subr.mxu0 0.0
    %2175 = vmatpush1.msra.mxu0 0.0
    %2176 = vmatprep.subr.mxu0 0.0
    %2177 = vmatpush1.msra.mxu0 0.0
    %2178 = vmatprep.subr.mxu0 0.0
    %2179 = vmatpush1.msra.mxu0 0.0
    %2180 = vmatprep.subr.mxu0 0.0
    %2181 = vmatpush1.msra.mxu0 0.0
    %2182 = vmatprep.subr.mxu0 0.0
    %2183 = vmatpush1.msra.mxu0 0.0
    %2184 = vmatprep.mubr.f32.mxu0 0.0
    %2185 = vmatmul.mubr.f32.gmra.mrb[0].mxu0 %v2048
    %v2186 = vpop.f32.mrb[0].mxu0
    %v2187 = vadd.f32 %v192, %v2186
    %v2188 = vpop.f32.mrb[0].mxu0
    %2189 = vdwg.mxu0
    %2190 = vmatprep.subr.mxu0 %v143
    %2191 = vmatpush1.msra.mxu0 %v142
    %2192 = vmatprep.subr.mxu0 %v146
    %2193 = vmatpush1.msra.mxu0 %v145
    %2194 = vmatprep.subr.mxu0 %v149
    %2195 = vmatpush1.msra.mxu0 %v148
    %2196 = vmatprep.subr.mxu0 %v152
    %2197 = vmatpush1.msra.mxu0 %v151
    %2198 = vmatprep.subr.mxu0 %v155
    %2199 = vmatpush1.msra.mxu0 %v154
    %2200 = vmatprep.subr.mxu0 %v158
    %2201 = vmatpush1.msra.mxu0 %v157
    %2202 = vmatprep.subr.mxu0 %v161
    %2203 = vmatpush1.msra.mxu0 %v160
    %2204 = vmatprep.subr.mxu0 %v164
    %2205 = vmatpush1.msra.mxu0 %v163
    %2206 = vmatprep.subr.mxu0 %v167
    %2207 = vmatpush1.msra.mxu0 %v166
    %2208 = vmatprep.subr.mxu0 %v170
    %2209 = vmatpush1.msra.mxu0 %v169
    %2210 = vmatprep.subr.mxu0 %v173
    %2211 = vmatpush1.msra.mxu0 %v172
    %2212 = vmatprep.subr.mxu0 %v176
    %2213 = vmatpush1.msra.mxu0 %v175
    %2214 = vmatprep.subr.mxu0 %v179
    %2215 = vmatpush1.msra.mxu0 %v178
    %2216 = vmatprep.subr.mxu0 %v182
    %2217 = vmatpush1.msra.mxu0 %v181
    %2218 = vmatprep.subr.mxu0 %v185
    %2219 = vmatpush1.msra.mxu0 %v184
    %2220 = vmatprep.subr.mxu0 %v188
    %2221 = vmatpush1.msra.mxu0 %v187
    %2222 = vmatprep.subr.mxu0 0.0
    %2223 = vmatpush1.msra.mxu0 0.0
    %2224 = vmatprep.subr.mxu0 0.0
    %2225 = vmatpush1.msra.mxu0 0.0
    %2226 = vmatprep.subr.mxu0 0.0
    %2227 = vmatpush1.msra.mxu0 0.0
    %2228 = vmatprep.subr.mxu0 0.0
    %2229 = vmatpush1.msra.mxu0 0.0
    %2230 = vmatprep.subr.mxu0 0.0
    %2231 = vmatpush1.msra.mxu0 0.0
    %2232 = vmatprep.subr.mxu0 0.0
    %2233 = vmatpush1.msra.mxu0 0.0
    %2234 = vmatprep.subr.mxu0 0.0
    %2235 = vmatpush1.msra.mxu0 0.0
    %2236 = vmatprep.subr.mxu0 0.0
    %2237 = vmatpush1.msra.mxu0 0.0
    %2238 = vmatprep.subr.mxu0 0.0
    %2239 = vmatpush1.msra.mxu0 0.0
    %2240 = vmatprep.subr.mxu0 0.0
    %2241 = vmatpush1.msra.mxu0 0.0
    %2242 = vmatprep.subr.mxu0 0.0
    %2243 = vmatpush1.msra.mxu0 0.0
    %2244 = vmatprep.subr.mxu0 0.0
    %2245 = vmatpush1.msra.mxu0 0.0
    %2246 = vmatprep.subr.mxu0 0.0
    %2247 = vmatpush1.msra.mxu0 0.0
    %2248 = vmatprep.subr.mxu0 0.0
    %2249 = vmatpush1.msra.mxu0 0.0
    %2250 = vmatprep.subr.mxu0 0.0
    %2251 = vmatpush1.msra.mxu0 0.0
    %2252 = vmatprep.subr.mxu0 0.0
    %2253 = vmatpush1.msra.mxu0 0.0
    %2254 = vmatprep.mubr.f32.mxu0 0.0
    %2255 = vmatmul.mubr.f32.gmra.mrb[0].mxu0 %v2044
    %v2256 = vpop.f32.mrb[0].mxu0
    %v2257 = vadd.f32 0.0, %v2256
    %v2258 = vpop.f32.mrb[0].mxu0
    %v2259 = vadd.f32 0.0, %v2258
    %2260 = vdwg.mxu0
    %2261 = vmatprep.subr.mxu0 0.0
    %2262 = vmatpush1.msra.mxu0 %v144
    %2263 = vmatprep.subr.mxu0 0.0
    %2264 = vmatpush1.msra.mxu0 %v147
    %2265 = vmatprep.subr.mxu0 0.0
    %2266 = vmatpush1.msra.mxu0 %v150
    %2267 = vmatprep.subr.mxu0 0.0
    %2268 = vmatpush1.msra.mxu0 %v153
    %2269 = vmatprep.subr.mxu0 0.0
    %2270 = vmatpush1.msra.mxu0 %v156
    %2271 = vmatprep.subr.mxu0 0.0
    %2272 = vmatpush1.msra.mxu0 %v159
    %2273 = vmatprep.subr.mxu0 0.0
    %2274 = vmatpush1.msra.mxu0 %v162
    %2275 = vmatprep.subr.mxu0 0.0
    %2276 = vmatpush1.msra.mxu0 %v165
    %2277 = vmatprep.subr.mxu0 0.0
    %2278 = vmatpush1.msra.mxu0 %v168
    %2279 = vmatprep.subr.mxu0 0.0
    %2280 = vmatpush1.msra.mxu0 %v171
    %2281 = vmatprep.subr.mxu0 0.0
    %2282 = vmatpush1.msra.mxu0 %v174
    %2283 = vmatprep.subr.mxu0 0.0
    %2284 = vmatpush1.msra.mxu0 %v177
    %2285 = vmatprep.subr.mxu0 0.0
    %2286 = vmatpush1.msra.mxu0 %v180
    %2287 = vmatprep.subr.mxu0 0.0
    %2288 = vmatpush1.msra.mxu0 %v183
    %2289 = vmatprep.subr.mxu0 0.0
    %2290 = vmatpush1.msra.mxu0 %v186
    %2291 = vmatprep.subr.mxu0 0.0
    %2292 = vmatpush1.msra.mxu0 %v189
    %2293 = vmatprep.subr.mxu0 0.0
    %2294 = vmatpush1.msra.mxu0 0.0
    %2295 = vmatprep.subr.mxu0 0.0
    %2296 = vmatpush1.msra.mxu0 0.0
    %2297 = vmatprep.subr.mxu0 0.0
    %2298 = vmatpush1.msra.mxu0 0.0
    %2299 = vmatprep.subr.mxu0 0.0
    %2300 = vmatpush1.msra.mxu0 0.0
    %2301 = vmatprep.subr.mxu0 0.0
    %2302 = vmatpush1.msra.mxu0 0.0
    %2303 = vmatprep.subr.mxu0 0.0
    %2304 = vmatpush1.msra.mxu0 0.0
    %2305 = vmatprep.subr.mxu0 0.0
    %2306 = vmatpush1.msra.mxu0 0.0
    %2307 = vmatprep.subr.mxu0 0.0
    %2308 = vmatpush1.msra.mxu0 0.0
    %2309 = vmatprep.subr.mxu0 0.0
    %2310 = vmatpush1.msra.mxu0 0.0
    %2311 = vmatprep.subr.mxu0 0.0
    %2312 = vmatpush1.msra.mxu0 0.0
    %2313 = vmatprep.subr.mxu0 0.0
    %2314 = vmatpush1.msra.mxu0 0.0
    %2315 = vmatprep.subr.mxu0 0.0
    %2316 = vmatpush1.msra.mxu0 0.0
    %2317 = vmatprep.subr.mxu0 0.0
    %2318 = vmatpush1.msra.mxu0 0.0
    %2319 = vmatprep.subr.mxu0 0.0
    %2320 = vmatpush1.msra.mxu0 0.0
    %2321 = vmatprep.subr.mxu0 0.0
    %2322 = vmatpush1.msra.mxu0 0.0
    %2323 = vmatprep.subr.mxu0 0.0
    %2324 = vmatpush1.msra.mxu0 0.0
    %2325 = vmatprep.mubr.f32.mxu0 0.0
    %2326 = vmatmul.mubr.f32.gmra.mrb[0].mxu0 %v2044
    %v2327 = vpop.f32.mrb[0].mxu0
    %v2328 = vadd.f32 0.0, %v2327
    %v2329 = vpop.f32.mrb[0].mxu0
    %2330 = vdwg.mxu0
    %v2331 = vadd.f32 %v2116, %v2257
    %v2332 = vxor.u32 %v2331, 2147483648
    %v2333 = vmul.f32 %v2332, 1.442695
    %v2334 = vpow.pop %v2333
    %v2335 = vadd.f32 %v2334, 1.0
    %v2336 = vrcp.pop %v2335
    %v2337 = vmul.f32 1.0, %v2336
    %v2338 = vadd.f32 %v2118, %v2259
    %v2339 = vxor.u32 %v2338, 2147483648
    %v2340 = vmul.f32 %v2339, 1.442695
    %v2341 = vpow.pop %v2340
    %v2342 = vadd.f32 %v2341, 1.0
    %v2343 = vrcp.pop %v2342
    %v2344 = vmul.f32 1.0, %v2343
    %v2345 = vadd.f32 %v2328, %v496
    %v2346 = vmul.f32 %v2337, %v2345
    %v2347 = vadd.f32 %v2187, %v2346
    %v2348 = vtanh.pop %v2347
    %v2349 = vsub.f32 1.0, %v2344
    %v2350 = vmul.f32 %v2349, %v2348
    %v2351 = vmul.f32 %v2344, %v2044
    %v2352 = vadd.f32 %v2350, %v2351
    %s2353 = scalar_lea.vmem [#allocation12], 48
    %2354 = vst [vmem:[%s2353] sm:$0xff] %v2352
    %s2355 = scalar_lea.vmem [#allocation3], 56
    %v2356 = vld [vmem:[%s2355] sm:$0xff]
    %2357 = vmatprep.subr.mxu0 %v95
    %2358 = vmatpush1.msra.mxu0 %v94
    %2359 = vmatprep.subr.mxu0 %v98
    %2360 = vmatpush1.msra.mxu0 %v97
    %2361 = vmatprep.subr.mxu0 %v101
    %2362 = vmatpush1.msra.mxu0 %v100
    %2363 = vmatprep.subr.mxu0 %v104
    %2364 = vmatpush1.msra.mxu0 %v103
    %2365 = vmatprep.subr.mxu0 %v107
    %2366 = vmatpush1.msra.mxu0 %v106
    %2367 = vmatprep.subr.mxu0 %v110
    %2368 = vmatpush1.msra.mxu0 %v109
    %2369 = vmatprep.subr.mxu0 %v113
    %2370 = vmatpush1.msra.mxu0 %v112
    %2371 = vmatprep.subr.mxu0 %v116
    %2372 = vmatpush1.msra.mxu0 %v115
    %2373 = vmatprep.subr.mxu0 %v119
    %2374 = vmatpush1.msra.mxu0 %v118
    %2375 = vmatprep.subr.mxu0 %v122
    %2376 = vmatpush1.msra.mxu0 %v121
    %2377 = vmatprep.subr.mxu0 %v125
    %2378 = vmatpush1.msra.mxu0 %v124
    %2379 = vmatprep.subr.mxu0 %v128
    %2380 = vmatpush1.msra.mxu0 %v127
    %2381 = vmatprep.subr.mxu0 %v131
    %2382 = vmatpush1.msra.mxu0 %v130
    %2383 = vmatprep.subr.mxu0 %v134
    %2384 = vmatpush1.msra.mxu0 %v133
    %2385 = vmatprep.subr.mxu0 %v137
    %2386 = vmatpush1.msra.mxu0 %v136
    %2387 = vmatprep.subr.mxu0 %v140
    %2388 = vmatpush1.msra.mxu0 %v139
    %2389 = vmatprep.subr.mxu0 0.0
    %2390 = vmatpush1.msra.mxu0 0.0
    %2391 = vmatprep.subr.mxu0 0.0
    %2392 = vmatpush1.msra.mxu0 0.0
    %2393 = vmatprep.subr.mxu0 0.0
    %2394 = vmatpush1.msra.mxu0 0.0
    %2395 = vmatprep.subr.mxu0 0.0
    %2396 = vmatpush1.msra.mxu0 0.0
    %2397 = vmatprep.subr.mxu0 0.0
    %2398 = vmatpush1.msra.mxu0 0.0
    %2399 = vmatprep.subr.mxu0 0.0
    %2400 = vmatpush1.msra.mxu0 0.0
    %2401 = vmatprep.subr.mxu0 0.0
    %2402 = vmatpush1.msra.mxu0 0.0
    %2403 = vmatprep.subr.mxu0 0.0
    %2404 = vmatpush1.msra.mxu0 0.0
    %2405 = vmatprep.subr.mxu0 0.0
    %2406 = vmatpush1.msra.mxu0 0.0
    %2407 = vmatprep.subr.mxu0 0.0
    %2408 = vmatpush1.msra.mxu0 0.0
    %2409 = vmatprep.subr.mxu0 0.0
    %2410 = vmatpush1.msra.mxu0 0.0
    %2411 = vmatprep.subr.mxu0 0.0
    %2412 = vmatpush1.msra.mxu0 0.0
    %2413 = vmatprep.subr.mxu0 0.0
    %2414 = vmatpush1.msra.mxu0 0.0
    %2415 = vmatprep.subr.mxu0 0.0
    %2416 = vmatpush1.msra.mxu0 0.0
    %2417 = vmatprep.subr.mxu0 0.0
    %2418 = vmatpush1.msra.mxu0 0.0
    %2419 = vmatprep.subr.mxu0 0.0
    %2420 = vmatpush1.msra.mxu0 0.0
    %2421 = vmatprep.mubr.f32.mxu0 0.0
    %2422 = vmatmul.mubr.f32.gmra.mrb[0].mxu0 %v2356
    %v2423 = vpop.f32.mrb[0].mxu0
    %v2424 = vadd.f32 %v190, %v2423
    %v2425 = vpop.f32.mrb[0].mxu0
    %v2426 = vadd.f32 %v191, %v2425
    %2427 = vdwg.mxu0
    %2428 = vmatprep.subr.mxu0 0.0
    %2429 = vmatpush1.msra.mxu0 %v96
    %2430 = vmatprep.subr.mxu0 0.0
    %2431 = vmatpush1.msra.mxu0 %v99
    %2432 = vmatprep.subr.mxu0 0.0
    %2433 = vmatpush1.msra.mxu0 %v102
    %2434 = vmatprep.subr.mxu0 0.0
    %2435 = vmatpush1.msra.mxu0 %v105
    %2436 = vmatprep.subr.mxu0 0.0
    %2437 = vmatpush1.msra.mxu0 %v108
    %2438 = vmatprep.subr.mxu0 0.0
    %2439 = vmatpush1.msra.mxu0 %v111
    %2440 = vmatprep.subr.mxu0 0.0
    %2441 = vmatpush1.msra.mxu0 %v114
    %2442 = vmatprep.subr.mxu0 0.0
    %2443 = vmatpush1.msra.mxu0 %v117
    %2444 = vmatprep.subr.mxu0 0.0
    %2445 = vmatpush1.msra.mxu0 %v120
    %2446 = vmatprep.subr.mxu0 0.0
    %2447 = vmatpush1.msra.mxu0 %v123
    %2448 = vmatprep.subr.mxu0 0.0
    %2449 = vmatpush1.msra.mxu0 %v126
    %2450 = vmatprep.subr.mxu0 0.0
    %2451 = vmatpush1.msra.mxu0 %v129
    %2452 = vmatprep.subr.mxu0 0.0
    %2453 = vmatpush1.msra.mxu0 %v132
    %2454 = vmatprep.subr.mxu0 0.0
    %2455 = vmatpush1.msra.mxu0 %v135
    %2456 = vmatprep.subr.mxu0 0.0
    %2457 = vmatpush1.msra.mxu0 %v138
    %2458 = vmatprep.subr.mxu0 0.0
    %2459 = vmatpush1.msra.mxu0 %v141
    %2460 = vmatprep.subr.mxu0 0.0
    %2461 = vmatpush1.msra.mxu0 0.0
    %2462 = vmatprep.subr.mxu0 0.0
    %2463 = vmatpush1.msra.mxu0 0.0
    %2464 = vmatprep.subr.mxu0 0.0
    %2465 = vmatpush1.msra.mxu0 0.0
    %2466 = vmatprep.subr.mxu0 0.0
    %2467 = vmatpush1.msra.mxu0 0.0
    %2468 = vmatprep.subr.mxu0 0.0
    %2469 = vmatpush1.msra.mxu0 0.0
    %2470 = vmatprep.subr.mxu0 0.0
    %2471 = vmatpush1.msra.mxu0 0.0
    %2472 = vmatprep.subr.mxu0 0.0
    %2473 = vmatpush1.msra.mxu0 0.0
    %2474 = vmatprep.subr.mxu0 0.0
    %2475 = vmatpush1.msra.mxu0 0.0
    %2476 = vmatprep.subr.mxu0 0.0
    %2477 = vmatpush1.msra.mxu0 0.0
    %2478 = vmatprep.subr.mxu0 0.0
    %2479 = vmatpush1.msra.mxu0 0.0
    %2480 = vmatprep.subr.mxu0 0.0
    %2481 = vmatpush1.msra.mxu0 0.0
    %2482 = vmatprep.subr.mxu0 0.0
    %2483 = vmatpush1.msra.mxu0 0.0
    %2484 = vmatprep.subr.mxu0 0.0
    %2485 = vmatpush1.msra.mxu0 0.0
    %2486 = vmatprep.subr.mxu0 0.0
    %2487 = vmatpush1.msra.mxu0 0.0
    %2488 = vmatprep.subr.mxu0 0.0
    %2489 = vmatpush1.msra.mxu0 0.0
    %2490 = vmatprep.subr.mxu0 0.0
    %2491 = vmatpush1.msra.mxu0 0.0
    %2492 = vmatprep.mubr.f32.mxu0 0.0
    %2493 = vmatmul.mubr.f32.gmra.mrb[0].mxu0 %v2356
    %v2494 = vpop.f32.mrb[0].mxu0
    %v2495 = vadd.f32 %v192, %v2494
    %v2496 = vpop.f32.mrb[0].mxu0
    %2497 = vdwg.mxu0
    %2498 = vmatprep.subr.mxu0 %v143
    %2499 = vmatpush1.msra.mxu0 %v142
    %2500 = vmatprep.subr.mxu0 %v146
    %2501 = vmatpush1.msra.mxu0 %v145
    %2502 = vmatprep.subr.mxu0 %v149
    %2503 = vmatpush1.msra.mxu0 %v148
    %2504 = vmatprep.subr.mxu0 %v152
    %2505 = vmatpush1.msra.mxu0 %v151
    %2506 = vmatprep.subr.mxu0 %v155
    %2507 = vmatpush1.msra.mxu0 %v154
    %2508 = vmatprep.subr.mxu0 %v158
    %2509 = vmatpush1.msra.mxu0 %v157
    %2510 = vmatprep.subr.mxu0 %v161
    %2511 = vmatpush1.msra.mxu0 %v160
    %2512 = vmatprep.subr.mxu0 %v164
    %2513 = vmatpush1.msra.mxu0 %v163
    %2514 = vmatprep.subr.mxu0 %v167
    %2515 = vmatpush1.msra.mxu0 %v166
    %2516 = vmatprep.subr.mxu0 %v170
    %2517 = vmatpush1.msra.mxu0 %v169
    %2518 = vmatprep.subr.mxu0 %v173
    %2519 = vmatpush1.msra.mxu0 %v172
    %2520 = vmatprep.subr.mxu0 %v176
    %2521 = vmatpush1.msra.mxu0 %v175
    %2522 = vmatprep.subr.mxu0 %v179
    %2523 = vmatpush1.msra.mxu0 %v178
    %2524 = vmatprep.subr.mxu0 %v182
    %2525 = vmatpush1.msra.mxu0 %v181
    %2526 = vmatprep.subr.mxu0 %v185
    %2527 = vmatpush1.msra.mxu0 %v184
    %2528 = vmatprep.subr.mxu0 %v188
    %2529 = vmatpush1.msra.mxu0 %v187
    %2530 = vmatprep.subr.mxu0 0.0
    %2531 = vmatpush1.msra.mxu0 0.0
    %2532 = vmatprep.subr.mxu0 0.0
    %2533 = vmatpush1.msra.mxu0 0.0
    %2534 = vmatprep.subr.mxu0 0.0
    %2535 = vmatpush1.msra.mxu0 0.0
    %2536 = vmatprep.subr.mxu0 0.0
    %2537 = vmatpush1.msra.mxu0 0.0
    %2538 = vmatprep.subr.mxu0 0.0
    %2539 = vmatpush1.msra.mxu0 0.0
    %2540 = vmatprep.subr.mxu0 0.0
    %2541 = vmatpush1.msra.mxu0 0.0
    %2542 = vmatprep.subr.mxu0 0.0
    %2543 = vmatpush1.msra.mxu0 0.0
    %2544 = vmatprep.subr.mxu0 0.0
    %2545 = vmatpush1.msra.mxu0 0.0
    %2546 = vmatprep.subr.mxu0 0.0
    %2547 = vmatpush1.msra.mxu0 0.0
    %2548 = vmatprep.subr.mxu0 0.0
    %2549 = vmatpush1.msra.mxu0 0.0
    %2550 = vmatprep.subr.mxu0 0.0
    %2551 = vmatpush1.msra.mxu0 0.0
    %2552 = vmatprep.subr.mxu0 0.0
    %2553 = vmatpush1.msra.mxu0 0.0
    %2554 = vmatprep.subr.mxu0 0.0
    %2555 = vmatpush1.msra.mxu0 0.0
    %2556 = vmatprep.subr.mxu0 0.0
    %2557 = vmatpush1.msra.mxu0 0.0
    %2558 = vmatprep.subr.mxu0 0.0
    %2559 = vmatpush1.msra.mxu0 0.0
    %2560 = vmatprep.subr.mxu0 0.0
    %2561 = vmatpush1.msra.mxu0 0.0
    %2562 = vmatprep.mubr.f32.mxu0 0.0
    %2563 = vmatmul.mubr.f32.gmra.mrb[0].mxu0 %v2352
    %v2564 = vpop.f32.mrb[0].mxu0
    %v2565 = vadd.f32 0.0, %v2564
    %v2566 = vpop.f32.mrb[0].mxu0
    %v2567 = vadd.f32 0.0, %v2566
    %2568 = vdwg.mxu0
    %2569 = vmatprep.subr.mxu0 0.0
    %2570 = vmatpush1.msra.mxu0 %v144
    %2571 = vmatprep.subr.mxu0 0.0
    %2572 = vmatpush1.msra.mxu0 %v147
    %2573 = vmatprep.subr.mxu0 0.0
    %2574 = vmatpush1.msra.mxu0 %v150
    %2575 = vmatprep.subr.mxu0 0.0
    %2576 = vmatpush1.msra.mxu0 %v153
    %2577 = vmatprep.subr.mxu0 0.0
    %2578 = vmatpush1.msra.mxu0 %v156
    %2579 = vmatprep.subr.mxu0 0.0
    %2580 = vmatpush1.msra.mxu0 %v159
    %2581 = vmatprep.subr.mxu0 0.0
    %2582 = vmatpush1.msra.mxu0 %v162
    %2583 = vmatprep.subr.mxu0 0.0
    %2584 = vmatpush1.msra.mxu0 %v165
    %2585 = vmatprep.subr.mxu0 0.0
    %2586 = vmatpush1.msra.mxu0 %v168
    %2587 = vmatprep.subr.mxu0 0.0
    %2588 = vmatpush1.msra.mxu0 %v171
    %2589 = vmatprep.subr.mxu0 0.0
    %2590 = vmatpush1.msra.mxu0 %v174
    %2591 = vmatprep.subr.mxu0 0.0
    %2592 = vmatpush1.msra.mxu0 %v177
    %2593 = vmatprep.subr.mxu0 0.0
    %2594 = vmatpush1.msra.mxu0 %v180
    %2595 = vmatprep.subr.mxu0 0.0
    %2596 = vmatpush1.msra.mxu0 %v183
    %2597 = vmatprep.subr.mxu0 0.0
    %2598 = vmatpush1.msra.mxu0 %v186
    %2599 = vmatprep.subr.mxu0 0.0
    %2600 = vmatpush1.msra.mxu0 %v189
    %2601 = vmatprep.subr.mxu0 0.0
    %2602 = vmatpush1.msra.mxu0 0.0
    %2603 = vmatprep.subr.mxu0 0.0
    %2604 = vmatpush1.msra.mxu0 0.0
    %2605 = vmatprep.subr.mxu0 0.0
    %2606 = vmatpush1.msra.mxu0 0.0
    %2607 = vmatprep.subr.mxu0 0.0
    %2608 = vmatpush1.msra.mxu0 0.0
    %2609 = vmatprep.subr.mxu0 0.0
    %2610 = vmatpush1.msra.mxu0 0.0
    %2611 = vmatprep.subr.mxu0 0.0
    %2612 = vmatpush1.msra.mxu0 0.0
    %2613 = vmatprep.subr.mxu0 0.0
    %2614 = vmatpush1.msra.mxu0 0.0
    %2615 = vmatprep.subr.mxu0 0.0
    %2616 = vmatpush1.msra.mxu0 0.0
    %2617 = vmatprep.subr.mxu0 0.0
    %2618 = vmatpush1.msra.mxu0 0.0
    %2619 = vmatprep.subr.mxu0 0.0
    %2620 = vmatpush1.msra.mxu0 0.0
    %2621 = vmatprep.subr.mxu0 0.0
    %2622 = vmatpush1.msra.mxu0 0.0
    %2623 = vmatprep.subr.mxu0 0.0
    %2624 = vmatpush1.msra.mxu0 0.0
    %2625 = vmatprep.subr.mxu0 0.0
    %2626 = vmatpush1.msra.mxu0 0.0
    %2627 = vmatprep.subr.mxu0 0.0
    %2628 = vmatpush1.msra.mxu0 0.0
    %2629 = vmatprep.subr.mxu0 0.0
    %2630 = vmatpush1.msra.mxu0 0.0
    %2631 = vmatprep.subr.mxu0 0.0
    %2632 = vmatpush1.msra.mxu0 0.0
    %2633 = vmatprep.mubr.f32.mxu0 0.0
    %2634 = vmatmul.mubr.f32.gmra.mrb[0].mxu0 %v2352
    %v2635 = vpop.f32.mrb[0].mxu0
    %v2636 = vadd.f32 0.0, %v2635
    %v2637 = vpop.f32.mrb[0].mxu0
    %2638 = vdwg.mxu0
    %v2639 = vadd.f32 %v2424, %v2565
    %v2640 = vxor.u32 %v2639, 2147483648
    %v2641 = vmul.f32 %v2640, 1.442695
    %v2642 = vpow.pop %v2641
    %v2643 = vadd.f32 %v2642, 1.0
    %v2644 = vrcp.pop %v2643
    %v2645 = vmul.f32 1.0, %v2644
    %v2646 = vadd.f32 %v2426, %v2567
    %v2647 = vxor.u32 %v2646, 2147483648
    %v2648 = vmul.f32 %v2647, 1.442695
    %v2649 = vpow.pop %v2648
    %v2650 = vadd.f32 %v2649, 1.0
    %v2651 = vrcp.pop %v2650
    %v2652 = vmul.f32 1.0, %v2651
    %v2653 = vadd.f32 %v2636, %v496
    %v2654 = vmul.f32 %v2645, %v2653
    %v2655 = vadd.f32 %v2495, %v2654
    %v2656 = vtanh.pop %v2655
    %v2657 = vsub.f32 1.0, %v2652
    %v2658 = vmul.f32 %v2657, %v2656
    %v2659 = vmul.f32 %v2652, %v2352
    %v2660 = vadd.f32 %v2658, %v2659
    %s2661 = scalar_lea.vmem [#allocation12], 56
    %2662 = vst [vmem:[%s2661] sm:$0xff] %v2660
    %2663 = vst [vmem:[#allocation2] sm:$0xff] %v2660
    // Predicated region
    $region50: #{tpu_custom_call.1} parent=1 // pred_check
      _
    $region51: #{tpu_custom_call.1} parent=1 // pred_check_branch
      %2665 = sbr.rel (0) target = $region53
    $region52: #{tpu_custom_call.1} parent=1 // pred_region
      %s2667 = ssub.s32 1024, 1024
      %2668 = vsyncadd [#allocation5], %s2667
      %s2669 = sshll.u32 [#allocation12], 4
      %s2670 = int_to_ptr.vmem [resolvable:$true] %s2669
      %2675 = dma.vmem_to_hbm [thread:$0]  %s2670, 1024, %s6, [#allocation5], 128, 128, 8
    $region53: #{tpu_custom_call.1} parent=1 // pred_fallthru
      _
    // Predicated region
    $region54: #{tpu_custom_call.1} parent=1 // pred_check
      _
    $region55: #{tpu_custom_call.1} parent=1 // pred_check_branch
      %2677 = sbr.rel (0) target = $region57
    $region56: #{tpu_custom_call.1} parent=1 // pred_region
      %2678 = dma.done [#allocation5], 1024
    $region57: #{tpu_custom_call.1} parent=1 // pred_fallthru
      _
    %2679 = vsyncpa [#allocation4], 1
    %2680 = vsyncpa [#allocation7], 1
    %2681 = vsyncpa [#allocation10], 1
    %2682 = vsyncpa [#allocation5], 1

</llo_original>
